<compile_context>
chip_gen: v5e
topology: v5e:2x2
jax: 0.10.0
libtpu: 0.0.40
codegen_flags: <defaults>
</compile_context>

<pallas_src>
import jax
import jax.numpy as jnp
from jax import lax
from jax.experimental import pallas as pl
from jax.experimental.pallas import tpu as pltpu

# ---------------------------------------------------------------------------
# Problem sizes (CAB defaults: compress_ratio=3, squeeze_factor=30)
# ---------------------------------------------------------------------------
B = 2
C = 60                 # num_feat
H = W = 16
COMPRESS_RATIO = 3
SQUEEZE_FACTOR = 30
CM = C // COMPRESS_RATIO      # 20  (hidden channels of the 3x3 conv bottleneck)
CSQ = C // SQUEEZE_FACTOR     # 2   (hidden channels of the channel attention)
HP = H + 2                    # H padded by 1 on each side (3x3 conv, padding=1)

_PREC_HI = jax.lax.Precision.HIGHEST   # reference only


def _gelu(x):
    # TODO(synk): torch.nn.GELU default is the exact erf formulation; Mosaic has no reliable
    # erf lowering, so the tanh approximation is used (max abs diff ~1e-3).
    return jax.nn.gelu(x, approximate=True)


def _conv3x3_tap_fused(xhwc, w_ref, cin):
    """3x3 'SAME' conv of an (H, W, cin) f32 tile against w_ref (3, 3*cin, cout) bf16.

    Builds the zero-padded, kx-concatenated operand in registers once, then runs three
    sublane-aligned (offset ky*W) MXU dots with K = 3*cin, accumulating in f32.
    Returns (H*W, cout) f32 (bias NOT added).
    """
    zc = jnp.zeros((H, 1, cin), jnp.float32)
    xc = jnp.concatenate([
        jnp.concatenate([zc, xhwc[:, :W - 1, :]], axis=1),    # kx = 0 (left neighbor)
        xhwc,                                                  # kx = 1 (center)
        jnp.concatenate([xhwc[:, 1:, :], zc], axis=1),         # kx = 2 (right neighbor)
    ], axis=-1)                                                # (H, W, 3*cin)
    zr = jnp.zeros((1, W, 3 * cin), jnp.float32)
    xc = jnp.concatenate([zr, xc, zr], axis=0)                 # (HP, W, 3*cin), H-padded
    xc = xc.reshape(HP * W, 3 * cin).astype(jnp.bfloat16)

    acc = jnp.dot(xc[0:H * W, :], w_ref[0], preferred_element_type=jnp.float32)
    for ky in (1, 2):                                          # ky*W is sublane-aligned
        acc = acc + jnp.dot(xc[ky * W:ky * W + H * W, :], w_ref[ky],
                            preferred_element_type=jnp.float32)
    return acc                                                 # (H*W, cout) f32


# ---------------------------------------------------------------------------
# Pallas kernel: one batch element per grid step.
# ---------------------------------------------------------------------------
def cab_kernel(x_ref,           # (H, W, C)     unpadded NHWC input tile (batch squeezed), f32
               w1_ref,          # (3, 3*C, CM)  conv1 weights, kx folded into K, bf16
               b1_ref,          # (1, CM)       f32
               w2_ref,          # (3, 3*CM, C)  conv2 weights, kx folded into K, bf16
               b2_ref,          # (1, C)        f32
               wdT_ref,         # (CSQ, C)      channel-attention squeeze weight (transposed)
               bd_ref,          # (CSQ, 1)
               wu_ref,          # (CSQ, C)      channel-attention excite weight
               bu_ref,          # (1, C)
               out_ref):        # (H*W, C)
    x = x_ref[...]                                               # (H, W, C) f32

    # --- conv1 (3x3, pad=1) + GELU ---
    acc1 = _conv3x3_tap_fused(x, w1_ref, C)                      # (H*W, CM)
    y1 = _gelu(acc1 + b1_ref[...])

    # --- conv2 (3x3, pad=1) ---
    acc2 = _conv3x3_tap_fused(y1.reshape(H, W, CM), w2_ref, CM)  # (H*W, C)
    y2 = acc2 + b2_ref[...]

    # --- ChannelAttention on the VPU: avg-pool -> 1x1 -> ReLU -> 1x1 -> Sigmoid -> gate ---
    pooled = jnp.mean(y2, axis=0, keepdims=True)                 # (1, C)
    z = jnp.sum(pooled * wdT_ref[...], axis=1, keepdims=True) + bd_ref[...]   # (CSQ, 1)
    z = jnp.maximum(z, 0.0)
    att = jax.nn.sigmoid(
        jnp.sum(z * wu_ref[...], axis=0, keepdims=True) + bu_ref[...])        # (1, C)

    out_ref[...] = (y2 * att).astype(out_ref.dtype)


# ---------------------------------------------------------------------------
# Wrapper: NCHW in / NCHW out (matches the PyTorch module call convention).
# ---------------------------------------------------------------------------
@jax.jit
def cab_forward(x_nchw, w1_hwio, b1, w2_hwio, b2, wd, bd, wu, bu):
    x_nhwc = jnp.transpose(x_nchw, (0, 2, 3, 1)).astype(jnp.float32)        # (B,H,W,C)

    # Conv weights: fold kx into the contraction dim and cast to bf16 (single-pass MXU,
    # f32 accumulate). w[ky, kx*Cin + ci, co] == w_hwio[ky, kx, ci, co].
    w1cat = w1_hwio.reshape(3, 3 * C, CM).astype(jnp.bfloat16)
    w2cat = w2_hwio.reshape(3, 3 * CM, C).astype(jnp.bfloat16)
    b1r = b1.reshape(1, CM).astype(jnp.float32)
    b2r = b2.reshape(1, C).astype(jnp.float32)
    wdT = jnp.transpose(wd).astype(jnp.float32)                              # (CSQ, C)
    bdr = bd.reshape(CSQ, 1).astype(jnp.float32)
    wur = wu.astype(jnp.float32)                                             # (CSQ, C)
    bur = bu.reshape(1, C).astype(jnp.float32)

    out_flat = pl.pallas_call(
        cab_kernel,
        out_shape=jax.ShapeDtypeStruct((B, H * W, C), jnp.float32),
        grid_spec=pltpu.PrefetchScalarGridSpec(
            num_scalar_prefetch=0,
            grid=(B,),
            in_specs=[
                pl.BlockSpec((None, H, W, C), lambda b: (b, 0, 0, 0)),
                pl.BlockSpec((3, 3 * C, CM), lambda b: (0, 0, 0)),
                pl.BlockSpec((1, CM), lambda b: (0, 0)),
                pl.BlockSpec((3, 3 * CM, C), lambda b: (0, 0, 0)),
                pl.BlockSpec((1, C), lambda b: (0, 0)),
                pl.BlockSpec((CSQ, C), lambda b: (0, 0)),
                pl.BlockSpec((CSQ, 1), lambda b: (0, 0)),
                pl.BlockSpec((CSQ, C), lambda b: (0, 0)),
                pl.BlockSpec((1, C), lambda b: (0, 0)),
            ],
            out_specs=pl.BlockSpec((None, H * W, C), lambda b: (b, 0, 0)),
        ),
        compiler_params=pltpu.CompilerParams(dimension_semantics=("parallel",)),
    )(x_nhwc, w1cat, b1r, w2cat, b2r, wdT, bdr, wur, bur)

    out_nhwc = out_flat.reshape(B, H, W, C)
    return jnp.transpose(out_nhwc, (0, 3, 1, 2))                             # back to NCHW


# ---------------------------------------------------------------------------
# Pure-JAX reference (fp32, HIGHEST precision) for a sanity check.
# ---------------------------------------------------------------------------
def cab_reference(x_nchw, w1_hwio, b1, w2_hwio, b2, wd, bd, wu, bu):
    x = jnp.transpose(x_nchw, (0, 2, 3, 1)).astype(jnp.float32)              # NHWC
    dn = ("NHWC", "HWIO", "NHWC")
    y = lax.conv_general_dilated(x, w1_hwio, (1, 1), "SAME",
                                 dimension_numbers=dn, precision=_PREC_HI) + b1
    y = _gelu(y)
    y = lax.conv_general_dilated(y, w2_hwio, (1, 1), "SAME",
                                 dimension_numbers=dn, precision=_PREC_HI) + b2
    pooled = jnp.mean(y, axis=(1, 2), keepdims=True)                         # (B,1,1,C)
    z = jnp.maximum(
        jnp.einsum("bhwc,cs->bhws", pooled, wd, precision=_PREC_HI) + bd, 0.0)
    att = jax.nn.sigmoid(
        jnp.einsum("bhws,sc->bhwc", z, wu, precision=_PREC_HI) + bu)
    out = y * att
    return jnp.transpose(out, (0, 3, 1, 2))                                  # NCHW


# ---------------------------------------------------------------------------
# Deterministic parameter construction (synthetic init, not a checkpoint).
# Conv weights are generated in HWIO (ky, kx, Cin, Cout); equivalent to torch OIHW transposed.
# ---------------------------------------------------------------------------
def make_params(key):
    ks = jax.random.split(key, 8)
    w1 = 0.05 * jax.random.normal(ks[0], (3, 3, C, CM), jnp.float32)
    b1 = 0.01 * jax.random.normal(ks[1], (CM,), jnp.float32)
    w2 = 0.05 * jax.random.normal(ks[2], (3, 3, CM, C), jnp.float32)
    b2 = 0.01 * jax.random.normal(ks[3], (C,), jnp.float32)
    wd = 0.05 * jax.random.normal(ks[4], (C, CSQ), jnp.float32)
    bd = 0.01 * jax.random.normal(ks[5], (CSQ,), jnp.float32)
    wu = 0.05 * jax.random.normal(ks[6], (CSQ, C), jnp.float32)
    bu = 0.01 * jax.random.normal(ks[7], (C,), jnp.float32)
    return w1, b1, w2, b2, wd, bd, wu, bu


if __name__ == "__main__":
    root = jax.random.PRNGKey(0)
    kx, kp = jax.random.split(root)
    x = jax.random.normal(kx, (B, C, H, W), jnp.float32)                     # NCHW like PyTorch
    params = make_params(kp)

    out = cab_forward(x, *params)
    jax.block_until_ready(out)

    ref = cab_reference(x, *params)
    assert out.shape == (B, C, H, W)
    # Kernel runs the convs on bf16 MXU operands with f32 accumulation; reference is fp32
    # HIGHEST, so allow ~1e-2 (measured max abs diff at these magnitudes ~4e-3).
    assert jnp.allclose(out, ref, atol=1e-2, rtol=1e-2), (
        f"max abs diff {jnp.max(jnp.abs(out - ref))}")

    print("KERNEL_OK")
</pallas_src>

<mosaic_0001>
module attributes {stable_mosaic.version = 11 : i64} {
  func.func @cab_kernel(%arg0: i32, %arg1: memref<1x16x16x60xf32, #tpu.memory_space<vmem>>, %arg2: memref<3x180x20xbf16, #tpu.memory_space<vmem>>, %arg3: memref<1x20xf32, #tpu.memory_space<vmem>>, %arg4: memref<3x60x60xbf16, #tpu.memory_space<vmem>>, %arg5: memref<1x60xf32, #tpu.memory_space<vmem>>, %arg6: memref<2x60xf32, #tpu.memory_space<vmem>>, %arg7: memref<2x1xf32, #tpu.memory_space<vmem>>, %arg8: memref<2x60xf32, #tpu.memory_space<vmem>>, %arg9: memref<1x60xf32, #tpu.memory_space<vmem>>, %arg10: memref<1x256x60xf32, #tpu.memory_space<vmem>>) attributes {dimension_semantics = [#tpu.dimension_semantics<parallel>], iteration_bounds = array<i64: 2>, scalar_prefetch = 0 : i64, scratch_operands = 0 : i64, tpu.core_type = #tpu.core_type<tc>, window_params = [{transform_indices = @transform_0, window_bounds = array<i64: 1, 16, 16, 60>}, {pipeline_mode = #tpu.pipeline_mode<synchronous>, transform_indices = @transform_1, window_bounds = array<i64: 3, 180, 20>}, {pipeline_mode = #tpu.pipeline_mode<synchronous>, transform_indices = @transform_2, window_bounds = array<i64: 1, 20>}, {pipeline_mode = #tpu.pipeline_mode<synchronous>, transform_indices = @transform_3, window_bounds = array<i64: 3, 60, 60>}, {pipeline_mode = #tpu.pipeline_mode<synchronous>, transform_indices = @transform_4, window_bounds = array<i64: 1, 60>}, {pipeline_mode = #tpu.pipeline_mode<synchronous>, transform_indices = @transform_5, window_bounds = array<i64: 2, 60>}, {pipeline_mode = #tpu.pipeline_mode<synchronous>, transform_indices = @transform_6, window_bounds = array<i64: 2, 1>}, {pipeline_mode = #tpu.pipeline_mode<synchronous>, transform_indices = @transform_7, window_bounds = array<i64: 2, 60>}, {pipeline_mode = #tpu.pipeline_mode<synchronous>, transform_indices = @transform_8, window_bounds = array<i64: 1, 60>}, {transform_indices = @transform_9, window_bounds = array<i64: 1, 256, 60>}]} {
    %c0 = arith.constant 0 : index
    %c0_0 = arith.constant 0 : index
    %c0_1 = arith.constant 0 : index
    %c0_2 = arith.constant 0 : index
    %0 = vector.load %arg1[%c0, %c0_0, %c0_1, %c0_2] : memref<1x16x16x60xf32, #tpu.memory_space<vmem>>, vector<1x16x16x60xf32>
    %1 = vector.shape_cast %0 : vector<1x16x16x60xf32> to vector<16x16x60xf32>
    %cst = arith.constant 0.000000e+00 : f32
    %2 = vector.broadcast %cst : f32 to vector<16x1x60xf32>
    %3 = vector.extract_strided_slice %1 {offsets = [0, 0, 0], sizes = [16, 15, 60], strides = [1, 1, 1]} : vector<16x16x60xf32> to vector<16x15x60xf32>
    %4 = tpu.concatenate %2, %3 in 1 : vector<16x1x60xf32>, vector<16x15x60xf32> -> vector<16x16x60xf32>
    %5 = vector.extract_strided_slice %1 {offsets = [0, 1, 0], sizes = [16, 15, 60], strides = [1, 1, 1]} : vector<16x16x60xf32> to vector<16x15x60xf32>
    %6 = tpu.concatenate %5, %2 in 1 : vector<16x15x60xf32>, vector<16x1x60xf32> -> vector<16x16x60xf32>
    %7 = tpu.concatenate %4, %1, %6 in 2 : vector<16x16x60xf32>, vector<16x16x60xf32>, vector<16x16x60xf32> -> vector<16x16x180xf32>
    %cst_3 = arith.constant 0.000000e+00 : f32
    %8 = vector.broadcast %cst_3 : f32 to vector<1x16x180xf32>
    %9 = tpu.concatenate %8, %7, %8 in 0 : vector<1x16x180xf32>, vector<16x16x180xf32>, vector<1x16x180xf32> -> vector<18x16x180xf32>
    %10 = vector.shape_cast %9 : vector<18x16x180xf32> to vector<288x180xf32>
    %11 = arith.truncf %10 : vector<288x180xf32> to vector<288x180xbf16>
    %12 = vector.extract_strided_slice %11 {offsets = [0, 0], sizes = [256, 180], strides = [1, 1]} : vector<288x180xbf16> to vector<256x180xbf16>
    %c0_4 = arith.constant 0 : index
    %c0_5 = arith.constant 0 : index
    %c0_6 = arith.constant 0 : index
    %13 = vector.load %arg2[%c0_4, %c0_5, %c0_6] : memref<3x180x20xbf16, #tpu.memory_space<vmem>>, vector<1x180x20xbf16>
    %14 = vector.shape_cast %13 : vector<1x180x20xbf16> to vector<180x20xbf16>
    %cst_7 = arith.constant dense<0.000000e+00> : vector<256x20xf32>
    %15 = tpu.matmul %12, %14, %cst_7 {dimension_numbers = #tpu.dot_dimension_numbers<[1], [0], [0], [1], [0, 0, 1, 1], [], []>} : vector<256x180xbf16>, vector<180x20xbf16>, vector<256x20xf32> -> vector<256x20xf32>
    %16 = vector.extract_strided_slice %11 {offsets = [16, 0], sizes = [256, 180], strides = [1, 1]} : vector<288x180xbf16> to vector<256x180xbf16>
    %c1 = arith.constant 1 : index
    %c0_8 = arith.constant 0 : index
    %c0_9 = arith.constant 0 : index
    %17 = vector.load %arg2[%c1, %c0_8, %c0_9] : memref<3x180x20xbf16, #tpu.memory_space<vmem>>, vector<1x180x20xbf16>
    %18 = vector.shape_cast %17 : vector<1x180x20xbf16> to vector<180x20xbf16>
    %cst_10 = arith.constant dense<0.000000e+00> : vector<256x20xf32>
    %19 = tpu.matmul %16, %18, %cst_10 {dimension_numbers = #tpu.dot_dimension_numbers<[1], [0], [0], [1], [0, 0, 1, 1], [], []>} : vector<256x180xbf16>, vector<180x20xbf16>, vector<256x20xf32> -> vector<256x20xf32>
    %20 = arith.addf %15, %19 : vector<256x20xf32>
    %21 = vector.extract_strided_slice %11 {offsets = [32, 0], sizes = [256, 180], strides = [1, 1]} : vector<288x180xbf16> to vector<256x180xbf16>
    %c2 = arith.constant 2 : index
    %c0_11 = arith.constant 0 : index
    %c0_12 = arith.constant 0 : index
    %22 = vector.load %arg2[%c2, %c0_11, %c0_12] : memref<3x180x20xbf16, #tpu.memory_space<vmem>>, vector<1x180x20xbf16>
    %23 = vector.shape_cast %22 : vector<1x180x20xbf16> to vector<180x20xbf16>
    %cst_13 = arith.constant dense<0.000000e+00> : vector<256x20xf32>
    %24 = tpu.matmul %21, %23, %cst_13 {dimension_numbers = #tpu.dot_dimension_numbers<[1], [0], [0], [1], [0, 0, 1, 1], [], []>} : vector<256x180xbf16>, vector<180x20xbf16>, vector<256x20xf32> -> vector<256x20xf32>
    %25 = arith.addf %20, %24 : vector<256x20xf32>
    %c0_14 = arith.constant 0 : index
    %c0_15 = arith.constant 0 : index
    %26 = vector.load %arg3[%c0_14, %c0_15] : memref<1x20xf32, #tpu.memory_space<vmem>>, vector<1x20xf32>
    %27 = vector.broadcast %26 : vector<1x20xf32> to vector<256x20xf32>
    %28 = arith.addf %25, %27 : vector<256x20xf32>
    %29 = arith.mulf %28, %28 : vector<256x20xf32>
    %30 = arith.mulf %28, %29 : vector<256x20xf32>
    %cst_16 = arith.constant 4.471500e-02 : f32
    %31 = vector.broadcast %cst_16 : f32 to vector<256x20xf32>
    %32 = arith.mulf %31, %30 : vector<256x20xf32>
    %33 = arith.addf %28, %32 : vector<256x20xf32>
    %cst_17 = arith.constant 0.797884583 : f32
    %34 = vector.broadcast %cst_17 : f32 to vector<256x20xf32>
    %35 = arith.mulf %34, %33 : vector<256x20xf32>
    %36 = math.tanh %35 : vector<256x20xf32>
    %cst_18 = arith.constant 1.000000e+00 : f32
    %37 = vector.broadcast %cst_18 : f32 to vector<256x20xf32>
    %38 = arith.addf %37, %36 : vector<256x20xf32>
    %cst_19 = arith.constant 5.000000e-01 : f32
    %39 = vector.broadcast %cst_19 : f32 to vector<256x20xf32>
    %40 = arith.mulf %39, %38 : vector<256x20xf32>
    %41 = arith.mulf %28, %40 : vector<256x20xf32>
    %42 = vector.shape_cast %41 : vector<256x20xf32> to vector<16x16x20xf32>
    %cst_20 = arith.constant 0.000000e+00 : f32
    %43 = vector.broadcast %cst_20 : f32 to vector<16x1x20xf32>
    %44 = vector.extract_strided_slice %42 {offsets = [0, 0, 0], sizes = [16, 15, 20], strides = [1, 1, 1]} : vector<16x16x20xf32> to vector<16x15x20xf32>
    %45 = tpu.concatenate %43, %44 in 1 : vector<16x1x20xf32>, vector<16x15x20xf32> -> vector<16x16x20xf32>
    %46 = vector.extract_strided_slice %42 {offsets = [0, 1, 0], sizes = [16, 15, 20], strides = [1, 1, 1]} : vector<16x16x20xf32> to vector<16x15x20xf32>
    %47 = tpu.concatenate %46, %43 in 1 : vector<16x15x20xf32>, vector<16x1x20xf32> -> vector<16x16x20xf32>
    %48 = tpu.concatenate %45, %42, %47 in 2 : vector<16x16x20xf32>, vector<16x16x20xf32>, vector<16x16x20xf32> -> vector<16x16x60xf32>
    %cst_21 = arith.constant 0.000000e+00 : f32
    %49 = vector.broadcast %cst_21 : f32 to vector<1x16x60xf32>
    %50 = tpu.concatenate %49, %48, %49 in 0 : vector<1x16x60xf32>, vector<16x16x60xf32>, vector<1x16x60xf32> -> vector<18x16x60xf32>
    %51 = vector.shape_cast %50 : vector<18x16x60xf32> to vector<288x60xf32>
    %52 = arith.truncf %51 : vector<288x60xf32> to vector<288x60xbf16>
    %53 = vector.extract_strided_slice %52 {offsets = [0, 0], sizes = [256, 60], strides = [1, 1]} : vector<288x60xbf16> to vector<256x60xbf16>
    %c0_22 = arith.constant 0 : index
    %c0_23 = arith.constant 0 : index
    %c0_24 = arith.constant 0 : index
    %54 = vector.load %arg4[%c0_22, %c0_23, %c0_24] : memref<3x60x60xbf16, #tpu.memory_space<vmem>>, vector<1x60x60xbf16>
    %55 = vector.shape_cast %54 : vector<1x60x60xbf16> to vector<60x60xbf16>
    %cst_25 = arith.constant dense<0.000000e+00> : vector<256x60xf32>
    %56 = tpu.matmul %53, %55, %cst_25 {dimension_numbers = #tpu.dot_dimension_numbers<[1], [0], [0], [1], [0, 0, 1, 1], [], []>} : vector<256x60xbf16>, vector<60x60xbf16>, vector<256x60xf32> -> vector<256x60xf32>
    %57 = vector.extract_strided_slice %52 {offsets = [16, 0], sizes = [256, 60], strides = [1, 1]} : vector<288x60xbf16> to vector<256x60xbf16>
    %c1_26 = arith.constant 1 : index
    %c0_27 = arith.constant 0 : index
    %c0_28 = arith.constant 0 : index
    %58 = vector.load %arg4[%c1_26, %c0_27, %c0_28] : memref<3x60x60xbf16, #tpu.memory_space<vmem>>, vector<1x60x60xbf16>
    %59 = vector.shape_cast %58 : vector<1x60x60xbf16> to vector<60x60xbf16>
    %cst_29 = arith.constant dense<0.000000e+00> : vector<256x60xf32>
    %60 = tpu.matmul %57, %59, %cst_29 {dimension_numbers = #tpu.dot_dimension_numbers<[1], [0], [0], [1], [0, 0, 1, 1], [], []>} : vector<256x60xbf16>, vector<60x60xbf16>, vector<256x60xf32> -> vector<256x60xf32>
    %61 = arith.addf %56, %60 : vector<256x60xf32>
    %62 = vector.extract_strided_slice %52 {offsets = [32, 0], sizes = [256, 60], strides = [1, 1]} : vector<288x60xbf16> to vector<256x60xbf16>
    %c2_30 = arith.constant 2 : index
    %c0_31 = arith.constant 0 : index
    %c0_32 = arith.constant 0 : index
    %63 = vector.load %arg4[%c2_30, %c0_31, %c0_32] : memref<3x60x60xbf16, #tpu.memory_space<vmem>>, vector<1x60x60xbf16>
    %64 = vector.shape_cast %63 : vector<1x60x60xbf16> to vector<60x60xbf16>
    %cst_33 = arith.constant dense<0.000000e+00> : vector<256x60xf32>
    %65 = tpu.matmul %62, %64, %cst_33 {dimension_numbers = #tpu.dot_dimension_numbers<[1], [0], [0], [1], [0, 0, 1, 1], [], []>} : vector<256x60xbf16>, vector<60x60xbf16>, vector<256x60xf32> -> vector<256x60xf32>
    %66 = arith.addf %61, %65 : vector<256x60xf32>
    %c0_34 = arith.constant 0 : index
    %c0_35 = arith.constant 0 : index
    %67 = vector.load %arg5[%c0_34, %c0_35] : memref<1x60xf32, #tpu.memory_space<vmem>>, vector<1x60xf32>
    %68 = vector.broadcast %67 : vector<1x60xf32> to vector<256x60xf32>
    %69 = arith.addf %66, %68 : vector<256x60xf32>
    %cst_36 = arith.constant dense<0.000000e+00> : vector<60xf32>
    %70 = vector.multi_reduction <add>, %69, %cst_36 [0] : vector<256x60xf32> to vector<60xf32>
    %71 = vector.shape_cast %70 : vector<60xf32> to vector<1x60xf32>
    %cst_37 = arith.constant 2.560000e+02 : f32
    %72 = vector.broadcast %cst_37 : f32 to vector<1x60xf32>
    %73 = arith.divf %71, %72 : vector<1x60xf32>
    %c0_38 = arith.constant 0 : index
    %c0_39 = arith.constant 0 : index
    %74 = vector.load %arg6[%c0_38, %c0_39] : memref<2x60xf32, #tpu.memory_space<vmem>>, vector<2x60xf32>
    %75 = vector.broadcast %73 : vector<1x60xf32> to vector<2x60xf32>
    %76 = arith.mulf %75, %74 : vector<2x60xf32>
    %cst_40 = arith.constant dense<0.000000e+00> : vector<2xf32>
    %77 = vector.multi_reduction <add>, %76, %cst_40 [1] : vector<2x60xf32> to vector<2xf32>
    %78 = vector.shape_cast %77 : vector<2xf32> to vector<2x1xf32>
    %c0_41 = arith.constant 0 : index
    %c0_42 = arith.constant 0 : index
    %79 = vector.load %arg7[%c0_41, %c0_42] : memref<2x1xf32, #tpu.memory_space<vmem>>, vector<2x1xf32>
    %80 = arith.addf %78, %79 : vector<2x1xf32>
    %cst_43 = arith.constant 0.000000e+00 : f32
    %81 = vector.broadcast %cst_43 : f32 to vector<2x1xf32>
    %82 = arith.maximumf %80, %81 : vector<2x1xf32>
    %c0_44 = arith.constant 0 : index
    %c0_45 = arith.constant 0 : index
    %83 = vector.load %arg8[%c0_44, %c0_45] : memref<2x60xf32, #tpu.memory_space<vmem>>, vector<2x60xf32>
    %84 = vector.broadcast %82 : vector<2x1xf32> to vector<2x60xf32>
    %85 = arith.mulf %84, %83 : vector<2x60xf32>
    %cst_46 = arith.constant dense<0.000000e+00> : vector<60xf32>
    %86 = vector.multi_reduction <add>, %85, %cst_46 [0] : vector<2x60xf32> to vector<60xf32>
    %87 = vector.shape_cast %86 : vector<60xf32> to vector<1x60xf32>
    %c0_47 = arith.constant 0 : index
    %c0_48 = arith.constant 0 : index
    %88 = vector.load %arg9[%c0_47, %c0_48] : memref<1x60xf32, #tpu.memory_space<vmem>>, vector<1x60xf32>
    %89 = arith.addf %87, %88 : vector<1x60xf32>
    %90 = arith.negf %89 : vector<1x60xf32>
    %91 = math.exp %90 : vector<1x60xf32>
    %cst_49 = arith.constant 1.000000e+00 : f32
    %92 = vector.broadcast %cst_49 : f32 to vector<1x60xf32>
    %93 = arith.addf %92, %91 : vector<1x60xf32>
    %94 = arith.divf %92, %93 : vector<1x60xf32>
    %95 = vector.broadcast %94 : vector<1x60xf32> to vector<256x60xf32>
    %96 = arith.mulf %69, %95 : vector<256x60xf32>
    %c0_50 = arith.constant 0 : index
    %c0_51 = arith.constant 0 : index
    %c0_52 = arith.constant 0 : index
    %97 = vector.load %arg10[%c0_50, %c0_51, %c0_52] : memref<1x256x60xf32, #tpu.memory_space<vmem>>, vector<1x256x60xf32>
    %98 = vector.shape_cast %97 : vector<1x256x60xf32> to vector<256x60xf32>
    %99 = vector.shape_cast %96 : vector<256x60xf32> to vector<1x256x60xf32>
    tpu.vector_store %arg10[%c0_50, %c0_51, %c0_52], %99 {strides = array<i32>} : memref<1x256x60xf32, #tpu.memory_space<vmem>>, vector<1x256x60xf32>,
    return
  }
  func.func @transform_0(%arg0: i32) -> (i32, i32, i32, i32) {
    %c0_i32 = arith.constant 0 : i32
    %c0_i32_0 = arith.constant 0 : i32
    %c0_i32_1 = arith.constant 0 : i32
    %c0_i32_2 = arith.constant 0 : i32
    return %arg0, %c0_i32, %c0_i32_0, %c0_i32_1 : i32, i32, i32, i32
  }
  func.func @transform_1(%arg0: i32) -> (i32, i32, i32) {
    %c0_i32 = arith.constant 0 : i32
    %c0_i32_0 = arith.constant 0 : i32
    %c0_i32_1 = arith.constant 0 : i32
    %c0_i32_2 = arith.constant 0 : i32
    return %c0_i32, %c0_i32_0, %c0_i32_1 : i32, i32, i32
  }
  func.func @transform_2(%arg0: i32) -> (i32, i32) {
    %c0_i32 = arith.constant 0 : i32
    %c0_i32_0 = arith.constant 0 : i32
    %c0_i32_1 = arith.constant 0 : i32
    return %c0_i32, %c0_i32_0 : i32, i32
  }
  func.func @transform_3(%arg0: i32) -> (i32, i32, i32) {
    %c0_i32 = arith.constant 0 : i32
    %c0_i32_0 = arith.constant 0 : i32
    %c0_i32_1 = arith.constant 0 : i32
    %c0_i32_2 = arith.constant 0 : i32
    return %c0_i32, %c0_i32_0, %c0_i32_1 : i32, i32, i32
  }
  func.func @transform_4(%arg0: i32) -> (i32, i32) {
    %c0_i32 = arith.constant 0 : i32
    %c0_i32_0 = arith.constant 0 : i32
    %c0_i32_1 = arith.constant 0 : i32
    return %c0_i32, %c0_i32_0 : i32, i32
  }
  func.func @transform_5(%arg0: i32) -> (i32, i32) {
    %c0_i32 = arith.constant 0 : i32
    %c0_i32_0 = arith.constant 0 : i32
    %c0_i32_1 = arith.constant 0 : i32
    return %c0_i32, %c0_i32_0 : i32, i32
  }
  func.func @transform_6(%arg0: i32) -> (i32, i32) {
    %c0_i32 = arith.constant 0 : i32
    %c0_i32_0 = arith.constant 0 : i32
    %c0_i32_1 = arith.constant 0 : i32
    return %c0_i32, %c0_i32_0 : i32, i32
  }
  func.func @transform_7(%arg0: i32) -> (i32, i32) {
    %c0_i32 = arith.constant 0 : i32
    %c0_i32_0 = arith.constant 0 : i32
    %c0_i32_1 = arith.constant 0 : i32
    return %c0_i32, %c0_i32_0 : i32, i32
  }
  func.func @transform_8(%arg0: i32) -> (i32, i32) {
    %c0_i32 = arith.constant 0 : i32
    %c0_i32_0 = arith.constant 0 : i32
    %c0_i32_1 = arith.constant 0 : i32
    return %c0_i32, %c0_i32_0 : i32, i32
  }
  func.func @transform_9(%arg0: i32) -> (i32, i32, i32) {
    %c0_i32 = arith.constant 0 : i32
    %c0_i32_0 = arith.constant 0 : i32
    %c0_i32_1 = arith.constant 0 : i32
    return %arg0, %c0_i32, %c0_i32_0 : i32, i32, i32
  }
}

</mosaic_0001>

<llo_original>
// kernel: cab_forward.1
$region0: #{cab_forward.1}
  #allocation0 [shape = 'u32[]', space=smem, size = 0x4, offset = 0x4, fixed_abs, tag = 'smem constant byte address 0x4 - core index']
  #allocation1 [shape = 'u32[72,128]{1,0:T(1,128)}', space=vmem, size = 0x9000, scoped, tag = 'internal scratch']
  %s0 = inlined_call_operand.vmem [shape: f32[2,16,16,60], index: 0, kind: input, shape index: {}]
  %s1 = inlined_call_operand.vmem [shape: bf16[3,180,20], index: 1, kind: input, shape index: {}]
  %s2 = inlined_call_operand.vmem [shape: f32[1,20], index: 2, kind: input, shape index: {}]
  %s3 = inlined_call_operand.vmem [shape: bf16[3,60,60], index: 3, kind: input, shape index: {}]
  %s4 = inlined_call_operand.vmem [shape: f32[1,60], index: 4, kind: input, shape index: {}]
  %s5 = inlined_call_operand.vmem [shape: f32[2,60], index: 5, kind: input, shape index: {}]
  %s6 = inlined_call_operand.vmem [shape: f32[2,1], index: 6, kind: input, shape index: {}]
  %s7 = inlined_call_operand.vmem [shape: f32[2,60], index: 7, kind: input, shape index: {}]
  %s8 = inlined_call_operand.vmem [shape: f32[1,60], index: 8, kind: input, shape index: {}]
  %s9 = inlined_call_operand.hbm [shape: f32[2,256,60], index: 9, kind: output, shape index: {}]
  %s10 = sld [smem:[#allocation0]]
  $region69: #{cab_forward.1} parent=0
    _
  %s12 = ssub.s32 1, %s10
  %s13 = scalar_select 0, %s12, %s10
  $region1: #{cab_forward.1} parent=0
    #allocation2 [shape = 'u8[262144]{0}', space=vmem, size = 0x40000, scoped, tag = 'output window, operand 0']
    #allocation3 [shape = 's32[2]{0}', space=sflag, size = 0x8, scoped, tag = 'scoped memory for cab_forward.1']
    %14 = vsyncpa [#allocation3], 0
    %s15 = scalar_lea.sflag [#allocation3], 1
    %16 = vsyncpa %s15, 0
    loop: start=0, step=1, limit=4
    $region2: #{cab_forward.1} parent=1 // loop_pre_header
      _
    $region3: #{cab_forward.1} parent=1 // loop_header
      %s18 = sphi 0, %s22
      %p19 = scmp.ge.s32.totalorder %s18, 4
      %s28 = sphi 0, %s30
      %s31 = sphi 0, %s28
      %s32 = sphi 0, %s31
      %s48 = sphi 0, %s32
      %s52 = sphi 0, %s52
      %s54 = sphi 0, %s52
      %s55 = sphi 0, %s54
      %s69 = sphi 0, %s55
      %s73 = sphi 0, %s73
      %s75 = sphi 0, %s73
      %s76 = sphi 0, %s75
      %s90 = sphi 0, %s76
      %s94 = sphi 0, %s94
      %s96 = sphi 0, %s94
      %s97 = sphi 0, %s96
      %s111 = sphi 0, %s97
      %s115 = sphi 0, %s115
      %s117 = sphi 0, %s115
      %s118 = sphi 0, %s117
      %s132 = sphi 0, %s118
      %s136 = sphi 0, %s136
      %s138 = sphi 0, %s136
      %s139 = sphi 0, %s138
      %s153 = sphi 0, %s139
      %s157 = sphi 0, %s157
      %s159 = sphi 0, %s157
      %s160 = sphi 0, %s159
      %s174 = sphi 0, %s160
      %s178 = sphi 0, %s178
      %s180 = sphi 0, %s178
      %s181 = sphi 0, %s180
      %s195 = sphi 0, %s181
      %s199 = sphi 0, %s199
      %s201 = sphi 0, %s199
      %s202 = sphi 0, %s201
      %s216 = sphi 0, %s202
      %s222 = sphi 0, %s224
      %s225 = sphi 0, %s222
      %s226 = sphi 0, %s225
      %s242 = sphi 0, %s226
    $region4: #{cab_forward.1} parent=1 // loop_header_branch
      %21 = sbr.rel (%p19) target = $region8
    $region5: #{cab_forward.1} parent=1 // loop_body
      %s23 = ssub.s32 %s18, 1
      %s24 = ssub.s32 %s18, 2
      %s25 = sadd.s32 %s18, 1
      %s26 = ssub.s32 %s18, %s25
      %p27 = scmp.eq.s32.totalorder %s26, 0
      %s29 = sadd.s32 %s28, 1
      %s30 = scalar_select %p27, %s28, %s29
      %p33 = pneg %p27
      %p34 = scmp.eq.s32.totalorder %s18, 1
      %p35 = por %p33, %p34
      %p36 = scmp.ne.s32.totalorder %s28, %s31
      %p37 = scmp.eq.s32.totalorder %s18, 0
      %p38 = por %p36, %p37
      %p39 = scmp.ne.s32.totalorder %s28, %s31
      %p40 = scmp.eq.s32.totalorder %s23, 1
      %p41 = por %p39, %p40
      %p42 = scmp.ne.s32.totalorder %s31, %s32
      %p43 = scmp.eq.s32.totalorder %s23, 0
      %p44 = por %p42, %p43
      %p45 = scmp.ne.s32.totalorder %s31, %s32
      %p46 = scmp.eq.s32.totalorder %s24, 1
      %p47 = por %p45, %p46
      %p49 = scmp.ne.s32.totalorder %s32, %s48
      %p50 = scmp.eq.s32.totalorder %s24, 0
      %p51 = por %p49, %p50
      %s53 = sadd.s32 %s52, 1
      %p56 = scmp.eq.s32.totalorder %s18, 1
      %p57 = scmp.ne.s32.totalorder %s52, %s54
      %p58 = scmp.eq.s32.totalorder %s18, 0
      %p59 = por %p57, %p58
      %p60 = scmp.ne.s32.totalorder %s52, %s54
      %p61 = scmp.eq.s32.totalorder %s23, 1
      %p62 = por %p60, %p61
      %p63 = scmp.ne.s32.totalorder %s54, %s55
      %p64 = scmp.eq.s32.totalorder %s23, 0
      %p65 = por %p63, %p64
      %p66 = scmp.ne.s32.totalorder %s54, %s55
      %p67 = scmp.eq.s32.totalorder %s24, 1
      %p68 = por %p66, %p67
      %p70 = scmp.ne.s32.totalorder %s55, %s69
      %p71 = scmp.eq.s32.totalorder %s24, 0
      %p72 = por %p70, %p71
      %s74 = sadd.s32 %s73, 1
      %p77 = scmp.eq.s32.totalorder %s18, 1
      %p78 = scmp.ne.s32.totalorder %s73, %s75
      %p79 = scmp.eq.s32.totalorder %s18, 0
      %p80 = por %p78, %p79
      %p81 = scmp.ne.s32.totalorder %s73, %s75
      %p82 = scmp.eq.s32.totalorder %s23, 1
      %p83 = por %p81, %p82
      %p84 = scmp.ne.s32.totalorder %s75, %s76
      %p85 = scmp.eq.s32.totalorder %s23, 0
      %p86 = por %p84, %p85
      %p87 = scmp.ne.s32.totalorder %s75, %s76
      %p88 = scmp.eq.s32.totalorder %s24, 1
      %p89 = por %p87, %p88
      %p91 = scmp.ne.s32.totalorder %s76, %s90
      %p92 = scmp.eq.s32.totalorder %s24, 0
      %p93 = por %p91, %p92
      %s95 = sadd.s32 %s94, 1
      %p98 = scmp.eq.s32.totalorder %s18, 1
      %p99 = scmp.ne.s32.totalorder %s94, %s96
      %p100 = scmp.eq.s32.totalorder %s18, 0
      %p101 = por %p99, %p100
      %p102 = scmp.ne.s32.totalorder %s94, %s96
      %p103 = scmp.eq.s32.totalorder %s23, 1
      %p104 = por %p102, %p103
      %p105 = scmp.ne.s32.totalorder %s96, %s97
      %p106 = scmp.eq.s32.totalorder %s23, 0
      %p107 = por %p105, %p106
      %p108 = scmp.ne.s32.totalorder %s96, %s97
      %p109 = scmp.eq.s32.totalorder %s24, 1
      %p110 = por %p108, %p109
      %p112 = scmp.ne.s32.totalorder %s97, %s111
      %p113 = scmp.eq.s32.totalorder %s24, 0
      %p114 = por %p112, %p113
      %s116 = sadd.s32 %s115, 1
      %p119 = scmp.eq.s32.totalorder %s18, 1
      %p120 = scmp.ne.s32.totalorder %s115, %s117
      %p121 = scmp.eq.s32.totalorder %s18, 0
      %p122 = por %p120, %p121
      %p123 = scmp.ne.s32.totalorder %s115, %s117
      %p124 = scmp.eq.s32.totalorder %s23, 1
      %p125 = por %p123, %p124
      %p126 = scmp.ne.s32.totalorder %s117, %s118
      %p127 = scmp.eq.s32.totalorder %s23, 0
      %p128 = por %p126, %p127
      %p129 = scmp.ne.s32.totalorder %s117, %s118
      %p130 = scmp.eq.s32.totalorder %s24, 1
      %p131 = por %p129, %p130
      %p133 = scmp.ne.s32.totalorder %s118, %s132
      %p134 = scmp.eq.s32.totalorder %s24, 0
      %p135 = por %p133, %p134
      %s137 = sadd.s32 %s136, 1
      %p140 = scmp.eq.s32.totalorder %s18, 1
      %p141 = scmp.ne.s32.totalorder %s136, %s138
      %p142 = scmp.eq.s32.totalorder %s18, 0
      %p143 = por %p141, %p142
      %p144 = scmp.ne.s32.totalorder %s136, %s138
      %p145 = scmp.eq.s32.totalorder %s23, 1
      %p146 = por %p144, %p145
      %p147 = scmp.ne.s32.totalorder %s138, %s139
      %p148 = scmp.eq.s32.totalorder %s23, 0
      %p149 = por %p147, %p148
      %p150 = scmp.ne.s32.totalorder %s138, %s139
      %p151 = scmp.eq.s32.totalorder %s24, 1
      %p152 = por %p150, %p151
      %p154 = scmp.ne.s32.totalorder %s139, %s153
      %p155 = scmp.eq.s32.totalorder %s24, 0
      %p156 = por %p154, %p155
      %s158 = sadd.s32 %s157, 1
      %p161 = scmp.eq.s32.totalorder %s18, 1
      %p162 = scmp.ne.s32.totalorder %s157, %s159
      %p163 = scmp.eq.s32.totalorder %s18, 0
      %p164 = por %p162, %p163
      %p165 = scmp.ne.s32.totalorder %s157, %s159
      %p166 = scmp.eq.s32.totalorder %s23, 1
      %p167 = por %p165, %p166
      %p168 = scmp.ne.s32.totalorder %s159, %s160
      %p169 = scmp.eq.s32.totalorder %s23, 0
      %p170 = por %p168, %p169
      %p171 = scmp.ne.s32.totalorder %s159, %s160
      %p172 = scmp.eq.s32.totalorder %s24, 1
      %p173 = por %p171, %p172
      %p175 = scmp.ne.s32.totalorder %s160, %s174
      %p176 = scmp.eq.s32.totalorder %s24, 0
      %p177 = por %p175, %p176
      %s179 = sadd.s32 %s178, 1
      %p182 = scmp.eq.s32.totalorder %s18, 1
      %p183 = scmp.ne.s32.totalorder %s178, %s180
      %p184 = scmp.eq.s32.totalorder %s18, 0
      %p185 = por %p183, %p184
      %p186 = scmp.ne.s32.totalorder %s178, %s180
      %p187 = scmp.eq.s32.totalorder %s23, 1
      %p188 = por %p186, %p187
      %p189 = scmp.ne.s32.totalorder %s180, %s181
      %p190 = scmp.eq.s32.totalorder %s23, 0
      %p191 = por %p189, %p190
      %p192 = scmp.ne.s32.totalorder %s180, %s181
      %p193 = scmp.eq.s32.totalorder %s24, 1
      %p194 = por %p192, %p193
      %p196 = scmp.ne.s32.totalorder %s181, %s195
      %p197 = scmp.eq.s32.totalorder %s24, 0
      %p198 = por %p196, %p197
      %s200 = sadd.s32 %s199, 1
      %p203 = scmp.eq.s32.totalorder %s18, 1
      %p204 = scmp.ne.s32.totalorder %s199, %s201
      %p205 = scmp.eq.s32.totalorder %s18, 0
      %p206 = por %p204, %p205
      %p207 = scmp.ne.s32.totalorder %s199, %s201
      %p208 = scmp.eq.s32.totalorder %s23, 1
      %p209 = por %p207, %p208
      %p210 = scmp.ne.s32.totalorder %s201, %s202
      %p211 = scmp.eq.s32.totalorder %s23, 0
      %p212 = por %p210, %p211
      %p213 = scmp.ne.s32.totalorder %s201, %s202
      %p214 = scmp.eq.s32.totalorder %s24, 1
      %p215 = por %p213, %p214
      %p217 = scmp.ne.s32.totalorder %s202, %s216
      %p218 = scmp.eq.s32.totalorder %s24, 0
      %p219 = por %p217, %p218
      %s220 = ssub.s32 %s18, %s25
      %p221 = scmp.eq.s32.totalorder %s220, 0
      %s223 = sadd.s32 %s222, 1
      %s224 = scalar_select %p221, %s222, %s223
      %p227 = pneg %p221
      %p228 = scmp.eq.s32.totalorder %s18, 1
      %p229 = por %p227, %p228
      %p230 = scmp.ne.s32.totalorder %s222, %s225
      %p231 = scmp.eq.s32.totalorder %s18, 0
      %p232 = por %p230, %p231
      %p233 = scmp.ne.s32.totalorder %s222, %s225
      %p234 = scmp.eq.s32.totalorder %s23, 1
      %p235 = por %p233, %p234
      %p236 = scmp.ne.s32.totalorder %s225, %s226
      %p237 = scmp.eq.s32.totalorder %s23, 0
      %p238 = por %p236, %p237
      %p239 = scmp.ne.s32.totalorder %s225, %s226
      %p240 = scmp.eq.s32.totalorder %s24, 1
      %p241 = por %p239, %p240
      %p243 = scmp.ne.s32.totalorder %s226, %s242
      %p244 = scmp.eq.s32.totalorder %s24, 0
      %p245 = por %p243, %p244
      %p246 = scmp.le.s32.totalorder 1, %s18
      %p247 = scmp.lt.s32.totalorder %s18, 3
      %p248 = pnand %p246, %p247
      %p249 = pneg %p248
      // Predicated region
      $region9: #{cab_forward.1} parent=5 // pred_check
        _
      $region10: #{cab_forward.1} parent=5 // pred_check_branch
        %251 = sbr.rel (%p248) target = $region12
      $region11: #{cab_forward.1} parent=5 // pred_region
        %s252 = ssub.s32 %s18, 1
        // Predicated region
        $region13: #{cab_forward.1} parent=11 // pred_check
          %p253 = pneg %p65
        $region14: #{cab_forward.1} parent=11 // pred_check_branch
          %255 = sbr.rel (%p253) target = $region16
        $region15: #{cab_forward.1} parent=11 // pred_region
          _
        $region16: #{cab_forward.1} parent=11 // pred_fallthru
          _
        // Predicated region
        $region17: #{cab_forward.1} parent=11 // pred_check
          %p256 = pneg %p86
        $region18: #{cab_forward.1} parent=11 // pred_check_branch
          %258 = sbr.rel (%p256) target = $region20
        $region19: #{cab_forward.1} parent=11 // pred_region
          _
        $region20: #{cab_forward.1} parent=11 // pred_fallthru
          _
        // Predicated region
        $region21: #{cab_forward.1} parent=11 // pred_check
          %p259 = pneg %p107
        $region22: #{cab_forward.1} parent=11 // pred_check_branch
          %261 = sbr.rel (%p259) target = $region24
        $region23: #{cab_forward.1} parent=11 // pred_region
          _
        $region24: #{cab_forward.1} parent=11 // pred_fallthru
          _
        // Predicated region
        $region25: #{cab_forward.1} parent=11 // pred_check
          %p262 = pneg %p128
        $region26: #{cab_forward.1} parent=11 // pred_check_branch
          %264 = sbr.rel (%p262) target = $region28
        $region27: #{cab_forward.1} parent=11 // pred_region
          _
        $region28: #{cab_forward.1} parent=11 // pred_fallthru
          _
        // Predicated region
        $region29: #{cab_forward.1} parent=11 // pred_check
          %p265 = pneg %p149
        $region30: #{cab_forward.1} parent=11 // pred_check_branch
          %267 = sbr.rel (%p265) target = $region32
        $region31: #{cab_forward.1} parent=11 // pred_region
          _
        $region32: #{cab_forward.1} parent=11 // pred_fallthru
          _
        // Predicated region
        $region33: #{cab_forward.1} parent=11 // pred_check
          %p268 = pneg %p170
        $region34: #{cab_forward.1} parent=11 // pred_check_branch
          %270 = sbr.rel (%p268) target = $region36
        $region35: #{cab_forward.1} parent=11 // pred_region
          _
        $region36: #{cab_forward.1} parent=11 // pred_fallthru
          _
        // Predicated region
        $region37: #{cab_forward.1} parent=11 // pred_check
          %p271 = pneg %p191
        $region38: #{cab_forward.1} parent=11 // pred_check_branch
          %273 = sbr.rel (%p271) target = $region40
        $region39: #{cab_forward.1} parent=11 // pred_region
          _
        $region40: #{cab_forward.1} parent=11 // pred_fallthru
          _
        // Predicated region
        $region41: #{cab_forward.1} parent=11 // pred_check
          %p274 = pneg %p212
        $region42: #{cab_forward.1} parent=11 // pred_check_branch
          %276 = sbr.rel (%p274) target = $region44
        $region43: #{cab_forward.1} parent=11 // pred_region
          _
        $region44: #{cab_forward.1} parent=11 // pred_fallthru
          _
      $region12: #{cab_forward.1} parent=5 // pred_fallthru
        _
      %p277 = scmp.lt.s32.totalorder %s18, 2
      // Predicated region
      $region45: #{cab_forward.1} parent=5 // pred_check
        %p278 = pneg %p277
      $region46: #{cab_forward.1} parent=5 // pred_check_branch
        %280 = sbr.rel (%p278) target = $region48
      $region47: #{cab_forward.1} parent=5 // pred_region
        // Predicated region
        $region49: #{cab_forward.1} parent=47 // pred_check
          %p281 = pneg %p38
        $region50: #{cab_forward.1} parent=47 // pred_check_branch
          %283 = sbr.rel (%p281) target = $region52
        $region51: #{cab_forward.1} parent=47 // pred_region
          %p284 = scmp.lt.s32.totalorder %s18, 1
          %s285 = scalar_select %p284, %s18, 1
          %s286 = smul.addr %s285, 32
          %s287 = smul.addr %s286, 8
          %s288 = scalar_lea.vmem %s0, %s287
        $region52: #{cab_forward.1} parent=47 // pred_fallthru
          _
      $region48: #{cab_forward.1} parent=5 // pred_fallthru
        _
      %p289 = scmp.le.s32.totalorder 1, %s18
      %p290 = scmp.lt.s32.totalorder %s18, 3
      %p291 = pnand %p289, %p290
      %p292 = pneg %p291
      // Predicated region
      $region53: #{cab_forward.1} parent=5 // pred_check
        _
      $region54: #{cab_forward.1} parent=5 // pred_check_branch
        %294 = sbr.rel (%p291) target = $region56
      $region55: #{cab_forward.1} parent=5 // pred_region
        %s295 = ssub.s32 %s18, 1
        %p296 = scmp.lt.s32.totalorder %s23, 1
        %s297 = scalar_select %p296, %s23, 1
        %s298 = smul.addr %s297, 32
        %s299 = smul.addr %s298, 8
        %s300 = scalar_lea.vmem %s0, %s299
        %p301 = pneg %p44
        %p302 = pneg %p41
        %p303 = pneg %p65
        %p304 = pneg %p62
        %p305 = pneg %p86
        %p306 = pneg %p83
        %p307 = pneg %p107
        %p308 = pneg %p104
        %p309 = pneg %p128
        %p310 = pneg %p125
        %p311 = pneg %p149
        %p312 = pneg %p146
        %p313 = pneg %p170
        %p314 = pneg %p167
        %p315 = pneg %p191
        %p316 = pneg %p188
        %p317 = pneg %p212
        %p318 = pneg %p209
        %p319 = pneg %p238
        %p320 = pneg %p235
        %s321 = sand.u32 %s225, 1
        %s322 = scalar_lea.sflag [#allocation3], %s321
        %s323 = sand.u32 %s225, 1
        %s324 = smul.addr %s323, 256
        %s325 = scalar_lea.vmem [#allocation2], %s324
        %p326 = scmp.lt.s32.totalorder %s23, 1
        %s327 = scalar_select %p326, %s23, 1
        %s328 = smul.addr %s327, 32
        %s329 = smul.addr %s328, 8
        %s330 = scalar_lea.vmem %s0, %s329
        %v332 = vld [vmem:[%s330] sm:$0xff]
        %v333 = vld [vmem:[%s330 + $0x8] sm:$0xff]
        %v334 = vld [vmem:[%s330 + $0x10] sm:$0xff]
        %v335 = vld [vmem:[%s330 + $0x18] sm:$0xff]
        %v336 = vld [vmem:[%s330 + $0x20] sm:$0xff]
        %v337 = vld [vmem:[%s330 + $0x28] sm:$0xff]
        %v338 = vld [vmem:[%s330 + $0x30] sm:$0xff]
        %v339 = vld [vmem:[%s330 + $0x38] sm:$0xff]
        %v340 = vld [vmem:[%s330 + $0x40] sm:$0xff]
        %v341 = vld [vmem:[%s330 + $0x48] sm:$0xff]
        %v342 = vld [vmem:[%s330 + $0x50] sm:$0xff]
        %v343 = vld [vmem:[%s330 + $0x58] sm:$0xff]
        %v344 = vld [vmem:[%s330 + $0x60] sm:$0xff]
        %v345 = vld [vmem:[%s330 + $0x68] sm:$0xff]
        %v346 = vld [vmem:[%s330 + $0x70] sm:$0xff]
        %v347 = vld [vmem:[%s330 + $0x78] sm:$0xff]
        %v348 = vld [vmem:[%s330 + $0x80] sm:$0xff]
        %v349 = vld [vmem:[%s330 + $0x88] sm:$0xff]
        %v350 = vld [vmem:[%s330 + $0x90] sm:$0xff]
        %v351 = vld [vmem:[%s330 + $0x98] sm:$0xff]
        %v352 = vld [vmem:[%s330 + $0xa0] sm:$0xff]
        %v353 = vld [vmem:[%s330 + $0xa8] sm:$0xff]
        %v354 = vld [vmem:[%s330 + $0xb0] sm:$0xff]
        %v355 = vld [vmem:[%s330 + $0xb8] sm:$0xff]
        %v356 = vld [vmem:[%s330 + $0xc0] sm:$0xff]
        %v357 = vld [vmem:[%s330 + $0xc8] sm:$0xff]
        %v358 = vld [vmem:[%s330 + $0xd0] sm:$0xff]
        %v359 = vld [vmem:[%s330 + $0xd8] sm:$0xff]
        %v360 = vld [vmem:[%s330 + $0xe0] sm:$0xff]
        %v361 = vld [vmem:[%s330 + $0xe8] sm:$0xff]
        %v362 = vld [vmem:[%s330 + $0xf0] sm:$0xff]
        %v363 = vld [vmem:[%s330 + $0xf8] sm:$0xff]
        %vm396 = vcmask 1040384
        %v397 = vrot.slane %v332, 7
        %v398 = vrot.slane %v333, 7
        %v399 = vsel %vm396, %v397, %v398
        %v400 = vrot.slane %v334, 7
        %v401 = vrot.slane %v335, 7
        %v402 = vsel %vm396, %v400, %v401
        %v403 = vrot.slane %v336, 7
        %v404 = vrot.slane %v337, 7
        %v405 = vsel %vm396, %v403, %v404
        %v406 = vrot.slane %v338, 7
        %v407 = vrot.slane %v339, 7
        %v408 = vsel %vm396, %v406, %v407
        %v409 = vrot.slane %v340, 7
        %v410 = vrot.slane %v341, 7
        %v411 = vsel %vm396, %v409, %v410
        %v412 = vrot.slane %v342, 7
        %v413 = vrot.slane %v343, 7
        %v414 = vsel %vm396, %v412, %v413
        %v415 = vrot.slane %v344, 7
        %v416 = vrot.slane %v345, 7
        %v417 = vsel %vm396, %v415, %v416
        %v418 = vrot.slane %v346, 7
        %v419 = vrot.slane %v347, 7
        %v420 = vsel %vm396, %v418, %v419
        %v421 = vrot.slane %v348, 7
        %v422 = vrot.slane %v349, 7
        %v423 = vsel %vm396, %v421, %v422
        %v424 = vrot.slane %v350, 7
        %v425 = vrot.slane %v351, 7
        %v426 = vsel %vm396, %v424, %v425
        %v427 = vrot.slane %v352, 7
        %v428 = vrot.slane %v353, 7
        %v429 = vsel %vm396, %v427, %v428
        %v430 = vrot.slane %v354, 7
        %v431 = vrot.slane %v355, 7
        %v432 = vsel %vm396, %v430, %v431
        %v433 = vrot.slane %v356, 7
        %v434 = vrot.slane %v357, 7
        %v435 = vsel %vm396, %v433, %v434
        %v436 = vrot.slane %v358, 7
        %v437 = vrot.slane %v359, 7
        %v438 = vsel %vm396, %v436, %v437
        %v439 = vrot.slane %v360, 7
        %v440 = vrot.slane %v361, 7
        %v441 = vsel %vm396, %v439, %v440
        %v442 = vrot.slane %v362, 7
        %v443 = vrot.slane %v363, 7
        %v444 = vsel %vm396, %v442, %v443
        %v477 = vsel %vm396, 0.0, %v397
        %v478 = vsel %vm396, 0.0, %v400
        %v479 = vsel %vm396, 0.0, %v403
        %v480 = vsel %vm396, 0.0, %v406
        %v481 = vsel %vm396, 0.0, %v409
        %v482 = vsel %vm396, 0.0, %v412
        %v483 = vsel %vm396, 0.0, %v415
        %v484 = vsel %vm396, 0.0, %v418
        %v485 = vsel %vm396, 0.0, %v421
        %v486 = vsel %vm396, 0.0, %v424
        %v487 = vsel %vm396, 0.0, %v427
        %v488 = vsel %vm396, 0.0, %v430
        %v489 = vsel %vm396, 0.0, %v433
        %v490 = vsel %vm396, 0.0, %v436
        %v491 = vsel %vm396, 0.0, %v439
        %v492 = vsel %vm396, 0.0, %v442
        %vm493 = vcmask 1046528
        %v494 = vrot.slane %v332, 1
        %v495 = vrot.slane %v333, 1
        %v496 = vsel %vm493, %v494, %v495
        %v497 = vrot.slane %v334, 1
        %v498 = vrot.slane %v335, 1
        %v499 = vsel %vm493, %v497, %v498
        %v500 = vrot.slane %v336, 1
        %v501 = vrot.slane %v337, 1
        %v502 = vsel %vm493, %v500, %v501
        %v503 = vrot.slane %v338, 1
        %v504 = vrot.slane %v339, 1
        %v505 = vsel %vm493, %v503, %v504
        %v506 = vrot.slane %v340, 1
        %v507 = vrot.slane %v341, 1
        %v508 = vsel %vm493, %v506, %v507
        %v509 = vrot.slane %v342, 1
        %v510 = vrot.slane %v343, 1
        %v511 = vsel %vm493, %v509, %v510
        %v512 = vrot.slane %v344, 1
        %v513 = vrot.slane %v345, 1
        %v514 = vsel %vm493, %v512, %v513
        %v515 = vrot.slane %v346, 1
        %v516 = vrot.slane %v347, 1
        %v517 = vsel %vm493, %v515, %v516
        %v518 = vrot.slane %v348, 1
        %v519 = vrot.slane %v349, 1
        %v520 = vsel %vm493, %v518, %v519
        %v521 = vrot.slane %v350, 1
        %v522 = vrot.slane %v351, 1
        %v523 = vsel %vm493, %v521, %v522
        %v524 = vrot.slane %v352, 1
        %v525 = vrot.slane %v353, 1
        %v526 = vsel %vm493, %v524, %v525
        %v527 = vrot.slane %v354, 1
        %v528 = vrot.slane %v355, 1
        %v529 = vsel %vm493, %v527, %v528
        %v530 = vrot.slane %v356, 1
        %v531 = vrot.slane %v357, 1
        %v532 = vsel %vm493, %v530, %v531
        %v533 = vrot.slane %v358, 1
        %v534 = vrot.slane %v359, 1
        %v535 = vsel %vm493, %v533, %v534
        %v536 = vrot.slane %v360, 1
        %v537 = vrot.slane %v361, 1
        %v538 = vsel %vm493, %v536, %v537
        %v539 = vrot.slane %v362, 1
        %v540 = vrot.slane %v363, 1
        %v541 = vsel %vm493, %v539, %v540
        %v558 = vsel %vm493, %v495, 0.0
        %v559 = vsel %vm493, %v498, 0.0
        %v560 = vsel %vm493, %v501, 0.0
        %v561 = vsel %vm493, %v504, 0.0
        %v562 = vsel %vm493, %v507, 0.0
        %v563 = vsel %vm493, %v510, 0.0
        %v564 = vsel %vm493, %v513, 0.0
        %v565 = vsel %vm493, %v516, 0.0
        %v566 = vsel %vm493, %v519, 0.0
        %v567 = vsel %vm493, %v522, 0.0
        %v568 = vsel %vm493, %v525, 0.0
        %v569 = vsel %vm493, %v528, 0.0
        %v570 = vsel %vm493, %v531, 0.0
        %v571 = vsel %vm493, %v534, 0.0
        %v572 = vsel %vm493, %v537, 0.0
        %v573 = vsel %vm493, %v540, 0.0
        %574 = vrot.lane.b32.xlu0 %v332, 60
        %v575 = vpop.permute.xlu0 %574
        %576 = vrot.lane.b32.xlu0 %v333, 60
        %v577 = vpop.permute.xlu0 %576
        %578 = vrot.lane.b32.xlu0 %v334, 60
        %v579 = vpop.permute.xlu0 %578
        %580 = vrot.lane.b32.xlu0 %v335, 60
        %v581 = vpop.permute.xlu0 %580
        %582 = vrot.lane.b32.xlu0 %v336, 60
        %v583 = vpop.permute.xlu0 %582
        %584 = vrot.lane.b32.xlu0 %v337, 60
        %v585 = vpop.permute.xlu0 %584
        %586 = vrot.lane.b32.xlu0 %v338, 60
        %v587 = vpop.permute.xlu0 %586
        %588 = vrot.lane.b32.xlu0 %v339, 60
        %v589 = vpop.permute.xlu0 %588
        %590 = vrot.lane.b32.xlu0 %v340, 60
        %v591 = vpop.permute.xlu0 %590
        %592 = vrot.lane.b32.xlu0 %v341, 60
        %v593 = vpop.permute.xlu0 %592
        %594 = vrot.lane.b32.xlu0 %v342, 60
        %v595 = vpop.permute.xlu0 %594
        %596 = vrot.lane.b32.xlu0 %v343, 60
        %v597 = vpop.permute.xlu0 %596
        %598 = vrot.lane.b32.xlu0 %v344, 60
        %v599 = vpop.permute.xlu0 %598
        %600 = vrot.lane.b32.xlu0 %v345, 60
        %v601 = vpop.permute.xlu0 %600
        %602 = vrot.lane.b32.xlu0 %v346, 60
        %v603 = vpop.permute.xlu0 %602
        %604 = vrot.lane.b32.xlu0 %v347, 60
        %v605 = vpop.permute.xlu0 %604
        %606 = vrot.lane.b32.xlu0 %v348, 60
        %v607 = vpop.permute.xlu0 %606
        %608 = vrot.lane.b32.xlu0 %v349, 60
        %v609 = vpop.permute.xlu0 %608
        %610 = vrot.lane.b32.xlu0 %v350, 60
        %v611 = vpop.permute.xlu0 %610
        %612 = vrot.lane.b32.xlu0 %v351, 60
        %v613 = vpop.permute.xlu0 %612
        %614 = vrot.lane.b32.xlu0 %v352, 60
        %v615 = vpop.permute.xlu0 %614
        %616 = vrot.lane.b32.xlu0 %v353, 60
        %v617 = vpop.permute.xlu0 %616
        %618 = vrot.lane.b32.xlu0 %v354, 60
        %v619 = vpop.permute.xlu0 %618
        %620 = vrot.lane.b32.xlu0 %v355, 60
        %v621 = vpop.permute.xlu0 %620
        %622 = vrot.lane.b32.xlu0 %v356, 60
        %v623 = vpop.permute.xlu0 %622
        %624 = vrot.lane.b32.xlu0 %v357, 60
        %v625 = vpop.permute.xlu0 %624
        %626 = vrot.lane.b32.xlu0 %v358, 60
        %v627 = vpop.permute.xlu0 %626
        %628 = vrot.lane.b32.xlu0 %v359, 60
        %v629 = vpop.permute.xlu0 %628
        %630 = vrot.lane.b32.xlu0 %v360, 60
        %v631 = vpop.permute.xlu0 %630
        %632 = vrot.lane.b32.xlu0 %v361, 60
        %v633 = vpop.permute.xlu0 %632
        %634 = vrot.lane.b32.xlu0 %v362, 60
        %v635 = vpop.permute.xlu0 %634
        %636 = vrot.lane.b32.xlu0 %v363, 60
        %v637 = vpop.permute.xlu0 %636
        %686 = vrot.lane.b32.xlu0 %v496, 120
        %v687 = vpop.permute.xlu0 %686
        %688 = vrot.lane.b32.xlu0 %v558, 120
        %v689 = vpop.permute.xlu0 %688
        %690 = vrot.lane.b32.xlu0 %v499, 120
        %v691 = vpop.permute.xlu0 %690
        %692 = vrot.lane.b32.xlu0 %v559, 120
        %v693 = vpop.permute.xlu0 %692
        %694 = vrot.lane.b32.xlu0 %v502, 120
        %v695 = vpop.permute.xlu0 %694
        %696 = vrot.lane.b32.xlu0 %v560, 120
        %v697 = vpop.permute.xlu0 %696
        %698 = vrot.lane.b32.xlu0 %v505, 120
        %v699 = vpop.permute.xlu0 %698
        %700 = vrot.lane.b32.xlu0 %v561, 120
        %v701 = vpop.permute.xlu0 %700
        %702 = vrot.lane.b32.xlu0 %v508, 120
        %v703 = vpop.permute.xlu0 %702
        %704 = vrot.lane.b32.xlu0 %v562, 120
        %v705 = vpop.permute.xlu0 %704
        %706 = vrot.lane.b32.xlu0 %v511, 120
        %v707 = vpop.permute.xlu0 %706
        %708 = vrot.lane.b32.xlu0 %v563, 120
        %v709 = vpop.permute.xlu0 %708
        %710 = vrot.lane.b32.xlu0 %v514, 120
        %v711 = vpop.permute.xlu0 %710
        %712 = vrot.lane.b32.xlu0 %v564, 120
        %v713 = vpop.permute.xlu0 %712
        %714 = vrot.lane.b32.xlu0 %v517, 120
        %v715 = vpop.permute.xlu0 %714
        %716 = vrot.lane.b32.xlu0 %v565, 120
        %v717 = vpop.permute.xlu0 %716
        %718 = vrot.lane.b32.xlu0 %v520, 120
        %v719 = vpop.permute.xlu0 %718
        %720 = vrot.lane.b32.xlu0 %v566, 120
        %v721 = vpop.permute.xlu0 %720
        %722 = vrot.lane.b32.xlu0 %v523, 120
        %v723 = vpop.permute.xlu0 %722
        %724 = vrot.lane.b32.xlu0 %v567, 120
        %v725 = vpop.permute.xlu0 %724
        %726 = vrot.lane.b32.xlu0 %v526, 120
        %v727 = vpop.permute.xlu0 %726
        %728 = vrot.lane.b32.xlu0 %v568, 120
        %v729 = vpop.permute.xlu0 %728
        %730 = vrot.lane.b32.xlu0 %v529, 120
        %v731 = vpop.permute.xlu0 %730
        %732 = vrot.lane.b32.xlu0 %v569, 120
        %v733 = vpop.permute.xlu0 %732
        %734 = vrot.lane.b32.xlu0 %v532, 120
        %v735 = vpop.permute.xlu0 %734
        %736 = vrot.lane.b32.xlu0 %v570, 120
        %v737 = vpop.permute.xlu0 %736
        %738 = vrot.lane.b32.xlu0 %v535, 120
        %v739 = vpop.permute.xlu0 %738
        %740 = vrot.lane.b32.xlu0 %v571, 120
        %v741 = vpop.permute.xlu0 %740
        %742 = vrot.lane.b32.xlu0 %v538, 120
        %v743 = vpop.permute.xlu0 %742
        %744 = vrot.lane.b32.xlu0 %v572, 120
        %v745 = vpop.permute.xlu0 %744
        %746 = vrot.lane.b32.xlu0 %v541, 120
        %v747 = vpop.permute.xlu0 %746
        %748 = vrot.lane.b32.xlu0 %v573, 120
        %v749 = vpop.permute.xlu0 %748
        %vm782 = vcmask 490496
        %v783 = vsel %vm782, %v477, %v575
        %v784 = vsel %vm782, %v399, %v577
        %v785 = vsel %vm782, %v478, %v579
        %v786 = vsel %vm782, %v402, %v581
        %v787 = vsel %vm782, %v479, %v583
        %v788 = vsel %vm782, %v405, %v585
        %v789 = vsel %vm782, %v480, %v587
        %v790 = vsel %vm782, %v408, %v589
        %v791 = vsel %vm782, %v481, %v591
        %v792 = vsel %vm782, %v411, %v593
        %v793 = vsel %vm782, %v482, %v595
        %v794 = vsel %vm782, %v414, %v597
        %v795 = vsel %vm782, %v483, %v599
        %v796 = vsel %vm782, %v417, %v601
        %v797 = vsel %vm782, %v484, %v603
        %v798 = vsel %vm782, %v420, %v605
        %v799 = vsel %vm782, %v485, %v607
        %v800 = vsel %vm782, %v423, %v609
        %v801 = vsel %vm782, %v486, %v611
        %v802 = vsel %vm782, %v426, %v613
        %v803 = vsel %vm782, %v487, %v615
        %v804 = vsel %vm782, %v429, %v617
        %v805 = vsel %vm782, %v488, %v619
        %v806 = vsel %vm782, %v432, %v621
        %v807 = vsel %vm782, %v489, %v623
        %v808 = vsel %vm782, %v435, %v625
        %v809 = vsel %vm782, %v490, %v627
        %v810 = vsel %vm782, %v438, %v629
        %v811 = vsel %vm782, %v491, %v631
        %v812 = vsel %vm782, %v441, %v633
        %v813 = vsel %vm782, %v492, %v635
        %v814 = vsel %vm782, %v444, %v637
        %vm815 = vcmask 982016
        %v816 = vsel %vm815, %v783, %v687
        %v817 = vsel %vm815, %v784, %v689
        %v818 = vsel %vm815, %v785, %v691
        %v819 = vsel %vm815, %v786, %v693
        %v820 = vsel %vm815, %v787, %v695
        %v821 = vsel %vm815, %v788, %v697
        %v822 = vsel %vm815, %v789, %v699
        %v823 = vsel %vm815, %v790, %v701
        %v824 = vsel %vm815, %v791, %v703
        %v825 = vsel %vm815, %v792, %v705
        %v826 = vsel %vm815, %v793, %v707
        %v827 = vsel %vm815, %v794, %v709
        %v828 = vsel %vm815, %v795, %v711
        %v829 = vsel %vm815, %v796, %v713
        %v830 = vsel %vm815, %v797, %v715
        %v831 = vsel %vm815, %v798, %v717
        %v832 = vsel %vm815, %v799, %v719
        %v833 = vsel %vm815, %v800, %v721
        %v834 = vsel %vm815, %v801, %v723
        %v835 = vsel %vm815, %v802, %v725
        %v836 = vsel %vm815, %v803, %v727
        %v837 = vsel %vm815, %v804, %v729
        %v838 = vsel %vm815, %v805, %v731
        %v839 = vsel %vm815, %v806, %v733
        %v840 = vsel %vm815, %v807, %v735
        %v841 = vsel %vm815, %v808, %v737
        %v842 = vsel %vm815, %v809, %v739
        %v843 = vsel %vm815, %v810, %v741
        %v844 = vsel %vm815, %v811, %v743
        %v845 = vsel %vm815, %v812, %v745
        %v846 = vsel %vm815, %v813, %v747
        %v847 = vsel %vm815, %v814, %v749
        %v848 = vpack.c.bf16 0.0, 0.0
        %v849 = vpack.c.bf16 %v687, %v816
        %v850 = vpack.c.bf16 %v689, %v817
        %v851 = vpack.c.bf16 %v691, %v818
        %v852 = vpack.c.bf16 %v693, %v819
        %v853 = vpack.c.bf16 %v695, %v820
        %v854 = vpack.c.bf16 %v697, %v821
        %v855 = vpack.c.bf16 %v699, %v822
        %v856 = vpack.c.bf16 %v701, %v823
        %v857 = vpack.c.bf16 %v703, %v824
        %v858 = vpack.c.bf16 %v705, %v825
        %v859 = vpack.c.bf16 %v707, %v826
        %v860 = vpack.c.bf16 %v709, %v827
        %v861 = vpack.c.bf16 %v711, %v828
        %v862 = vpack.c.bf16 %v713, %v829
        %v863 = vpack.c.bf16 %v715, %v830
        %v864 = vpack.c.bf16 %v717, %v831
        %v865 = vpack.c.bf16 %v719, %v832
        %v866 = vpack.c.bf16 %v721, %v833
        %v867 = vpack.c.bf16 %v723, %v834
        %v868 = vpack.c.bf16 %v725, %v835
        %v869 = vpack.c.bf16 %v727, %v836
        %v870 = vpack.c.bf16 %v729, %v837
        %v871 = vpack.c.bf16 %v731, %v838
        %v872 = vpack.c.bf16 %v733, %v839
        %v873 = vpack.c.bf16 %v735, %v840
        %v874 = vpack.c.bf16 %v737, %v841
        %v875 = vpack.c.bf16 %v739, %v842
        %v876 = vpack.c.bf16 %v741, %v843
        %v877 = vpack.c.bf16 %v743, %v844
        %v878 = vpack.c.bf16 %v745, %v845
        %v879 = vpack.c.bf16 %v747, %v846
        %v880 = vpack.c.bf16 %v749, %v847
        %v881 = vld [vmem:[%s1] sm:$0xf]
        %v882 = vld [vmem:[%s1 + $0x4] sm:$0xf]
        %v883 = vld [vmem:[%s1 + $0x8] sm:$0xf]
        %v884 = vld [vmem:[%s1 + $0xc] sm:$0xf]
        %v885 = vld [vmem:[%s1 + $0x10] sm:$0xf]
        %v886 = vld [vmem:[%s1 + $0x14] sm:$0xf]
        %v887 = vld [vmem:[%s1 + $0x18] sm:$0xf]
        %v888 = vld [vmem:[%s1 + $0x1c] sm:$0xf]
        %v889 = vld [vmem:[%s1 + $0x20] sm:$0xf]
        %v890 = vld [vmem:[%s1 + $0x24] sm:$0xf]
        %v891 = vld [vmem:[%s1 + $0x28] sm:$0xf]
        %v892 = vld [vmem:[%s1 + $0x2c] sm:$0xf]
        %v893 = vld [vmem:[%s1 + $0x30] sm:$0xf]
        %v894 = vld [vmem:[%s1 + $0x34] sm:$0xf]
        %v895 = vld [vmem:[%s1 + $0x38] sm:$0xf]
        %v896 = vld [vmem:[%s1 + $0x3c] sm:$0xf]
        %v897 = vld [vmem:[%s1 + $0x40] sm:$0xf]
        %v898 = vld [vmem:[%s1 + $0x44] sm:$0xf]
        %v899 = vld [vmem:[%s1 + $0x48] sm:$0xf]
        %v900 = vld [vmem:[%s1 + $0x4c] sm:$0xf]
        %v901 = vld [vmem:[%s1 + $0x50] sm:$0xf]
        %v902 = vld [vmem:[%s1 + $0x54] sm:$0xf]
        %v903 = vld [vmem:[%s1 + $0x58] sm:$0x3]
        %s904 = scalar_lea.vmem %s1, 92
        %v905 = vld [vmem:[%s904] sm:$0xf]
        %v906 = vld [vmem:[%s904 + $0x4] sm:$0xf]
        %v907 = vld [vmem:[%s904 + $0x8] sm:$0xf]
        %v908 = vld [vmem:[%s904 + $0xc] sm:$0xf]
        %v909 = vld [vmem:[%s904 + $0x10] sm:$0xf]
        %v910 = vld [vmem:[%s904 + $0x14] sm:$0xf]
        %v911 = vld [vmem:[%s904 + $0x18] sm:$0xf]
        %v912 = vld [vmem:[%s904 + $0x1c] sm:$0xf]
        %v913 = vld [vmem:[%s904 + $0x20] sm:$0xf]
        %v914 = vld [vmem:[%s904 + $0x24] sm:$0xf]
        %v915 = vld [vmem:[%s904 + $0x28] sm:$0xf]
        %v916 = vld [vmem:[%s904 + $0x2c] sm:$0xf]
        %v917 = vld [vmem:[%s904 + $0x30] sm:$0xf]
        %v918 = vld [vmem:[%s904 + $0x34] sm:$0xf]
        %v919 = vld [vmem:[%s904 + $0x38] sm:$0xf]
        %v920 = vld [vmem:[%s904 + $0x3c] sm:$0xf]
        %v921 = vld [vmem:[%s904 + $0x40] sm:$0xf]
        %v922 = vld [vmem:[%s904 + $0x44] sm:$0xf]
        %v923 = vld [vmem:[%s904 + $0x48] sm:$0xf]
        %v924 = vld [vmem:[%s904 + $0x4c] sm:$0xf]
        %v925 = vld [vmem:[%s904 + $0x50] sm:$0xf]
        %v926 = vld [vmem:[%s904 + $0x54] sm:$0xf]
        %v927 = vld [vmem:[%s904 + $0x58] sm:$0x3]
        %v960 = vunpack.c.l.b16 %v849
        %v961 = vunpack.c.h.b16 %v849
        %v962 = vunpack.c.l.b16 %v850
        %v963 = vunpack.c.h.b16 %v850
        %v964 = vunpack.c.l.b16 %v851
        %v965 = vunpack.c.h.b16 %v851
        %v966 = vunpack.c.l.b16 %v852
        %v967 = vunpack.c.h.b16 %v852
        %v968 = vunpack.c.l.b16 %v853
        %v969 = vunpack.c.h.b16 %v853
        %v970 = vunpack.c.l.b16 %v854
        %v971 = vunpack.c.h.b16 %v854
        %v972 = vunpack.c.l.b16 %v855
        %v973 = vunpack.c.h.b16 %v855
        %v974 = vunpack.c.l.b16 %v856
        %v975 = vunpack.c.h.b16 %v856
        %v976 = vunpack.c.l.b16 %v857
        %v977 = vunpack.c.h.b16 %v857
        %v978 = vunpack.c.l.b16 %v858
        %v979 = vunpack.c.h.b16 %v858
        %v980 = vunpack.c.l.b16 %v859
        %v981 = vunpack.c.h.b16 %v859
        %v982 = vunpack.c.l.b16 %v860
        %v983 = vunpack.c.h.b16 %v860
        %v984 = vunpack.c.l.b16 %v861
        %v985 = vunpack.c.h.b16 %v861
        %v986 = vunpack.c.l.b16 %v862
        %v987 = vunpack.c.h.b16 %v862
        %v988 = vunpack.c.l.b16 %v863
        %v989 = vunpack.c.h.b16 %v863
        %v990 = vunpack.c.l.b16 %v864
        %v991 = vunpack.c.h.b16 %v864
        %v992 = vunpack.c.l.b16 %v865
        %v993 = vunpack.c.h.b16 %v865
        %v994 = vunpack.c.l.b16 %v866
        %v995 = vunpack.c.h.b16 %v866
        %v996 = vunpack.c.l.b16 %v867
        %v997 = vunpack.c.h.b16 %v867
        %v998 = vunpack.c.l.b16 %v868
        %v999 = vunpack.c.h.b16 %v868
        %v1000 = vunpack.c.l.b16 %v869
        %v1001 = vunpack.c.h.b16 %v869
        %v1002 = vunpack.c.l.b16 %v870
        %v1003 = vunpack.c.h.b16 %v870
        %v1004 = vunpack.c.l.b16 %v871
        %v1005 = vunpack.c.h.b16 %v871
        %v1006 = vunpack.c.l.b16 %v872
        %v1007 = vunpack.c.h.b16 %v872
        %v1008 = vunpack.c.l.b16 %v873
        %v1009 = vunpack.c.h.b16 %v873
        %v1010 = vunpack.c.l.b16 %v874
        %v1011 = vunpack.c.h.b16 %v874
        %v1012 = vunpack.c.l.b16 %v875
        %v1013 = vunpack.c.h.b16 %v875
        %v1014 = vunpack.c.l.b16 %v876
        %v1015 = vunpack.c.h.b16 %v876
        %v1016 = vunpack.c.l.b16 %v877
        %v1017 = vunpack.c.h.b16 %v877
        %v1018 = vunpack.c.l.b16 %v878
        %v1019 = vunpack.c.h.b16 %v878
        %v1020 = vunpack.c.l.b16 %v879
        %v1021 = vunpack.c.h.b16 %v879
        %v1022 = vunpack.c.l.b16 %v880
        %v1023 = vunpack.c.h.b16 %v880
        %v1024 = vpack.c.b16 %v962, %v960
        %v1025 = vpack.c.b16 %v963, %v961
        %v1026 = vpack.c.b16 %v966, %v964
        %v1027 = vpack.c.b16 %v967, %v965
        %v1028 = vpack.c.b16 %v970, %v968
        %v1029 = vpack.c.b16 %v971, %v969
        %v1030 = vpack.c.b16 %v974, %v972
        %v1031 = vpack.c.b16 %v975, %v973
        %v1032 = vpack.c.b16 %v978, %v976
        %v1033 = vpack.c.b16 %v979, %v977
        %v1034 = vpack.c.b16 %v982, %v980
        %v1035 = vpack.c.b16 %v983, %v981
        %v1036 = vpack.c.b16 %v986, %v984
        %v1037 = vpack.c.b16 %v987, %v985
        %v1038 = vpack.c.b16 %v990, %v988
        %v1039 = vpack.c.b16 %v991, %v989
        %v1040 = vpack.c.b16 %v994, %v992
        %v1041 = vpack.c.b16 %v995, %v993
        %v1042 = vpack.c.b16 %v998, %v996
        %v1043 = vpack.c.b16 %v999, %v997
        %v1044 = vpack.c.b16 %v1002, %v1000
        %v1045 = vpack.c.b16 %v1003, %v1001
        %v1046 = vpack.c.b16 %v1006, %v1004
        %v1047 = vpack.c.b16 %v1007, %v1005
        %v1048 = vpack.c.b16 %v1010, %v1008
        %v1049 = vpack.c.b16 %v1011, %v1009
        %v1050 = vpack.c.b16 %v1014, %v1012
        %v1051 = vpack.c.b16 %v1015, %v1013
        %v1052 = vpack.c.b16 %v1018, %v1016
        %v1053 = vpack.c.b16 %v1019, %v1017
        %v1054 = vpack.c.b16 %v1022, %v1020
        %v1055 = vpack.c.b16 %v1023, %v1021
        %v1095 = vunpack.c.l.b16 %v905
        %v1096 = vunpack.c.l.b16 %v906
        %v1097 = vunpack.c.l.b16 %v907
        %v1098 = vunpack.c.l.b16 %v908
        %v1099 = vunpack.c.l.b16 %v909
        %v1100 = vunpack.c.l.b16 %v910
        %v1101 = vunpack.c.l.b16 %v911
        %v1102 = vunpack.c.l.b16 %v912
        %v1103 = vunpack.c.l.b16 %v913
        %v1104 = vunpack.c.l.b16 %v914
        %v1105 = vunpack.c.l.b16 %v915
        %v1106 = vunpack.c.l.b16 %v916
        %v1107 = vunpack.c.l.b16 %v917
        %v1108 = vunpack.c.l.b16 %v918
        %v1109 = vunpack.c.l.b16 %v919
        %v1110 = vunpack.c.l.b16 %v920
        %v1111 = vunpack.c.l.b16 %v921
        %v1112 = vunpack.c.l.b16 %v922
        %v1113 = vunpack.c.l.b16 %v923
        %v1114 = vunpack.c.l.b16 %v924
        %v1115 = vunpack.c.l.b16 %v925
        %v1116 = vunpack.c.l.b16 %v926
        %v1117 = vunpack.c.l.b16 %v927
        %v1118 = vpack.c.b16 %v1096, %v1095
        %v1119 = vpack.c.b16 %v1098, %v1097
        %v1120 = vpack.c.b16 %v1100, %v1099
        %v1121 = vpack.c.b16 %v1102, %v1101
        %v1122 = vpack.c.b16 %v1104, %v1103
        %v1123 = vpack.c.b16 %v1106, %v1105
        %v1124 = vpack.c.b16 %v1108, %v1107
        %v1125 = vpack.c.b16 %v1110, %v1109
        %v1126 = vpack.c.b16 %v1112, %v1111
        %v1127 = vpack.c.b16 %v1114, %v1113
        %v1128 = vpack.c.b16 %v1116, %v1115
        %v1129 = vpack.c.b16 %v1117, %v1117
        %vm1141 = vcmask 424960
        %v1143 = vsel %vm1141, %v1025, 0
        %v1146 = vsel %vm1141, %v1027, 0
        %v1149 = vsel %vm1141, %v1029, 0
        %v1152 = vsel %vm1141, %v1031, 0
        %v1155 = vsel %vm1141, %v1033, 0
        %v1158 = vsel %vm1141, %v1035, 0
        %v1161 = vsel %vm1141, %v1037, 0
        %v1164 = vsel %vm1141, %v1039, 0
        %v1167 = vsel %vm1141, %v1041, 0
        %v1170 = vsel %vm1141, %v1043, 0
        %v1173 = vsel %vm1141, %v1045, 0
        %v1176 = vsel %vm1141, %v1047, 0
        %v1179 = vsel %vm1141, %v1049, 0
        %v1182 = vsel %vm1141, %v1051, 0
        %v1185 = vsel %vm1141, %v1053, 0
        %v1188 = vsel %vm1141, %v1055, 0
        %vm1190 = vcmask 1041408
        %v1192 = vsel %vm1190, %v1129, 0
        %1194 = vmatpush.bf16.msra.mxu0 %v1125
        %1195 = vmatpush.bf16.msra.mxu0 %v1124
        %1196 = vmatpush.bf16.msra.mxu0 %v1123
        %1197 = vmatpush.bf16.msra.mxu0 %v1122
        %1198 = vmatpush.bf16.msra.mxu0 %v1121
        %1199 = vmatpush.bf16.msra.mxu0 %v1120
        %1200 = vmatpush.bf16.msra.mxu0 %v1119
        %1201 = vmatpush.bf16.msra.mxu0 %v1118
        %1202 = vmatmul.bf16.gmra.mxu0 %v1024
        %v1203 = vpop.f32.mrf.mxu0
        %v1204 = vadd.f32 0.0, %v1203
        %v1205 = vpop.f32.mrf.mxu0
        %v1206 = vadd.f32 0.0, %v1205
        %1207 = vmatmul.bf16.gmra.mxu0 %v1026
        %v1208 = vpop.f32.mrf.mxu0
        %v1209 = vadd.f32 0.0, %v1208
        %v1210 = vpop.f32.mrf.mxu0
        %v1211 = vadd.f32 0.0, %v1210
        %1212 = vmatmul.bf16.gmra.mxu0 %v1028
        %v1213 = vpop.f32.mrf.mxu0
        %v1214 = vadd.f32 0.0, %v1213
        %v1215 = vpop.f32.mrf.mxu0
        %v1216 = vadd.f32 0.0, %v1215
        %1217 = vmatmul.bf16.gmra.mxu0 %v1030
        %v1218 = vpop.f32.mrf.mxu0
        %v1219 = vadd.f32 0.0, %v1218
        %v1220 = vpop.f32.mrf.mxu0
        %v1221 = vadd.f32 0.0, %v1220
        %1222 = vmatmul.bf16.gmra.mxu0 %v1032
        %v1223 = vpop.f32.mrf.mxu0
        %v1224 = vadd.f32 0.0, %v1223
        %v1225 = vpop.f32.mrf.mxu0
        %v1226 = vadd.f32 0.0, %v1225
        %1227 = vmatmul.bf16.gmra.mxu0 %v1034
        %v1228 = vpop.f32.mrf.mxu0
        %v1229 = vadd.f32 0.0, %v1228
        %v1230 = vpop.f32.mrf.mxu0
        %v1231 = vadd.f32 0.0, %v1230
        %1232 = vmatmul.bf16.gmra.mxu0 %v1036
        %v1233 = vpop.f32.mrf.mxu0
        %v1234 = vadd.f32 0.0, %v1233
        %v1235 = vpop.f32.mrf.mxu0
        %v1236 = vadd.f32 0.0, %v1235
        %1237 = vmatmul.bf16.gmra.mxu0 %v1038
        %v1238 = vpop.f32.mrf.mxu0
        %v1239 = vadd.f32 0.0, %v1238
        %v1240 = vpop.f32.mrf.mxu0
        %v1241 = vadd.f32 0.0, %v1240
        %1242 = vmatmul.bf16.gmra.mxu0 %v1040
        %v1243 = vpop.f32.mrf.mxu0
        %v1244 = vadd.f32 0.0, %v1243
        %v1245 = vpop.f32.mrf.mxu0
        %v1246 = vadd.f32 0.0, %v1245
        %1247 = vmatmul.bf16.gmra.mxu0 %v1042
        %v1248 = vpop.f32.mrf.mxu0
        %v1249 = vadd.f32 0.0, %v1248
        %v1250 = vpop.f32.mrf.mxu0
        %v1251 = vadd.f32 0.0, %v1250
        %1252 = vmatmul.bf16.gmra.mxu0 %v1044
        %v1253 = vpop.f32.mrf.mxu0
        %v1254 = vadd.f32 0.0, %v1253
        %v1255 = vpop.f32.mrf.mxu0
        %v1256 = vadd.f32 0.0, %v1255
        %1257 = vmatmul.bf16.gmra.mxu0 %v1046
        %v1258 = vpop.f32.mrf.mxu0
        %v1259 = vadd.f32 0.0, %v1258
        %v1260 = vpop.f32.mrf.mxu0
        %v1261 = vadd.f32 0.0, %v1260
        %1262 = vmatmul.bf16.gmra.mxu0 %v1048
        %v1263 = vpop.f32.mrf.mxu0
        %v1264 = vadd.f32 0.0, %v1263
        %v1265 = vpop.f32.mrf.mxu0
        %v1266 = vadd.f32 0.0, %v1265
        %1267 = vmatmul.bf16.gmra.mxu0 %v1050
        %v1268 = vpop.f32.mrf.mxu0
        %v1269 = vadd.f32 0.0, %v1268
        %v1270 = vpop.f32.mrf.mxu0
        %v1271 = vadd.f32 0.0, %v1270
        %1272 = vmatmul.bf16.gmra.mxu0 %v1052
        %v1273 = vpop.f32.mrf.mxu0
        %v1274 = vadd.f32 0.0, %v1273
        %v1275 = vpop.f32.mrf.mxu0
        %v1276 = vadd.f32 0.0, %v1275
        %1277 = vmatmul.bf16.gmra.mxu0 %v1054
        %v1278 = vpop.f32.mrf.mxu0
        %v1279 = vadd.f32 0.0, %v1278
        %v1280 = vpop.f32.mrf.mxu0
        %v1281 = vadd.f32 0.0, %v1280
        %1282 = vdwg.mxu0
        %1283 = vmatpush.bf16.msra.mxu0 0
        %1284 = vmatpush.bf16.msra.mxu0 0
        %1285 = vmatpush.bf16.msra.mxu0 0
        %1286 = vmatpush.bf16.msra.mxu0 0
        %1287 = vmatpush.bf16.msra.mxu0 %v1192
        %1288 = vmatpush.bf16.msra.mxu0 %v1128
        %1289 = vmatpush.bf16.msra.mxu0 %v1127
        %1290 = vmatpush.bf16.msra.mxu0 %v1126
        %1291 = vmatmul.bf16.gmra.mxu0 %v1143
        %v1292 = vpop.f32.mrf.mxu0
        %v1293 = vadd.f32 %v1204, %v1292
        %v1294 = vpop.f32.mrf.mxu0
        %v1295 = vadd.f32 %v1206, %v1294
        %1296 = vmatmul.bf16.gmra.mxu0 %v1146
        %v1297 = vpop.f32.mrf.mxu0
        %v1298 = vadd.f32 %v1209, %v1297
        %v1299 = vpop.f32.mrf.mxu0
        %v1300 = vadd.f32 %v1211, %v1299
        %1301 = vmatmul.bf16.gmra.mxu0 %v1149
        %v1302 = vpop.f32.mrf.mxu0
        %v1303 = vadd.f32 %v1214, %v1302
        %v1304 = vpop.f32.mrf.mxu0
        %v1305 = vadd.f32 %v1216, %v1304
        %1306 = vmatmul.bf16.gmra.mxu0 %v1152
        %v1307 = vpop.f32.mrf.mxu0
        %v1308 = vadd.f32 %v1219, %v1307
        %v1309 = vpop.f32.mrf.mxu0
        %v1310 = vadd.f32 %v1221, %v1309
        %1311 = vmatmul.bf16.gmra.mxu0 %v1155
        %v1312 = vpop.f32.mrf.mxu0
        %v1313 = vadd.f32 %v1224, %v1312
        %v1314 = vpop.f32.mrf.mxu0
        %v1315 = vadd.f32 %v1226, %v1314
        %1316 = vmatmul.bf16.gmra.mxu0 %v1158
        %v1317 = vpop.f32.mrf.mxu0
        %v1318 = vadd.f32 %v1229, %v1317
        %v1319 = vpop.f32.mrf.mxu0
        %v1320 = vadd.f32 %v1231, %v1319
        %1321 = vmatmul.bf16.gmra.mxu0 %v1161
        %v1322 = vpop.f32.mrf.mxu0
        %v1323 = vadd.f32 %v1234, %v1322
        %v1324 = vpop.f32.mrf.mxu0
        %v1325 = vadd.f32 %v1236, %v1324
        %1326 = vmatmul.bf16.gmra.mxu0 %v1164
        %v1327 = vpop.f32.mrf.mxu0
        %v1328 = vadd.f32 %v1239, %v1327
        %v1329 = vpop.f32.mrf.mxu0
        %v1330 = vadd.f32 %v1241, %v1329
        %1331 = vmatmul.bf16.gmra.mxu0 %v1167
        %v1332 = vpop.f32.mrf.mxu0
        %v1333 = vadd.f32 %v1244, %v1332
        %v1334 = vpop.f32.mrf.mxu0
        %v1335 = vadd.f32 %v1246, %v1334
        %1336 = vmatmul.bf16.gmra.mxu0 %v1170
        %v1337 = vpop.f32.mrf.mxu0
        %v1338 = vadd.f32 %v1249, %v1337
        %v1339 = vpop.f32.mrf.mxu0
        %v1340 = vadd.f32 %v1251, %v1339
        %1341 = vmatmul.bf16.gmra.mxu0 %v1173
        %v1342 = vpop.f32.mrf.mxu0
        %v1343 = vadd.f32 %v1254, %v1342
        %v1344 = vpop.f32.mrf.mxu0
        %v1345 = vadd.f32 %v1256, %v1344
        %1346 = vmatmul.bf16.gmra.mxu0 %v1176
        %v1347 = vpop.f32.mrf.mxu0
        %v1348 = vadd.f32 %v1259, %v1347
        %v1349 = vpop.f32.mrf.mxu0
        %v1350 = vadd.f32 %v1261, %v1349
        %1351 = vmatmul.bf16.gmra.mxu0 %v1179
        %v1352 = vpop.f32.mrf.mxu0
        %v1353 = vadd.f32 %v1264, %v1352
        %v1354 = vpop.f32.mrf.mxu0
        %v1355 = vadd.f32 %v1266, %v1354
        %1356 = vmatmul.bf16.gmra.mxu0 %v1182
        %v1357 = vpop.f32.mrf.mxu0
        %v1358 = vadd.f32 %v1269, %v1357
        %v1359 = vpop.f32.mrf.mxu0
        %v1360 = vadd.f32 %v1271, %v1359
        %1361 = vmatmul.bf16.gmra.mxu0 %v1185
        %v1362 = vpop.f32.mrf.mxu0
        %v1363 = vadd.f32 %v1274, %v1362
        %v1364 = vpop.f32.mrf.mxu0
        %v1365 = vadd.f32 %v1276, %v1364
        %1366 = vmatmul.bf16.gmra.mxu0 %v1188
        %v1367 = vpop.f32.mrf.mxu0
        %v1368 = vadd.f32 %v1279, %v1367
        %v1369 = vpop.f32.mrf.mxu0
        %v1370 = vadd.f32 %v1281, %v1369
        %1371 = vdwg.mxu0
        %v1373 = vunpack.c.l.b16 %v848
        %v1374 = vunpack.c.h.b16 %v848
        %v1375 = vpack.c.b16 %v1373, %v1373
        %v1376 = vpack.c.b16 %v1374, %v1374
        %v1401 = vunpack.c.l.b16 %v881
        %v1402 = vunpack.c.l.b16 %v882
        %v1403 = vunpack.c.l.b16 %v883
        %v1404 = vunpack.c.l.b16 %v884
        %v1405 = vunpack.c.l.b16 %v885
        %v1406 = vunpack.c.l.b16 %v886
        %v1407 = vunpack.c.l.b16 %v887
        %v1408 = vunpack.c.l.b16 %v888
        %v1409 = vunpack.c.l.b16 %v889
        %v1410 = vunpack.c.l.b16 %v890
        %v1411 = vunpack.c.l.b16 %v891
        %v1412 = vunpack.c.l.b16 %v892
        %v1413 = vunpack.c.l.b16 %v893
        %v1414 = vunpack.c.l.b16 %v894
        %v1415 = vunpack.c.l.b16 %v895
        %v1416 = vunpack.c.l.b16 %v896
        %v1417 = vunpack.c.l.b16 %v897
        %v1418 = vunpack.c.l.b16 %v898
        %v1419 = vunpack.c.l.b16 %v899
        %v1420 = vunpack.c.l.b16 %v900
        %v1421 = vunpack.c.l.b16 %v901
        %v1422 = vunpack.c.l.b16 %v902
        %v1423 = vunpack.c.l.b16 %v903
        %v1424 = vpack.c.b16 %v1402, %v1401
        %v1425 = vpack.c.b16 %v1404, %v1403
        %v1426 = vpack.c.b16 %v1406, %v1405
        %v1427 = vpack.c.b16 %v1408, %v1407
        %v1428 = vpack.c.b16 %v1410, %v1409
        %v1429 = vpack.c.b16 %v1412, %v1411
        %v1430 = vpack.c.b16 %v1414, %v1413
        %v1431 = vpack.c.b16 %v1416, %v1415
        %v1432 = vpack.c.b16 %v1418, %v1417
        %v1433 = vpack.c.b16 %v1420, %v1419
        %v1434 = vpack.c.b16 %v1422, %v1421
        %v1435 = vpack.c.b16 %v1423, %v1423
        %v1448 = vsel %vm1141, %v1376, 0
        %v1451 = vsel %vm1190, %v1435, 0
        %1453 = vmatpush.bf16.msra.mxu0 %v1431
        %1454 = vmatpush.bf16.msra.mxu0 %v1430
        %1455 = vmatpush.bf16.msra.mxu0 %v1429
        %1456 = vmatpush.bf16.msra.mxu0 %v1428
        %1457 = vmatpush.bf16.msra.mxu0 %v1427
        %1458 = vmatpush.bf16.msra.mxu0 %v1426
        %1459 = vmatpush.bf16.msra.mxu0 %v1425
        %1460 = vmatpush.bf16.msra.mxu0 %v1424
        %1461 = vmatmul.bf16.gmra.mxu0 %v1375
        %v1462 = vpop.f32.mrf.mxu0
        %v1463 = vadd.f32 %v1293, %v1462
        %v1464 = vpop.f32.mrf.mxu0
        %v1465 = vadd.f32 %v1295, %v1464
        %1466 = vmatmul.bf16.gmra.mxu0 %v1024
        %v1467 = vpop.f32.mrf.mxu0
        %v1468 = vadd.f32 %v1298, %v1467
        %v1469 = vpop.f32.mrf.mxu0
        %v1470 = vadd.f32 %v1300, %v1469
        %1471 = vmatmul.bf16.gmra.mxu0 %v1026
        %v1472 = vpop.f32.mrf.mxu0
        %v1473 = vadd.f32 %v1303, %v1472
        %v1474 = vpop.f32.mrf.mxu0
        %v1475 = vadd.f32 %v1305, %v1474
        %1476 = vmatmul.bf16.gmra.mxu0 %v1028
        %v1477 = vpop.f32.mrf.mxu0
        %v1478 = vadd.f32 %v1308, %v1477
        %v1479 = vpop.f32.mrf.mxu0
        %v1480 = vadd.f32 %v1310, %v1479
        %1481 = vmatmul.bf16.gmra.mxu0 %v1030
        %v1482 = vpop.f32.mrf.mxu0
        %v1483 = vadd.f32 %v1313, %v1482
        %v1484 = vpop.f32.mrf.mxu0
        %v1485 = vadd.f32 %v1315, %v1484
        %1486 = vmatmul.bf16.gmra.mxu0 %v1032
        %v1487 = vpop.f32.mrf.mxu0
        %v1488 = vadd.f32 %v1318, %v1487
        %v1489 = vpop.f32.mrf.mxu0
        %v1490 = vadd.f32 %v1320, %v1489
        %1491 = vmatmul.bf16.gmra.mxu0 %v1034
        %v1492 = vpop.f32.mrf.mxu0
        %v1493 = vadd.f32 %v1323, %v1492
        %v1494 = vpop.f32.mrf.mxu0
        %v1495 = vadd.f32 %v1325, %v1494
        %1496 = vmatmul.bf16.gmra.mxu0 %v1036
        %v1497 = vpop.f32.mrf.mxu0
        %v1498 = vadd.f32 %v1328, %v1497
        %v1499 = vpop.f32.mrf.mxu0
        %v1500 = vadd.f32 %v1330, %v1499
        %1501 = vmatmul.bf16.gmra.mxu0 %v1038
        %v1502 = vpop.f32.mrf.mxu0
        %v1503 = vadd.f32 %v1333, %v1502
        %v1504 = vpop.f32.mrf.mxu0
        %v1505 = vadd.f32 %v1335, %v1504
        %1506 = vmatmul.bf16.gmra.mxu0 %v1040
        %v1507 = vpop.f32.mrf.mxu0
        %v1508 = vadd.f32 %v1338, %v1507
        %v1509 = vpop.f32.mrf.mxu0
        %v1510 = vadd.f32 %v1340, %v1509
        %1511 = vmatmul.bf16.gmra.mxu0 %v1042
        %v1512 = vpop.f32.mrf.mxu0
        %v1513 = vadd.f32 %v1343, %v1512
        %v1514 = vpop.f32.mrf.mxu0
        %v1515 = vadd.f32 %v1345, %v1514
        %1516 = vmatmul.bf16.gmra.mxu0 %v1044
        %v1517 = vpop.f32.mrf.mxu0
        %v1518 = vadd.f32 %v1348, %v1517
        %v1519 = vpop.f32.mrf.mxu0
        %v1520 = vadd.f32 %v1350, %v1519
        %1521 = vmatmul.bf16.gmra.mxu0 %v1046
        %v1522 = vpop.f32.mrf.mxu0
        %v1523 = vadd.f32 %v1353, %v1522
        %v1524 = vpop.f32.mrf.mxu0
        %v1525 = vadd.f32 %v1355, %v1524
        %1526 = vmatmul.bf16.gmra.mxu0 %v1048
        %v1527 = vpop.f32.mrf.mxu0
        %v1528 = vadd.f32 %v1358, %v1527
        %v1529 = vpop.f32.mrf.mxu0
        %v1530 = vadd.f32 %v1360, %v1529
        %1531 = vmatmul.bf16.gmra.mxu0 %v1050
        %v1532 = vpop.f32.mrf.mxu0
        %v1533 = vadd.f32 %v1363, %v1532
        %v1534 = vpop.f32.mrf.mxu0
        %v1535 = vadd.f32 %v1365, %v1534
        %1536 = vmatmul.bf16.gmra.mxu0 %v1052
        %v1537 = vpop.f32.mrf.mxu0
        %v1538 = vadd.f32 %v1368, %v1537
        %v1539 = vpop.f32.mrf.mxu0
        %v1540 = vadd.f32 %v1370, %v1539
        %1541 = vdwg.mxu0
        %1542 = vmatpush.bf16.msra.mxu0 0
        %1543 = vmatpush.bf16.msra.mxu0 0
        %1544 = vmatpush.bf16.msra.mxu0 0
        %1545 = vmatpush.bf16.msra.mxu0 0
        %1546 = vmatpush.bf16.msra.mxu0 %v1451
        %1547 = vmatpush.bf16.msra.mxu0 %v1434
        %1548 = vmatpush.bf16.msra.mxu0 %v1433
        %1549 = vmatpush.bf16.msra.mxu0 %v1432
        %1550 = vmatmul.bf16.gmra.mxu0 %v1448
        %v1551 = vpop.f32.mrf.mxu0
        %v1552 = vadd.f32 %v1463, %v1551
        %v1553 = vpop.f32.mrf.mxu0
        %v1554 = vadd.f32 %v1465, %v1553
        %1555 = vmatmul.bf16.gmra.mxu0 %v1143
        %v1556 = vpop.f32.mrf.mxu0
        %v1557 = vadd.f32 %v1468, %v1556
        %v1558 = vpop.f32.mrf.mxu0
        %v1559 = vadd.f32 %v1470, %v1558
        %1560 = vmatmul.bf16.gmra.mxu0 %v1146
        %v1561 = vpop.f32.mrf.mxu0
        %v1562 = vadd.f32 %v1473, %v1561
        %v1563 = vpop.f32.mrf.mxu0
        %v1564 = vadd.f32 %v1475, %v1563
        %1565 = vmatmul.bf16.gmra.mxu0 %v1149
        %v1566 = vpop.f32.mrf.mxu0
        %v1567 = vadd.f32 %v1478, %v1566
        %v1568 = vpop.f32.mrf.mxu0
        %v1569 = vadd.f32 %v1480, %v1568
        %1570 = vmatmul.bf16.gmra.mxu0 %v1152
        %v1571 = vpop.f32.mrf.mxu0
        %v1572 = vadd.f32 %v1483, %v1571
        %v1573 = vpop.f32.mrf.mxu0
        %v1574 = vadd.f32 %v1485, %v1573
        %1575 = vmatmul.bf16.gmra.mxu0 %v1155
        %v1576 = vpop.f32.mrf.mxu0
        %v1577 = vadd.f32 %v1488, %v1576
        %v1578 = vpop.f32.mrf.mxu0
        %v1579 = vadd.f32 %v1490, %v1578
        %1580 = vmatmul.bf16.gmra.mxu0 %v1158
        %v1581 = vpop.f32.mrf.mxu0
        %v1582 = vadd.f32 %v1493, %v1581
        %v1583 = vpop.f32.mrf.mxu0
        %v1584 = vadd.f32 %v1495, %v1583
        %1585 = vmatmul.bf16.gmra.mxu0 %v1161
        %v1586 = vpop.f32.mrf.mxu0
        %v1587 = vadd.f32 %v1498, %v1586
        %v1588 = vpop.f32.mrf.mxu0
        %v1589 = vadd.f32 %v1500, %v1588
        %1590 = vmatmul.bf16.gmra.mxu0 %v1164
        %v1591 = vpop.f32.mrf.mxu0
        %v1592 = vadd.f32 %v1503, %v1591
        %v1593 = vpop.f32.mrf.mxu0
        %v1594 = vadd.f32 %v1505, %v1593
        %1595 = vmatmul.bf16.gmra.mxu0 %v1167
        %v1596 = vpop.f32.mrf.mxu0
        %v1597 = vadd.f32 %v1508, %v1596
        %v1598 = vpop.f32.mrf.mxu0
        %v1599 = vadd.f32 %v1510, %v1598
        %1600 = vmatmul.bf16.gmra.mxu0 %v1170
        %v1601 = vpop.f32.mrf.mxu0
        %v1602 = vadd.f32 %v1513, %v1601
        %v1603 = vpop.f32.mrf.mxu0
        %v1604 = vadd.f32 %v1515, %v1603
        %1605 = vmatmul.bf16.gmra.mxu0 %v1173
        %v1606 = vpop.f32.mrf.mxu0
        %v1607 = vadd.f32 %v1518, %v1606
        %v1608 = vpop.f32.mrf.mxu0
        %v1609 = vadd.f32 %v1520, %v1608
        %1610 = vmatmul.bf16.gmra.mxu0 %v1176
        %v1611 = vpop.f32.mrf.mxu0
        %v1612 = vadd.f32 %v1523, %v1611
        %v1613 = vpop.f32.mrf.mxu0
        %v1614 = vadd.f32 %v1525, %v1613
        %1615 = vmatmul.bf16.gmra.mxu0 %v1179
        %v1616 = vpop.f32.mrf.mxu0
        %v1617 = vadd.f32 %v1528, %v1616
        %v1618 = vpop.f32.mrf.mxu0
        %v1619 = vadd.f32 %v1530, %v1618
        %1620 = vmatmul.bf16.gmra.mxu0 %v1182
        %v1621 = vpop.f32.mrf.mxu0
        %v1622 = vadd.f32 %v1533, %v1621
        %v1623 = vpop.f32.mrf.mxu0
        %v1624 = vadd.f32 %v1535, %v1623
        %1625 = vmatmul.bf16.gmra.mxu0 %v1185
        %v1626 = vpop.f32.mrf.mxu0
        %v1627 = vadd.f32 %v1538, %v1626
        %v1628 = vpop.f32.mrf.mxu0
        %v1629 = vadd.f32 %v1540, %v1628
        %1630 = vdwg.mxu0
        %s1631 = scalar_lea.vmem %s1, 184
        %v1632 = vld [vmem:[%s1631] sm:$0xf]
        %v1633 = vld [vmem:[%s1631 + $0x4] sm:$0xf]
        %v1634 = vld [vmem:[%s1631 + $0x8] sm:$0xf]
        %v1635 = vld [vmem:[%s1631 + $0xc] sm:$0xf]
        %v1636 = vld [vmem:[%s1631 + $0x10] sm:$0xf]
        %v1637 = vld [vmem:[%s1631 + $0x14] sm:$0xf]
        %v1638 = vld [vmem:[%s1631 + $0x18] sm:$0xf]
        %v1639 = vld [vmem:[%s1631 + $0x1c] sm:$0xf]
        %v1640 = vld [vmem:[%s1631 + $0x20] sm:$0xf]
        %v1641 = vld [vmem:[%s1631 + $0x24] sm:$0xf]
        %v1642 = vld [vmem:[%s1631 + $0x28] sm:$0xf]
        %v1643 = vld [vmem:[%s1631 + $0x2c] sm:$0xf]
        %v1644 = vld [vmem:[%s1631 + $0x30] sm:$0xf]
        %v1645 = vld [vmem:[%s1631 + $0x34] sm:$0xf]
        %v1646 = vld [vmem:[%s1631 + $0x38] sm:$0xf]
        %v1647 = vld [vmem:[%s1631 + $0x3c] sm:$0xf]
        %v1648 = vld [vmem:[%s1631 + $0x40] sm:$0xf]
        %v1649 = vld [vmem:[%s1631 + $0x44] sm:$0xf]
        %v1650 = vld [vmem:[%s1631 + $0x48] sm:$0xf]
        %v1651 = vld [vmem:[%s1631 + $0x4c] sm:$0xf]
        %v1652 = vld [vmem:[%s1631 + $0x50] sm:$0xf]
        %v1653 = vld [vmem:[%s1631 + $0x54] sm:$0xf]
        %v1654 = vld [vmem:[%s1631 + $0x58] sm:$0x3]
        %v1678 = vunpack.c.l.b16 %v1632
        %v1679 = vunpack.c.l.b16 %v1633
        %v1680 = vunpack.c.l.b16 %v1634
        %v1681 = vunpack.c.l.b16 %v1635
        %v1682 = vunpack.c.l.b16 %v1636
        %v1683 = vunpack.c.l.b16 %v1637
        %v1684 = vunpack.c.l.b16 %v1638
        %v1685 = vunpack.c.l.b16 %v1639
        %v1686 = vunpack.c.l.b16 %v1640
        %v1687 = vunpack.c.l.b16 %v1641
        %v1688 = vunpack.c.l.b16 %v1642
        %v1689 = vunpack.c.l.b16 %v1643
        %v1690 = vunpack.c.l.b16 %v1644
        %v1691 = vunpack.c.l.b16 %v1645
        %v1692 = vunpack.c.l.b16 %v1646
        %v1693 = vunpack.c.l.b16 %v1647
        %v1694 = vunpack.c.l.b16 %v1648
        %v1695 = vunpack.c.l.b16 %v1649
        %v1696 = vunpack.c.l.b16 %v1650
        %v1697 = vunpack.c.l.b16 %v1651
        %v1698 = vunpack.c.l.b16 %v1652
        %v1699 = vunpack.c.l.b16 %v1653
        %v1700 = vunpack.c.l.b16 %v1654
        %v1701 = vpack.c.b16 %v1679, %v1678
        %v1702 = vpack.c.b16 %v1681, %v1680
        %v1703 = vpack.c.b16 %v1683, %v1682
        %v1704 = vpack.c.b16 %v1685, %v1684
        %v1705 = vpack.c.b16 %v1687, %v1686
        %v1706 = vpack.c.b16 %v1689, %v1688
        %v1707 = vpack.c.b16 %v1691, %v1690
        %v1708 = vpack.c.b16 %v1693, %v1692
        %v1709 = vpack.c.b16 %v1695, %v1694
        %v1710 = vpack.c.b16 %v1697, %v1696
        %v1711 = vpack.c.b16 %v1699, %v1698
        %v1712 = vpack.c.b16 %v1700, %v1700
        %v1725 = vsel %vm1190, %v1712, 0
        %1727 = vmatpush.bf16.msra.mxu0 %v1708
        %1728 = vmatpush.bf16.msra.mxu0 %v1707
        %1729 = vmatpush.bf16.msra.mxu0 %v1706
        %1730 = vmatpush.bf16.msra.mxu0 %v1705
        %1731 = vmatpush.bf16.msra.mxu0 %v1704
        %1732 = vmatpush.bf16.msra.mxu0 %v1703
        %1733 = vmatpush.bf16.msra.mxu0 %v1702
        %1734 = vmatpush.bf16.msra.mxu0 %v1701
        %1735 = vmatmul.bf16.gmra.mxu0 %v1026
        %v1736 = vpop.f32.mrf.mxu0
        %v1737 = vadd.f32 0.0, %v1736
        %v1738 = vpop.f32.mrf.mxu0
        %v1739 = vadd.f32 0.0, %v1738
        %1740 = vmatmul.bf16.gmra.mxu0 %v1028
        %v1741 = vpop.f32.mrf.mxu0
        %v1742 = vadd.f32 0.0, %v1741
        %v1743 = vpop.f32.mrf.mxu0
        %v1744 = vadd.f32 0.0, %v1743
        %1745 = vmatmul.bf16.gmra.mxu0 %v1030
        %v1746 = vpop.f32.mrf.mxu0
        %v1747 = vadd.f32 0.0, %v1746
        %v1748 = vpop.f32.mrf.mxu0
        %v1749 = vadd.f32 0.0, %v1748
        %1750 = vmatmul.bf16.gmra.mxu0 %v1032
        %v1751 = vpop.f32.mrf.mxu0
        %v1752 = vadd.f32 0.0, %v1751
        %v1753 = vpop.f32.mrf.mxu0
        %v1754 = vadd.f32 0.0, %v1753
        %1755 = vmatmul.bf16.gmra.mxu0 %v1034
        %v1756 = vpop.f32.mrf.mxu0
        %v1757 = vadd.f32 0.0, %v1756
        %v1758 = vpop.f32.mrf.mxu0
        %v1759 = vadd.f32 0.0, %v1758
        %1760 = vmatmul.bf16.gmra.mxu0 %v1036
        %v1761 = vpop.f32.mrf.mxu0
        %v1762 = vadd.f32 0.0, %v1761
        %v1763 = vpop.f32.mrf.mxu0
        %v1764 = vadd.f32 0.0, %v1763
        %1765 = vmatmul.bf16.gmra.mxu0 %v1038
        %v1766 = vpop.f32.mrf.mxu0
        %v1767 = vadd.f32 0.0, %v1766
        %v1768 = vpop.f32.mrf.mxu0
        %v1769 = vadd.f32 0.0, %v1768
        %1770 = vmatmul.bf16.gmra.mxu0 %v1040
        %v1771 = vpop.f32.mrf.mxu0
        %v1772 = vadd.f32 0.0, %v1771
        %v1773 = vpop.f32.mrf.mxu0
        %v1774 = vadd.f32 0.0, %v1773
        %1775 = vmatmul.bf16.gmra.mxu0 %v1042
        %v1776 = vpop.f32.mrf.mxu0
        %v1777 = vadd.f32 0.0, %v1776
        %v1778 = vpop.f32.mrf.mxu0
        %v1779 = vadd.f32 0.0, %v1778
        %1780 = vmatmul.bf16.gmra.mxu0 %v1044
        %v1781 = vpop.f32.mrf.mxu0
        %v1782 = vadd.f32 0.0, %v1781
        %v1783 = vpop.f32.mrf.mxu0
        %v1784 = vadd.f32 0.0, %v1783
        %1785 = vmatmul.bf16.gmra.mxu0 %v1046
        %v1786 = vpop.f32.mrf.mxu0
        %v1787 = vadd.f32 0.0, %v1786
        %v1788 = vpop.f32.mrf.mxu0
        %v1789 = vadd.f32 0.0, %v1788
        %1790 = vmatmul.bf16.gmra.mxu0 %v1048
        %v1791 = vpop.f32.mrf.mxu0
        %v1792 = vadd.f32 0.0, %v1791
        %v1793 = vpop.f32.mrf.mxu0
        %v1794 = vadd.f32 0.0, %v1793
        %1795 = vmatmul.bf16.gmra.mxu0 %v1050
        %v1796 = vpop.f32.mrf.mxu0
        %v1797 = vadd.f32 0.0, %v1796
        %v1798 = vpop.f32.mrf.mxu0
        %v1799 = vadd.f32 0.0, %v1798
        %1800 = vmatmul.bf16.gmra.mxu0 %v1052
        %v1801 = vpop.f32.mrf.mxu0
        %v1802 = vadd.f32 0.0, %v1801
        %v1803 = vpop.f32.mrf.mxu0
        %v1804 = vadd.f32 0.0, %v1803
        %1805 = vmatmul.bf16.gmra.mxu0 %v1054
        %v1806 = vpop.f32.mrf.mxu0
        %v1807 = vadd.f32 0.0, %v1806
        %v1808 = vpop.f32.mrf.mxu0
        %v1809 = vadd.f32 0.0, %v1808
        %1810 = vmatmul.bf16.gmra.mxu0 %v1375
        %v1811 = vpop.f32.mrf.mxu0
        %v1812 = vadd.f32 0.0, %v1811
        %v1813 = vpop.f32.mrf.mxu0
        %v1814 = vadd.f32 0.0, %v1813
        %1815 = vdwg.mxu0
        %1816 = vmatpush.bf16.msra.mxu0 0
        %1817 = vmatpush.bf16.msra.mxu0 0
        %1818 = vmatpush.bf16.msra.mxu0 0
        %1819 = vmatpush.bf16.msra.mxu0 0
        %1820 = vmatpush.bf16.msra.mxu0 %v1725
        %1821 = vmatpush.bf16.msra.mxu0 %v1711
        %1822 = vmatpush.bf16.msra.mxu0 %v1710
        %1823 = vmatpush.bf16.msra.mxu0 %v1709
        %1824 = vmatmul.bf16.gmra.mxu0 %v1146
        %v1825 = vpop.f32.mrf.mxu0
        %v1826 = vadd.f32 %v1737, %v1825
        %v1827 = vpop.f32.mrf.mxu0
        %v1828 = vadd.f32 %v1739, %v1827
        %1829 = vmatmul.bf16.gmra.mxu0 %v1149
        %v1830 = vpop.f32.mrf.mxu0
        %v1831 = vadd.f32 %v1742, %v1830
        %v1832 = vpop.f32.mrf.mxu0
        %v1833 = vadd.f32 %v1744, %v1832
        %1834 = vmatmul.bf16.gmra.mxu0 %v1152
        %v1835 = vpop.f32.mrf.mxu0
        %v1836 = vadd.f32 %v1747, %v1835
        %v1837 = vpop.f32.mrf.mxu0
        %v1838 = vadd.f32 %v1749, %v1837
        %1839 = vmatmul.bf16.gmra.mxu0 %v1155
        %v1840 = vpop.f32.mrf.mxu0
        %v1841 = vadd.f32 %v1752, %v1840
        %v1842 = vpop.f32.mrf.mxu0
        %v1843 = vadd.f32 %v1754, %v1842
        %1844 = vmatmul.bf16.gmra.mxu0 %v1158
        %v1845 = vpop.f32.mrf.mxu0
        %v1846 = vadd.f32 %v1757, %v1845
        %v1847 = vpop.f32.mrf.mxu0
        %v1848 = vadd.f32 %v1759, %v1847
        %1849 = vmatmul.bf16.gmra.mxu0 %v1161
        %v1850 = vpop.f32.mrf.mxu0
        %v1851 = vadd.f32 %v1762, %v1850
        %v1852 = vpop.f32.mrf.mxu0
        %v1853 = vadd.f32 %v1764, %v1852
        %1854 = vmatmul.bf16.gmra.mxu0 %v1164
        %v1855 = vpop.f32.mrf.mxu0
        %v1856 = vadd.f32 %v1767, %v1855
        %v1857 = vpop.f32.mrf.mxu0
        %v1858 = vadd.f32 %v1769, %v1857
        %1859 = vmatmul.bf16.gmra.mxu0 %v1167
        %v1860 = vpop.f32.mrf.mxu0
        %v1861 = vadd.f32 %v1772, %v1860
        %v1862 = vpop.f32.mrf.mxu0
        %v1863 = vadd.f32 %v1774, %v1862
        %1864 = vmatmul.bf16.gmra.mxu0 %v1170
        %v1865 = vpop.f32.mrf.mxu0
        %v1866 = vadd.f32 %v1777, %v1865
        %v1867 = vpop.f32.mrf.mxu0
        %v1868 = vadd.f32 %v1779, %v1867
        %1869 = vmatmul.bf16.gmra.mxu0 %v1173
        %v1870 = vpop.f32.mrf.mxu0
        %v1871 = vadd.f32 %v1782, %v1870
        %v1872 = vpop.f32.mrf.mxu0
        %v1873 = vadd.f32 %v1784, %v1872
        %1874 = vmatmul.bf16.gmra.mxu0 %v1176
        %v1875 = vpop.f32.mrf.mxu0
        %v1876 = vadd.f32 %v1787, %v1875
        %v1877 = vpop.f32.mrf.mxu0
        %v1878 = vadd.f32 %v1789, %v1877
        %1879 = vmatmul.bf16.gmra.mxu0 %v1179
        %v1880 = vpop.f32.mrf.mxu0
        %v1881 = vadd.f32 %v1792, %v1880
        %v1882 = vpop.f32.mrf.mxu0
        %v1883 = vadd.f32 %v1794, %v1882
        %1884 = vmatmul.bf16.gmra.mxu0 %v1182
        %v1885 = vpop.f32.mrf.mxu0
        %v1886 = vadd.f32 %v1797, %v1885
        %v1887 = vpop.f32.mrf.mxu0
        %v1888 = vadd.f32 %v1799, %v1887
        %1889 = vmatmul.bf16.gmra.mxu0 %v1185
        %v1890 = vpop.f32.mrf.mxu0
        %v1891 = vadd.f32 %v1802, %v1890
        %v1892 = vpop.f32.mrf.mxu0
        %v1893 = vadd.f32 %v1804, %v1892
        %1894 = vmatmul.bf16.gmra.mxu0 %v1188
        %v1895 = vpop.f32.mrf.mxu0
        %v1896 = vadd.f32 %v1807, %v1895
        %v1897 = vpop.f32.mrf.mxu0
        %v1898 = vadd.f32 %v1809, %v1897
        %1899 = vmatmul.bf16.gmra.mxu0 %v1448
        %v1900 = vpop.f32.mrf.mxu0
        %v1901 = vadd.f32 %v1812, %v1900
        %v1902 = vpop.f32.mrf.mxu0
        %v1903 = vadd.f32 %v1814, %v1902
        %1904 = vdwg.mxu0
        %v1905 = vadd.f32 %v1552, %v1826
        %v1906 = vadd.f32 %v1554, %v1828
        %v1907 = vadd.f32 %v1557, %v1831
        %v1908 = vadd.f32 %v1559, %v1833
        %v1909 = vadd.f32 %v1562, %v1836
        %v1910 = vadd.f32 %v1564, %v1838
        %v1911 = vadd.f32 %v1567, %v1841
        %v1912 = vadd.f32 %v1569, %v1843
        %v1913 = vadd.f32 %v1572, %v1846
        %v1914 = vadd.f32 %v1574, %v1848
        %v1915 = vadd.f32 %v1577, %v1851
        %v1916 = vadd.f32 %v1579, %v1853
        %v1917 = vadd.f32 %v1582, %v1856
        %v1918 = vadd.f32 %v1584, %v1858
        %v1919 = vadd.f32 %v1587, %v1861
        %v1920 = vadd.f32 %v1589, %v1863
        %v1921 = vadd.f32 %v1592, %v1866
        %v1922 = vadd.f32 %v1594, %v1868
        %v1923 = vadd.f32 %v1597, %v1871
        %v1924 = vadd.f32 %v1599, %v1873
        %v1925 = vadd.f32 %v1602, %v1876
        %v1926 = vadd.f32 %v1604, %v1878
        %v1927 = vadd.f32 %v1607, %v1881
        %v1928 = vadd.f32 %v1609, %v1883
        %v1929 = vadd.f32 %v1612, %v1886
        %v1930 = vadd.f32 %v1614, %v1888
        %v1931 = vadd.f32 %v1617, %v1891
        %v1932 = vadd.f32 %v1619, %v1893
        %v1933 = vadd.f32 %v1622, %v1896
        %v1934 = vadd.f32 %v1624, %v1898
        %v1935 = vadd.f32 %v1627, %v1901
        %v1936 = vadd.f32 %v1629, %v1903
        %v1937 = vld [vmem:[%s2] sm:$0x1]
        %v1939 = vperm.slane %v1937, 0
        %v1941 = vadd.f32 %v1905, %v1939
        %v1942 = vadd.f32 %v1906, %v1939
        %v1943 = vadd.f32 %v1907, %v1939
        %v1944 = vadd.f32 %v1908, %v1939
        %v1945 = vadd.f32 %v1909, %v1939
        %v1946 = vadd.f32 %v1910, %v1939
        %v1947 = vadd.f32 %v1911, %v1939
        %v1948 = vadd.f32 %v1912, %v1939
        %v1949 = vadd.f32 %v1913, %v1939
        %v1950 = vadd.f32 %v1914, %v1939
        %v1951 = vadd.f32 %v1915, %v1939
        %v1952 = vadd.f32 %v1916, %v1939
        %v1953 = vadd.f32 %v1917, %v1939
        %v1954 = vadd.f32 %v1918, %v1939
        %v1955 = vadd.f32 %v1919, %v1939
        %v1956 = vadd.f32 %v1920, %v1939
        %v1957 = vadd.f32 %v1921, %v1939
        %v1958 = vadd.f32 %v1922, %v1939
        %v1959 = vadd.f32 %v1923, %v1939
        %v1960 = vadd.f32 %v1924, %v1939
        %v1961 = vadd.f32 %v1925, %v1939
        %v1962 = vadd.f32 %v1926, %v1939
        %v1963 = vadd.f32 %v1927, %v1939
        %v1964 = vadd.f32 %v1928, %v1939
        %v1965 = vadd.f32 %v1929, %v1939
        %v1966 = vadd.f32 %v1930, %v1939
        %v1967 = vadd.f32 %v1931, %v1939
        %v1968 = vadd.f32 %v1932, %v1939
        %v1969 = vadd.f32 %v1933, %v1939
        %v1970 = vadd.f32 %v1934, %v1939
        %v1971 = vadd.f32 %v1935, %v1939
        %v1972 = vadd.f32 %v1936, %v1939
        %v1973 = vmul.f32 %v1941, %v1941
        %v1974 = vmul.f32 %v1942, %v1942
        %v1975 = vmul.f32 %v1943, %v1943
        %v1976 = vmul.f32 %v1944, %v1944
        %v1977 = vmul.f32 %v1945, %v1945
        %v1978 = vmul.f32 %v1946, %v1946
        %v1979 = vmul.f32 %v1947, %v1947
        %v1980 = vmul.f32 %v1948, %v1948
        %v1981 = vmul.f32 %v1949, %v1949
        %v1982 = vmul.f32 %v1950, %v1950
        %v1983 = vmul.f32 %v1951, %v1951
        %v1984 = vmul.f32 %v1952, %v1952
        %v1985 = vmul.f32 %v1953, %v1953
        %v1986 = vmul.f32 %v1954, %v1954
        %v1987 = vmul.f32 %v1955, %v1955
        %v1988 = vmul.f32 %v1956, %v1956
        %v1989 = vmul.f32 %v1957, %v1957
        %v1990 = vmul.f32 %v1958, %v1958
        %v1991 = vmul.f32 %v1959, %v1959
        %v1992 = vmul.f32 %v1960, %v1960
        %v1993 = vmul.f32 %v1961, %v1961
        %v1994 = vmul.f32 %v1962, %v1962
        %v1995 = vmul.f32 %v1963, %v1963
        %v1996 = vmul.f32 %v1964, %v1964
        %v1997 = vmul.f32 %v1965, %v1965
        %v1998 = vmul.f32 %v1966, %v1966
        %v1999 = vmul.f32 %v1967, %v1967
        %v2000 = vmul.f32 %v1968, %v1968
        %v2001 = vmul.f32 %v1969, %v1969
        %v2002 = vmul.f32 %v1970, %v1970
        %v2003 = vmul.f32 %v1971, %v1971
        %v2004 = vmul.f32 %v1972, %v1972
        %v2005 = vmul.f32 %v1941, %v1973
        %v2006 = vmul.f32 %v1942, %v1974
        %v2007 = vmul.f32 %v1943, %v1975
        %v2008 = vmul.f32 %v1944, %v1976
        %v2009 = vmul.f32 %v1945, %v1977
        %v2010 = vmul.f32 %v1946, %v1978
        %v2011 = vmul.f32 %v1947, %v1979
        %v2012 = vmul.f32 %v1948, %v1980
        %v2013 = vmul.f32 %v1949, %v1981
        %v2014 = vmul.f32 %v1950, %v1982
        %v2015 = vmul.f32 %v1951, %v1983
        %v2016 = vmul.f32 %v1952, %v1984
        %v2017 = vmul.f32 %v1953, %v1985
        %v2018 = vmul.f32 %v1954, %v1986
        %v2019 = vmul.f32 %v1955, %v1987
        %v2020 = vmul.f32 %v1956, %v1988
        %v2021 = vmul.f32 %v1957, %v1989
        %v2022 = vmul.f32 %v1958, %v1990
        %v2023 = vmul.f32 %v1959, %v1991
        %v2024 = vmul.f32 %v1960, %v1992
        %v2025 = vmul.f32 %v1961, %v1993
        %v2026 = vmul.f32 %v1962, %v1994
        %v2027 = vmul.f32 %v1963, %v1995
        %v2028 = vmul.f32 %v1964, %v1996
        %v2029 = vmul.f32 %v1965, %v1997
        %v2030 = vmul.f32 %v1966, %v1998
        %v2031 = vmul.f32 %v1967, %v1999
        %v2032 = vmul.f32 %v1968, %v2000
        %v2033 = vmul.f32 %v1969, %v2001
        %v2034 = vmul.f32 %v1970, %v2002
        %v2035 = vmul.f32 %v1971, %v2003
        %v2036 = vmul.f32 %v1972, %v2004
        %v2037 = vmul.f32 %v2005, 0.044715
        %v2038 = vmul.f32 %v2006, 0.044715
        %v2039 = vmul.f32 %v2007, 0.044715
        %v2040 = vmul.f32 %v2008, 0.044715
        %v2041 = vmul.f32 %v2009, 0.044715
        %v2042 = vmul.f32 %v2010, 0.044715
        %v2043 = vmul.f32 %v2011, 0.044715
        %v2044 = vmul.f32 %v2012, 0.044715
        %v2045 = vmul.f32 %v2013, 0.044715
        %v2046 = vmul.f32 %v2014, 0.044715
        %v2047 = vmul.f32 %v2015, 0.044715
        %v2048 = vmul.f32 %v2016, 0.044715
        %v2049 = vmul.f32 %v2017, 0.044715
        %v2050 = vmul.f32 %v2018, 0.044715
        %v2051 = vmul.f32 %v2019, 0.044715
        %v2052 = vmul.f32 %v2020, 0.044715
        %v2053 = vmul.f32 %v2021, 0.044715
        %v2054 = vmul.f32 %v2022, 0.044715
        %v2055 = vmul.f32 %v2023, 0.044715
        %v2056 = vmul.f32 %v2024, 0.044715
        %v2057 = vmul.f32 %v2025, 0.044715
        %v2058 = vmul.f32 %v2026, 0.044715
        %v2059 = vmul.f32 %v2027, 0.044715
        %v2060 = vmul.f32 %v2028, 0.044715
        %v2061 = vmul.f32 %v2029, 0.044715
        %v2062 = vmul.f32 %v2030, 0.044715
        %v2063 = vmul.f32 %v2031, 0.044715
        %v2064 = vmul.f32 %v2032, 0.044715
        %v2065 = vmul.f32 %v2033, 0.044715
        %v2066 = vmul.f32 %v2034, 0.044715
        %v2067 = vmul.f32 %v2035, 0.044715
        %v2068 = vmul.f32 %v2036, 0.044715
        %v2069 = vadd.f32 %v1941, %v2037
        %v2070 = vadd.f32 %v1942, %v2038
        %v2071 = vadd.f32 %v1943, %v2039
        %v2072 = vadd.f32 %v1944, %v2040
        %v2073 = vadd.f32 %v1945, %v2041
        %v2074 = vadd.f32 %v1946, %v2042
        %v2075 = vadd.f32 %v1947, %v2043
        %v2076 = vadd.f32 %v1948, %v2044
        %v2077 = vadd.f32 %v1949, %v2045
        %v2078 = vadd.f32 %v1950, %v2046
        %v2079 = vadd.f32 %v1951, %v2047
        %v2080 = vadd.f32 %v1952, %v2048
        %v2081 = vadd.f32 %v1953, %v2049
        %v2082 = vadd.f32 %v1954, %v2050
        %v2083 = vadd.f32 %v1955, %v2051
        %v2084 = vadd.f32 %v1956, %v2052
        %v2085 = vadd.f32 %v1957, %v2053
        %v2086 = vadd.f32 %v1958, %v2054
        %v2087 = vadd.f32 %v1959, %v2055
        %v2088 = vadd.f32 %v1960, %v2056
        %v2089 = vadd.f32 %v1961, %v2057
        %v2090 = vadd.f32 %v1962, %v2058
        %v2091 = vadd.f32 %v1963, %v2059
        %v2092 = vadd.f32 %v1964, %v2060
        %v2093 = vadd.f32 %v1965, %v2061
        %v2094 = vadd.f32 %v1966, %v2062
        %v2095 = vadd.f32 %v1967, %v2063
        %v2096 = vadd.f32 %v1968, %v2064
        %v2097 = vadd.f32 %v1969, %v2065
        %v2098 = vadd.f32 %v1970, %v2066
        %v2099 = vadd.f32 %v1971, %v2067
        %v2100 = vadd.f32 %v1972, %v2068
        %v2101 = vmul.f32 %v2069, 0.7978846
        %v2102 = vmul.f32 %v2070, 0.7978846
        %v2103 = vmul.f32 %v2071, 0.7978846
        %v2104 = vmul.f32 %v2072, 0.7978846
        %v2105 = vmul.f32 %v2073, 0.7978846
        %v2106 = vmul.f32 %v2074, 0.7978846
        %v2107 = vmul.f32 %v2075, 0.7978846
        %v2108 = vmul.f32 %v2076, 0.7978846
        %v2109 = vmul.f32 %v2077, 0.7978846
        %v2110 = vmul.f32 %v2078, 0.7978846
        %v2111 = vmul.f32 %v2079, 0.7978846
        %v2112 = vmul.f32 %v2080, 0.7978846
        %v2113 = vmul.f32 %v2081, 0.7978846
        %v2114 = vmul.f32 %v2082, 0.7978846
        %v2115 = vmul.f32 %v2083, 0.7978846
        %v2116 = vmul.f32 %v2084, 0.7978846
        %v2117 = vmul.f32 %v2085, 0.7978846
        %v2118 = vmul.f32 %v2086, 0.7978846
        %v2119 = vmul.f32 %v2087, 0.7978846
        %v2120 = vmul.f32 %v2088, 0.7978846
        %v2121 = vmul.f32 %v2089, 0.7978846
        %v2122 = vmul.f32 %v2090, 0.7978846
        %v2123 = vmul.f32 %v2091, 0.7978846
        %v2124 = vmul.f32 %v2092, 0.7978846
        %v2125 = vmul.f32 %v2093, 0.7978846
        %v2126 = vmul.f32 %v2094, 0.7978846
        %v2127 = vmul.f32 %v2095, 0.7978846
        %v2128 = vmul.f32 %v2096, 0.7978846
        %v2129 = vmul.f32 %v2097, 0.7978846
        %v2130 = vmul.f32 %v2098, 0.7978846
        %v2131 = vmul.f32 %v2099, 0.7978846
        %v2132 = vmul.f32 %v2100, 0.7978846
        %v2133 = vtanh.pop %v2101
        %v2134 = vtanh.pop %v2102
        %v2135 = vtanh.pop %v2103
        %v2136 = vtanh.pop %v2104
        %v2137 = vtanh.pop %v2105
        %v2138 = vtanh.pop %v2106
        %v2139 = vtanh.pop %v2107
        %v2140 = vtanh.pop %v2108
        %v2141 = vtanh.pop %v2109
        %v2142 = vtanh.pop %v2110
        %v2143 = vtanh.pop %v2111
        %v2144 = vtanh.pop %v2112
        %v2145 = vtanh.pop %v2113
        %v2146 = vtanh.pop %v2114
        %v2147 = vtanh.pop %v2115
        %v2148 = vtanh.pop %v2116
        %v2149 = vtanh.pop %v2117
        %v2150 = vtanh.pop %v2118
        %v2151 = vtanh.pop %v2119
        %v2152 = vtanh.pop %v2120
        %v2153 = vtanh.pop %v2121
        %v2154 = vtanh.pop %v2122
        %v2155 = vtanh.pop %v2123
        %v2156 = vtanh.pop %v2124
        %v2157 = vtanh.pop %v2125
        %v2158 = vtanh.pop %v2126
        %v2159 = vtanh.pop %v2127
        %v2160 = vtanh.pop %v2128
        %v2161 = vtanh.pop %v2129
        %v2162 = vtanh.pop %v2130
        %v2163 = vtanh.pop %v2131
        %v2164 = vtanh.pop %v2132
        %v2165 = vadd.f32 %v2133, 1.0
        %v2166 = vadd.f32 %v2134, 1.0
        %v2167 = vadd.f32 %v2135, 1.0
        %v2168 = vadd.f32 %v2136, 1.0
        %v2169 = vadd.f32 %v2137, 1.0
        %v2170 = vadd.f32 %v2138, 1.0
        %v2171 = vadd.f32 %v2139, 1.0
        %v2172 = vadd.f32 %v2140, 1.0
        %v2173 = vadd.f32 %v2141, 1.0
        %v2174 = vadd.f32 %v2142, 1.0
        %v2175 = vadd.f32 %v2143, 1.0
        %v2176 = vadd.f32 %v2144, 1.0
        %v2177 = vadd.f32 %v2145, 1.0
        %v2178 = vadd.f32 %v2146, 1.0
        %v2179 = vadd.f32 %v2147, 1.0
        %v2180 = vadd.f32 %v2148, 1.0
        %v2181 = vadd.f32 %v2149, 1.0
        %v2182 = vadd.f32 %v2150, 1.0
        %v2183 = vadd.f32 %v2151, 1.0
        %v2184 = vadd.f32 %v2152, 1.0
        %v2185 = vadd.f32 %v2153, 1.0
        %v2186 = vadd.f32 %v2154, 1.0
        %v2187 = vadd.f32 %v2155, 1.0
        %v2188 = vadd.f32 %v2156, 1.0
        %v2189 = vadd.f32 %v2157, 1.0
        %v2190 = vadd.f32 %v2158, 1.0
        %v2191 = vadd.f32 %v2159, 1.0
        %v2192 = vadd.f32 %v2160, 1.0
        %v2193 = vadd.f32 %v2161, 1.0
        %v2194 = vadd.f32 %v2162, 1.0
        %v2195 = vadd.f32 %v2163, 1.0
        %v2196 = vadd.f32 %v2164, 1.0
        %v2197 = vmul.f32 %v2165, 0.5
        %v2198 = vmul.f32 %v2166, 0.5
        %v2199 = vmul.f32 %v2167, 0.5
        %v2200 = vmul.f32 %v2168, 0.5
        %v2201 = vmul.f32 %v2169, 0.5
        %v2202 = vmul.f32 %v2170, 0.5
        %v2203 = vmul.f32 %v2171, 0.5
        %v2204 = vmul.f32 %v2172, 0.5
        %v2205 = vmul.f32 %v2173, 0.5
        %v2206 = vmul.f32 %v2174, 0.5
        %v2207 = vmul.f32 %v2175, 0.5
        %v2208 = vmul.f32 %v2176, 0.5
        %v2209 = vmul.f32 %v2177, 0.5
        %v2210 = vmul.f32 %v2178, 0.5
        %v2211 = vmul.f32 %v2179, 0.5
        %v2212 = vmul.f32 %v2180, 0.5
        %v2213 = vmul.f32 %v2181, 0.5
        %v2214 = vmul.f32 %v2182, 0.5
        %v2215 = vmul.f32 %v2183, 0.5
        %v2216 = vmul.f32 %v2184, 0.5
        %v2217 = vmul.f32 %v2185, 0.5
        %v2218 = vmul.f32 %v2186, 0.5
        %v2219 = vmul.f32 %v2187, 0.5
        %v2220 = vmul.f32 %v2188, 0.5
        %v2221 = vmul.f32 %v2189, 0.5
        %v2222 = vmul.f32 %v2190, 0.5
        %v2223 = vmul.f32 %v2191, 0.5
        %v2224 = vmul.f32 %v2192, 0.5
        %v2225 = vmul.f32 %v2193, 0.5
        %v2226 = vmul.f32 %v2194, 0.5
        %v2227 = vmul.f32 %v2195, 0.5
        %v2228 = vmul.f32 %v2196, 0.5
        %v2229 = vmul.f32 %v1941, %v2197
        %v2230 = vmul.f32 %v1942, %v2198
        %v2231 = vmul.f32 %v1943, %v2199
        %v2232 = vmul.f32 %v1944, %v2200
        %v2233 = vmul.f32 %v1945, %v2201
        %v2234 = vmul.f32 %v1946, %v2202
        %v2235 = vmul.f32 %v1947, %v2203
        %v2236 = vmul.f32 %v1948, %v2204
        %v2237 = vmul.f32 %v1949, %v2205
        %v2238 = vmul.f32 %v1950, %v2206
        %v2239 = vmul.f32 %v1951, %v2207
        %v2240 = vmul.f32 %v1952, %v2208
        %v2241 = vmul.f32 %v1953, %v2209
        %v2242 = vmul.f32 %v1954, %v2210
        %v2243 = vmul.f32 %v1955, %v2211
        %v2244 = vmul.f32 %v1956, %v2212
        %v2245 = vmul.f32 %v1957, %v2213
        %v2246 = vmul.f32 %v1958, %v2214
        %v2247 = vmul.f32 %v1959, %v2215
        %v2248 = vmul.f32 %v1960, %v2216
        %v2249 = vmul.f32 %v1961, %v2217
        %v2250 = vmul.f32 %v1962, %v2218
        %v2251 = vmul.f32 %v1963, %v2219
        %v2252 = vmul.f32 %v1964, %v2220
        %v2253 = vmul.f32 %v1965, %v2221
        %v2254 = vmul.f32 %v1966, %v2222
        %v2255 = vmul.f32 %v1967, %v2223
        %v2256 = vmul.f32 %v1968, %v2224
        %v2257 = vmul.f32 %v1969, %v2225
        %v2258 = vmul.f32 %v1970, %v2226
        %v2259 = vmul.f32 %v1971, %v2227
        %v2260 = vmul.f32 %v1972, %v2228
        %v2293 = vrot.slane %v2229, 7
        %v2294 = vrot.slane %v2230, 7
        %v2295 = vsel %vm396, %v2293, %v2294
        %v2296 = vrot.slane %v2231, 7
        %v2297 = vrot.slane %v2232, 7
        %v2298 = vsel %vm396, %v2296, %v2297
        %v2299 = vrot.slane %v2233, 7
        %v2300 = vrot.slane %v2234, 7
        %v2301 = vsel %vm396, %v2299, %v2300
        %v2302 = vrot.slane %v2235, 7
        %v2303 = vrot.slane %v2236, 7
        %v2304 = vsel %vm396, %v2302, %v2303
        %v2305 = vrot.slane %v2237, 7
        %v2306 = vrot.slane %v2238, 7
        %v2307 = vsel %vm396, %v2305, %v2306
        %v2308 = vrot.slane %v2239, 7
        %v2309 = vrot.slane %v2240, 7
        %v2310 = vsel %vm396, %v2308, %v2309
        %v2311 = vrot.slane %v2241, 7
        %v2312 = vrot.slane %v2242, 7
        %v2313 = vsel %vm396, %v2311, %v2312
        %v2314 = vrot.slane %v2243, 7
        %v2315 = vrot.slane %v2244, 7
        %v2316 = vsel %vm396, %v2314, %v2315
        %v2317 = vrot.slane %v2245, 7
        %v2318 = vrot.slane %v2246, 7
        %v2319 = vsel %vm396, %v2317, %v2318
        %v2320 = vrot.slane %v2247, 7
        %v2321 = vrot.slane %v2248, 7
        %v2322 = vsel %vm396, %v2320, %v2321
        %v2323 = vrot.slane %v2249, 7
        %v2324 = vrot.slane %v2250, 7
        %v2325 = vsel %vm396, %v2323, %v2324
        %v2326 = vrot.slane %v2251, 7
        %v2327 = vrot.slane %v2252, 7
        %v2328 = vsel %vm396, %v2326, %v2327
        %v2329 = vrot.slane %v2253, 7
        %v2330 = vrot.slane %v2254, 7
        %v2331 = vsel %vm396, %v2329, %v2330
        %v2332 = vrot.slane %v2255, 7
        %v2333 = vrot.slane %v2256, 7
        %v2334 = vsel %vm396, %v2332, %v2333
        %v2335 = vrot.slane %v2257, 7
        %v2336 = vrot.slane %v2258, 7
        %v2337 = vsel %vm396, %v2335, %v2336
        %v2338 = vrot.slane %v2259, 7
        %v2339 = vrot.slane %v2260, 7
        %v2340 = vsel %vm396, %v2338, %v2339
        %v2373 = vsel %vm396, 0.0, %v2293
        %v2374 = vsel %vm396, 0.0, %v2296
        %v2375 = vsel %vm396, 0.0, %v2299
        %v2376 = vsel %vm396, 0.0, %v2302
        %v2377 = vsel %vm396, 0.0, %v2305
        %v2378 = vsel %vm396, 0.0, %v2308
        %v2379 = vsel %vm396, 0.0, %v2311
        %v2380 = vsel %vm396, 0.0, %v2314
        %v2381 = vsel %vm396, 0.0, %v2317
        %v2382 = vsel %vm396, 0.0, %v2320
        %v2383 = vsel %vm396, 0.0, %v2323
        %v2384 = vsel %vm396, 0.0, %v2326
        %v2385 = vsel %vm396, 0.0, %v2329
        %v2386 = vsel %vm396, 0.0, %v2332
        %v2387 = vsel %vm396, 0.0, %v2335
        %v2388 = vsel %vm396, 0.0, %v2338
        %v2389 = vrot.slane %v2229, 1
        %v2390 = vrot.slane %v2230, 1
        %v2391 = vsel %vm493, %v2389, %v2390
        %v2392 = vrot.slane %v2231, 1
        %v2393 = vrot.slane %v2232, 1
        %v2394 = vsel %vm493, %v2392, %v2393
        %v2395 = vrot.slane %v2233, 1
        %v2396 = vrot.slane %v2234, 1
        %v2397 = vsel %vm493, %v2395, %v2396
        %v2398 = vrot.slane %v2235, 1
        %v2399 = vrot.slane %v2236, 1
        %v2400 = vsel %vm493, %v2398, %v2399
        %v2401 = vrot.slane %v2237, 1
        %v2402 = vrot.slane %v2238, 1
        %v2403 = vsel %vm493, %v2401, %v2402
        %v2404 = vrot.slane %v2239, 1
        %v2405 = vrot.slane %v2240, 1
        %v2406 = vsel %vm493, %v2404, %v2405
        %v2407 = vrot.slane %v2241, 1
        %v2408 = vrot.slane %v2242, 1
        %v2409 = vsel %vm493, %v2407, %v2408
        %v2410 = vrot.slane %v2243, 1
        %v2411 = vrot.slane %v2244, 1
        %v2412 = vsel %vm493, %v2410, %v2411
        %v2413 = vrot.slane %v2245, 1
        %v2414 = vrot.slane %v2246, 1
        %v2415 = vsel %vm493, %v2413, %v2414
        %v2416 = vrot.slane %v2247, 1
        %v2417 = vrot.slane %v2248, 1
        %v2418 = vsel %vm493, %v2416, %v2417
        %v2419 = vrot.slane %v2249, 1
        %v2420 = vrot.slane %v2250, 1
        %v2421 = vsel %vm493, %v2419, %v2420
        %v2422 = vrot.slane %v2251, 1
        %v2423 = vrot.slane %v2252, 1
        %v2424 = vsel %vm493, %v2422, %v2423
        %v2425 = vrot.slane %v2253, 1
        %v2426 = vrot.slane %v2254, 1
        %v2427 = vsel %vm493, %v2425, %v2426
        %v2428 = vrot.slane %v2255, 1
        %v2429 = vrot.slane %v2256, 1
        %v2430 = vsel %vm493, %v2428, %v2429
        %v2431 = vrot.slane %v2257, 1
        %v2432 = vrot.slane %v2258, 1
        %v2433 = vsel %vm493, %v2431, %v2432
        %v2434 = vrot.slane %v2259, 1
        %v2435 = vrot.slane %v2260, 1
        %v2436 = vsel %vm493, %v2434, %v2435
        %v2453 = vsel %vm493, %v2390, 0.0
        %v2454 = vsel %vm493, %v2393, 0.0
        %v2455 = vsel %vm493, %v2396, 0.0
        %v2456 = vsel %vm493, %v2399, 0.0
        %v2457 = vsel %vm493, %v2402, 0.0
        %v2458 = vsel %vm493, %v2405, 0.0
        %v2459 = vsel %vm493, %v2408, 0.0
        %v2460 = vsel %vm493, %v2411, 0.0
        %v2461 = vsel %vm493, %v2414, 0.0
        %v2462 = vsel %vm493, %v2417, 0.0
        %v2463 = vsel %vm493, %v2420, 0.0
        %v2464 = vsel %vm493, %v2423, 0.0
        %v2465 = vsel %vm493, %v2426, 0.0
        %v2466 = vsel %vm493, %v2429, 0.0
        %v2467 = vsel %vm493, %v2432, 0.0
        %v2468 = vsel %vm493, %v2435, 0.0
        %2469 = vrot.lane.b32.xlu0 %v2229, 20
        %v2470 = vpop.permute.xlu0 %2469
        %2471 = vrot.lane.b32.xlu0 %v2230, 20
        %v2472 = vpop.permute.xlu0 %2471
        %2473 = vrot.lane.b32.xlu0 %v2231, 20
        %v2474 = vpop.permute.xlu0 %2473
        %2475 = vrot.lane.b32.xlu0 %v2232, 20
        %v2476 = vpop.permute.xlu0 %2475
        %2477 = vrot.lane.b32.xlu0 %v2233, 20
        %v2478 = vpop.permute.xlu0 %2477
        %2479 = vrot.lane.b32.xlu0 %v2234, 20
        %v2480 = vpop.permute.xlu0 %2479
        %2481 = vrot.lane.b32.xlu0 %v2235, 20
        %v2482 = vpop.permute.xlu0 %2481
        %2483 = vrot.lane.b32.xlu0 %v2236, 20
        %v2484 = vpop.permute.xlu0 %2483
        %2485 = vrot.lane.b32.xlu0 %v2237, 20
        %v2486 = vpop.permute.xlu0 %2485
        %2487 = vrot.lane.b32.xlu0 %v2238, 20
        %v2488 = vpop.permute.xlu0 %2487
        %2489 = vrot.lane.b32.xlu0 %v2239, 20
        %v2490 = vpop.permute.xlu0 %2489
        %2491 = vrot.lane.b32.xlu0 %v2240, 20
        %v2492 = vpop.permute.xlu0 %2491
        %2493 = vrot.lane.b32.xlu0 %v2241, 20
        %v2494 = vpop.permute.xlu0 %2493
        %2495 = vrot.lane.b32.xlu0 %v2242, 20
        %v2496 = vpop.permute.xlu0 %2495
        %2497 = vrot.lane.b32.xlu0 %v2243, 20
        %v2498 = vpop.permute.xlu0 %2497
        %2499 = vrot.lane.b32.xlu0 %v2244, 20
        %v2500 = vpop.permute.xlu0 %2499
        %2501 = vrot.lane.b32.xlu0 %v2245, 20
        %v2502 = vpop.permute.xlu0 %2501
        %2503 = vrot.lane.b32.xlu0 %v2246, 20
        %v2504 = vpop.permute.xlu0 %2503
        %2505 = vrot.lane.b32.xlu0 %v2247, 20
        %v2506 = vpop.permute.xlu0 %2505
        %2507 = vrot.lane.b32.xlu0 %v2248, 20
        %v2508 = vpop.permute.xlu0 %2507
        %2509 = vrot.lane.b32.xlu0 %v2249, 20
        %v2510 = vpop.permute.xlu0 %2509
        %2511 = vrot.lane.b32.xlu0 %v2250, 20
        %v2512 = vpop.permute.xlu0 %2511
        %2513 = vrot.lane.b32.xlu0 %v2251, 20
        %v2514 = vpop.permute.xlu0 %2513
        %2515 = vrot.lane.b32.xlu0 %v2252, 20
        %v2516 = vpop.permute.xlu0 %2515
        %2517 = vrot.lane.b32.xlu0 %v2253, 20
        %v2518 = vpop.permute.xlu0 %2517
        %2519 = vrot.lane.b32.xlu0 %v2254, 20
        %v2520 = vpop.permute.xlu0 %2519
        %2521 = vrot.lane.b32.xlu0 %v2255, 20
        %v2522 = vpop.permute.xlu0 %2521
        %2523 = vrot.lane.b32.xlu0 %v2256, 20
        %v2524 = vpop.permute.xlu0 %2523
        %2525 = vrot.lane.b32.xlu0 %v2257, 20
        %v2526 = vpop.permute.xlu0 %2525
        %2527 = vrot.lane.b32.xlu0 %v2258, 20
        %v2528 = vpop.permute.xlu0 %2527
        %2529 = vrot.lane.b32.xlu0 %v2259, 20
        %v2530 = vpop.permute.xlu0 %2529
        %2531 = vrot.lane.b32.xlu0 %v2260, 20
        %v2532 = vpop.permute.xlu0 %2531
        %2581 = vrot.lane.b32.xlu0 %v2391, 40
        %v2582 = vpop.permute.xlu0 %2581
        %2583 = vrot.lane.b32.xlu0 %v2453, 40
        %v2584 = vpop.permute.xlu0 %2583
        %2585 = vrot.lane.b32.xlu0 %v2394, 40
        %v2586 = vpop.permute.xlu0 %2585
        %2587 = vrot.lane.b32.xlu0 %v2454, 40
        %v2588 = vpop.permute.xlu0 %2587
        %2589 = vrot.lane.b32.xlu0 %v2397, 40
        %v2590 = vpop.permute.xlu0 %2589
        %2591 = vrot.lane.b32.xlu0 %v2455, 40
        %v2592 = vpop.permute.xlu0 %2591
        %2593 = vrot.lane.b32.xlu0 %v2400, 40
        %v2594 = vpop.permute.xlu0 %2593
        %2595 = vrot.lane.b32.xlu0 %v2456, 40
        %v2596 = vpop.permute.xlu0 %2595
        %2597 = vrot.lane.b32.xlu0 %v2403, 40
        %v2598 = vpop.permute.xlu0 %2597
        %2599 = vrot.lane.b32.xlu0 %v2457, 40
        %v2600 = vpop.permute.xlu0 %2599
        %2601 = vrot.lane.b32.xlu0 %v2406, 40
        %v2602 = vpop.permute.xlu0 %2601
        %2603 = vrot.lane.b32.xlu0 %v2458, 40
        %v2604 = vpop.permute.xlu0 %2603
        %2605 = vrot.lane.b32.xlu0 %v2409, 40
        %v2606 = vpop.permute.xlu0 %2605
        %2607 = vrot.lane.b32.xlu0 %v2459, 40
        %v2608 = vpop.permute.xlu0 %2607
        %2609 = vrot.lane.b32.xlu0 %v2412, 40
        %v2610 = vpop.permute.xlu0 %2609
        %2611 = vrot.lane.b32.xlu0 %v2460, 40
        %v2612 = vpop.permute.xlu0 %2611
        %2613 = vrot.lane.b32.xlu0 %v2415, 40
        %v2614 = vpop.permute.xlu0 %2613
        %2615 = vrot.lane.b32.xlu0 %v2461, 40
        %v2616 = vpop.permute.xlu0 %2615
        %2617 = vrot.lane.b32.xlu0 %v2418, 40
        %v2618 = vpop.permute.xlu0 %2617
        %2619 = vrot.lane.b32.xlu0 %v2462, 40
        %v2620 = vpop.permute.xlu0 %2619
        %2621 = vrot.lane.b32.xlu0 %v2421, 40
        %v2622 = vpop.permute.xlu0 %2621
        %2623 = vrot.lane.b32.xlu0 %v2463, 40
        %v2624 = vpop.permute.xlu0 %2623
        %2625 = vrot.lane.b32.xlu0 %v2424, 40
        %v2626 = vpop.permute.xlu0 %2625
        %2627 = vrot.lane.b32.xlu0 %v2464, 40
        %v2628 = vpop.permute.xlu0 %2627
        %2629 = vrot.lane.b32.xlu0 %v2427, 40
        %v2630 = vpop.permute.xlu0 %2629
        %2631 = vrot.lane.b32.xlu0 %v2465, 40
        %v2632 = vpop.permute.xlu0 %2631
        %2633 = vrot.lane.b32.xlu0 %v2430, 40
        %v2634 = vpop.permute.xlu0 %2633
        %2635 = vrot.lane.b32.xlu0 %v2466, 40
        %v2636 = vpop.permute.xlu0 %2635
        %2637 = vrot.lane.b32.xlu0 %v2433, 40
        %v2638 = vpop.permute.xlu0 %2637
        %2639 = vrot.lane.b32.xlu0 %v2467, 40
        %v2640 = vpop.permute.xlu0 %2639
        %2641 = vrot.lane.b32.xlu0 %v2436, 40
        %v2642 = vpop.permute.xlu0 %2641
        %2643 = vrot.lane.b32.xlu0 %v2468, 40
        %v2644 = vpop.permute.xlu0 %2643
        %vm2677 = vcmask 162816
        %v2678 = vsel %vm2677, %v2373, %v2470
        %v2679 = vsel %vm2677, %v2295, %v2472
        %v2680 = vsel %vm2677, %v2374, %v2474
        %v2681 = vsel %vm2677, %v2298, %v2476
        %v2682 = vsel %vm2677, %v2375, %v2478
        %v2683 = vsel %vm2677, %v2301, %v2480
        %v2684 = vsel %vm2677, %v2376, %v2482
        %v2685 = vsel %vm2677, %v2304, %v2484
        %v2686 = vsel %vm2677, %v2377, %v2486
        %v2687 = vsel %vm2677, %v2307, %v2488
        %v2688 = vsel %vm2677, %v2378, %v2490
        %v2689 = vsel %vm2677, %v2310, %v2492
        %v2690 = vsel %vm2677, %v2379, %v2494
        %v2691 = vsel %vm2677, %v2313, %v2496
        %v2692 = vsel %vm2677, %v2380, %v2498
        %v2693 = vsel %vm2677, %v2316, %v2500
        %v2694 = vsel %vm2677, %v2381, %v2502
        %v2695 = vsel %vm2677, %v2319, %v2504
        %v2696 = vsel %vm2677, %v2382, %v2506
        %v2697 = vsel %vm2677, %v2322, %v2508
        %v2698 = vsel %vm2677, %v2383, %v2510
        %v2699 = vsel %vm2677, %v2325, %v2512
        %v2700 = vsel %vm2677, %v2384, %v2514
        %v2701 = vsel %vm2677, %v2328, %v2516
        %v2702 = vsel %vm2677, %v2385, %v2518
        %v2703 = vsel %vm2677, %v2331, %v2520
        %v2704 = vsel %vm2677, %v2386, %v2522
        %v2705 = vsel %vm2677, %v2334, %v2524
        %v2706 = vsel %vm2677, %v2387, %v2526
        %v2707 = vsel %vm2677, %v2337, %v2528
        %v2708 = vsel %vm2677, %v2388, %v2530
        %v2709 = vsel %vm2677, %v2340, %v2532
        %vm2710 = vcmask 326656
        %v2711 = vsel %vm2710, %v2678, %v2582
        %v2712 = vsel %vm2710, %v2679, %v2584
        %v2713 = vsel %vm2710, %v2680, %v2586
        %v2714 = vsel %vm2710, %v2681, %v2588
        %v2715 = vsel %vm2710, %v2682, %v2590
        %v2716 = vsel %vm2710, %v2683, %v2592
        %v2717 = vsel %vm2710, %v2684, %v2594
        %v2718 = vsel %vm2710, %v2685, %v2596
        %v2719 = vsel %vm2710, %v2686, %v2598
        %v2720 = vsel %vm2710, %v2687, %v2600
        %v2721 = vsel %vm2710, %v2688, %v2602
        %v2722 = vsel %vm2710, %v2689, %v2604
        %v2723 = vsel %vm2710, %v2690, %v2606
        %v2724 = vsel %vm2710, %v2691, %v2608
        %v2725 = vsel %vm2710, %v2692, %v2610
        %v2726 = vsel %vm2710, %v2693, %v2612
        %v2727 = vsel %vm2710, %v2694, %v2614
        %v2728 = vsel %vm2710, %v2695, %v2616
        %v2729 = vsel %vm2710, %v2696, %v2618
        %v2730 = vsel %vm2710, %v2697, %v2620
        %v2731 = vsel %vm2710, %v2698, %v2622
        %v2732 = vsel %vm2710, %v2699, %v2624
        %v2733 = vsel %vm2710, %v2700, %v2626
        %v2734 = vsel %vm2710, %v2701, %v2628
        %v2735 = vsel %vm2710, %v2702, %v2630
        %v2736 = vsel %vm2710, %v2703, %v2632
        %v2737 = vsel %vm2710, %v2704, %v2634
        %v2738 = vsel %vm2710, %v2705, %v2636
        %v2739 = vsel %vm2710, %v2706, %v2638
        %v2740 = vsel %vm2710, %v2707, %v2640
        %v2741 = vsel %vm2710, %v2708, %v2642
        %v2742 = vsel %vm2710, %v2709, %v2644
        %v2743 = vpack.c.bf16 %v2711, %v2711
        %v2744 = vpack.c.bf16 %v2712, %v2712
        %v2745 = vpack.c.bf16 %v2713, %v2713
        %v2746 = vpack.c.bf16 %v2714, %v2714
        %v2747 = vpack.c.bf16 %v2715, %v2715
        %v2748 = vpack.c.bf16 %v2716, %v2716
        %v2749 = vpack.c.bf16 %v2717, %v2717
        %v2750 = vpack.c.bf16 %v2718, %v2718
        %v2751 = vpack.c.bf16 %v2719, %v2719
        %v2752 = vpack.c.bf16 %v2720, %v2720
        %v2753 = vpack.c.bf16 %v2721, %v2721
        %v2754 = vpack.c.bf16 %v2722, %v2722
        %v2755 = vpack.c.bf16 %v2723, %v2723
        %v2756 = vpack.c.bf16 %v2724, %v2724
        %v2757 = vpack.c.bf16 %v2725, %v2725
        %v2758 = vpack.c.bf16 %v2726, %v2726
        %v2759 = vpack.c.bf16 %v2727, %v2727
        %v2760 = vpack.c.bf16 %v2728, %v2728
        %v2761 = vpack.c.bf16 %v2729, %v2729
        %v2762 = vpack.c.bf16 %v2730, %v2730
        %v2763 = vpack.c.bf16 %v2731, %v2731
        %v2764 = vpack.c.bf16 %v2732, %v2732
        %v2765 = vpack.c.bf16 %v2733, %v2733
        %v2766 = vpack.c.bf16 %v2734, %v2734
        %v2767 = vpack.c.bf16 %v2735, %v2735
        %v2768 = vpack.c.bf16 %v2736, %v2736
        %v2769 = vpack.c.bf16 %v2737, %v2737
        %v2770 = vpack.c.bf16 %v2738, %v2738
        %v2771 = vpack.c.bf16 %v2739, %v2739
        %v2772 = vpack.c.bf16 %v2740, %v2740
        %v2773 = vpack.c.bf16 %v2741, %v2741
        %v2774 = vpack.c.bf16 %v2742, %v2742
        %v2775 = vld [vmem:[%s3] sm:$0xf]
        %v2776 = vld [vmem:[%s3 + $0x4] sm:$0xf]
        %v2777 = vld [vmem:[%s3 + $0x8] sm:$0xf]
        %v2778 = vld [vmem:[%s3 + $0xc] sm:$0xf]
        %v2779 = vld [vmem:[%s3 + $0x10] sm:$0xf]
        %v2780 = vld [vmem:[%s3 + $0x14] sm:$0xf]
        %v2781 = vld [vmem:[%s3 + $0x18] sm:$0xf]
        %v2782 = vld [vmem:[%s3 + $0x1c] sm:$0x3]
        %s2783 = scalar_lea.vmem %s3, 32
        %v2784 = vld [vmem:[%s2783] sm:$0xf]
        %v2785 = vld [vmem:[%s2783 + $0x4] sm:$0xf]
        %v2786 = vld [vmem:[%s2783 + $0x8] sm:$0xf]
        %v2787 = vld [vmem:[%s2783 + $0xc] sm:$0xf]
        %v2788 = vld [vmem:[%s2783 + $0x10] sm:$0xf]
        %v2789 = vld [vmem:[%s2783 + $0x14] sm:$0xf]
        %v2790 = vld [vmem:[%s2783 + $0x18] sm:$0xf]
        %v2791 = vld [vmem:[%s2783 + $0x1c] sm:$0x3]
        %v2824 = vunpack.c.l.b16 %v2743
        %v2825 = vunpack.c.l.b16 %v2744
        %v2826 = vunpack.c.l.b16 %v2745
        %v2827 = vunpack.c.l.b16 %v2746
        %v2828 = vunpack.c.l.b16 %v2747
        %v2829 = vunpack.c.l.b16 %v2748
        %v2830 = vunpack.c.l.b16 %v2749
        %v2831 = vunpack.c.l.b16 %v2750
        %v2832 = vunpack.c.l.b16 %v2751
        %v2833 = vunpack.c.l.b16 %v2752
        %v2834 = vunpack.c.l.b16 %v2753
        %v2835 = vunpack.c.l.b16 %v2754
        %v2836 = vunpack.c.l.b16 %v2755
        %v2837 = vunpack.c.l.b16 %v2756
        %v2838 = vunpack.c.l.b16 %v2757
        %v2839 = vunpack.c.l.b16 %v2758
        %v2840 = vunpack.c.l.b16 %v2759
        %v2841 = vunpack.c.l.b16 %v2760
        %v2842 = vunpack.c.l.b16 %v2761
        %v2843 = vunpack.c.l.b16 %v2762
        %v2844 = vunpack.c.l.b16 %v2763
        %v2845 = vunpack.c.l.b16 %v2764
        %v2846 = vunpack.c.l.b16 %v2765
        %v2847 = vunpack.c.l.b16 %v2766
        %v2848 = vunpack.c.l.b16 %v2767
        %v2849 = vunpack.c.l.b16 %v2768
        %v2850 = vunpack.c.l.b16 %v2769
        %v2851 = vunpack.c.l.b16 %v2770
        %v2852 = vunpack.c.l.b16 %v2771
        %v2853 = vunpack.c.l.b16 %v2772
        %v2854 = vunpack.c.l.b16 %v2773
        %v2855 = vunpack.c.l.b16 %v2774
        %v2856 = vpack.c.b16 %v2825, %v2824
        %v2857 = vpack.c.b16 %v2827, %v2826
        %v2858 = vpack.c.b16 %v2829, %v2828
        %v2859 = vpack.c.b16 %v2831, %v2830
        %v2860 = vpack.c.b16 %v2833, %v2832
        %v2861 = vpack.c.b16 %v2835, %v2834
        %v2862 = vpack.c.b16 %v2837, %v2836
        %v2863 = vpack.c.b16 %v2839, %v2838
        %v2864 = vpack.c.b16 %v2841, %v2840
        %v2865 = vpack.c.b16 %v2843, %v2842
        %v2866 = vpack.c.b16 %v2845, %v2844
        %v2867 = vpack.c.b16 %v2847, %v2846
        %v2868 = vpack.c.b16 %v2849, %v2848
        %v2869 = vpack.c.b16 %v2851, %v2850
        %v2870 = vpack.c.b16 %v2853, %v2852
        %v2871 = vpack.c.b16 %v2855, %v2854
        %v2880 = vunpack.c.l.b16 %v2784
        %v2881 = vunpack.c.l.b16 %v2785
        %v2882 = vunpack.c.l.b16 %v2786
        %v2883 = vunpack.c.l.b16 %v2787
        %v2884 = vunpack.c.l.b16 %v2788
        %v2885 = vunpack.c.l.b16 %v2789
        %v2886 = vunpack.c.l.b16 %v2790
        %v2887 = vunpack.c.l.b16 %v2791
        %v2888 = vpack.c.b16 %v2881, %v2880
        %v2889 = vpack.c.b16 %v2883, %v2882
        %v2890 = vpack.c.b16 %v2885, %v2884
        %v2891 = vpack.c.b16 %v2887, %v2886
        %v2896 = vsel %vm782, %v2856, 0
        %v2899 = vsel %vm782, %v2857, 0
        %v2902 = vsel %vm782, %v2858, 0
        %v2905 = vsel %vm782, %v2859, 0
        %v2908 = vsel %vm782, %v2860, 0
        %v2911 = vsel %vm782, %v2861, 0
        %v2914 = vsel %vm782, %v2862, 0
        %v2917 = vsel %vm782, %v2863, 0
        %v2920 = vsel %vm782, %v2864, 0
        %v2923 = vsel %vm782, %v2865, 0
        %v2926 = vsel %vm782, %v2866, 0
        %v2929 = vsel %vm782, %v2867, 0
        %v2932 = vsel %vm782, %v2868, 0
        %v2935 = vsel %vm782, %v2869, 0
        %v2938 = vsel %vm782, %v2870, 0
        %v2941 = vsel %vm782, %v2871, 0
        %vm2943 = vcmask 1045504
        %v2945 = vsel %vm2943, %v2891, 0
        %2947 = vmatpush.bf16.msra.mxu0 0
        %2948 = vmatpush.bf16.msra.mxu0 0
        %2949 = vmatpush.bf16.msra.mxu0 0
        %2950 = vmatpush.bf16.msra.mxu0 0
        %2951 = vmatpush.bf16.msra.mxu0 %v2945
        %2952 = vmatpush.bf16.msra.mxu0 %v2890
        %2953 = vmatpush.bf16.msra.mxu0 %v2889
        %2954 = vmatpush.bf16.msra.mxu0 %v2888
        %2955 = vmatmul.bf16.gmra.mxu0 %v2896
        %v2956 = vpop.f32.mrf.mxu0
        %v2957 = vadd.f32 0.0, %v2956
        %v2958 = vpop.f32.mrf.mxu0
        %v2959 = vadd.f32 0.0, %v2958
        %2960 = vmatmul.bf16.gmra.mxu0 %v2899
        %v2961 = vpop.f32.mrf.mxu0
        %v2962 = vadd.f32 0.0, %v2961
        %v2963 = vpop.f32.mrf.mxu0
        %v2964 = vadd.f32 0.0, %v2963
        %2965 = vmatmul.bf16.gmra.mxu0 %v2902
        %v2966 = vpop.f32.mrf.mxu0
        %v2967 = vadd.f32 0.0, %v2966
        %v2968 = vpop.f32.mrf.mxu0
        %v2969 = vadd.f32 0.0, %v2968
        %2970 = vmatmul.bf16.gmra.mxu0 %v2905
        %v2971 = vpop.f32.mrf.mxu0
        %v2972 = vadd.f32 0.0, %v2971
        %v2973 = vpop.f32.mrf.mxu0
        %v2974 = vadd.f32 0.0, %v2973
        %2975 = vmatmul.bf16.gmra.mxu0 %v2908
        %v2976 = vpop.f32.mrf.mxu0
        %v2977 = vadd.f32 0.0, %v2976
        %v2978 = vpop.f32.mrf.mxu0
        %v2979 = vadd.f32 0.0, %v2978
        %2980 = vmatmul.bf16.gmra.mxu0 %v2911
        %v2981 = vpop.f32.mrf.mxu0
        %v2982 = vadd.f32 0.0, %v2981
        %v2983 = vpop.f32.mrf.mxu0
        %v2984 = vadd.f32 0.0, %v2983
        %2985 = vmatmul.bf16.gmra.mxu0 %v2914
        %v2986 = vpop.f32.mrf.mxu0
        %v2987 = vadd.f32 0.0, %v2986
        %v2988 = vpop.f32.mrf.mxu0
        %v2989 = vadd.f32 0.0, %v2988
        %2990 = vmatmul.bf16.gmra.mxu0 %v2917
        %v2991 = vpop.f32.mrf.mxu0
        %v2992 = vadd.f32 0.0, %v2991
        %v2993 = vpop.f32.mrf.mxu0
        %v2994 = vadd.f32 0.0, %v2993
        %2995 = vmatmul.bf16.gmra.mxu0 %v2920
        %v2996 = vpop.f32.mrf.mxu0
        %v2997 = vadd.f32 0.0, %v2996
        %v2998 = vpop.f32.mrf.mxu0
        %v2999 = vadd.f32 0.0, %v2998
        %3000 = vmatmul.bf16.gmra.mxu0 %v2923
        %v3001 = vpop.f32.mrf.mxu0
        %v3002 = vadd.f32 0.0, %v3001
        %v3003 = vpop.f32.mrf.mxu0
        %v3004 = vadd.f32 0.0, %v3003
        %3005 = vmatmul.bf16.gmra.mxu0 %v2926
        %v3006 = vpop.f32.mrf.mxu0
        %v3007 = vadd.f32 0.0, %v3006
        %v3008 = vpop.f32.mrf.mxu0
        %v3009 = vadd.f32 0.0, %v3008
        %3010 = vmatmul.bf16.gmra.mxu0 %v2929
        %v3011 = vpop.f32.mrf.mxu0
        %v3012 = vadd.f32 0.0, %v3011
        %v3013 = vpop.f32.mrf.mxu0
        %v3014 = vadd.f32 0.0, %v3013
        %3015 = vmatmul.bf16.gmra.mxu0 %v2932
        %v3016 = vpop.f32.mrf.mxu0
        %v3017 = vadd.f32 0.0, %v3016
        %v3018 = vpop.f32.mrf.mxu0
        %v3019 = vadd.f32 0.0, %v3018
        %3020 = vmatmul.bf16.gmra.mxu0 %v2935
        %v3021 = vpop.f32.mrf.mxu0
        %v3022 = vadd.f32 0.0, %v3021
        %v3023 = vpop.f32.mrf.mxu0
        %v3024 = vadd.f32 0.0, %v3023
        %3025 = vmatmul.bf16.gmra.mxu0 %v2938
        %v3026 = vpop.f32.mrf.mxu0
        %v3027 = vadd.f32 0.0, %v3026
        %v3028 = vpop.f32.mrf.mxu0
        %v3029 = vadd.f32 0.0, %v3028
        %3030 = vmatmul.bf16.gmra.mxu0 %v2941
        %v3031 = vpop.f32.mrf.mxu0
        %v3032 = vadd.f32 0.0, %v3031
        %v3033 = vpop.f32.mrf.mxu0
        %v3034 = vadd.f32 0.0, %v3033
        %3035 = vdwg.mxu0
        %v3044 = vunpack.c.l.b16 %v2775
        %v3045 = vunpack.c.l.b16 %v2776
        %v3046 = vunpack.c.l.b16 %v2777
        %v3047 = vunpack.c.l.b16 %v2778
        %v3048 = vunpack.c.l.b16 %v2779
        %v3049 = vunpack.c.l.b16 %v2780
        %v3050 = vunpack.c.l.b16 %v2781
        %v3051 = vunpack.c.l.b16 %v2782
        %v3052 = vpack.c.b16 %v3045, %v3044
        %v3053 = vpack.c.b16 %v3047, %v3046
        %v3054 = vpack.c.b16 %v3049, %v3048
        %v3055 = vpack.c.b16 %v3051, %v3050
        %v3060 = vsel %vm782, %v1375, 0
        %v3063 = vsel %vm2943, %v3055, 0
        %3065 = vmatpush.bf16.msra.mxu0 0
        %3066 = vmatpush.bf16.msra.mxu0 0
        %3067 = vmatpush.bf16.msra.mxu0 0
        %3068 = vmatpush.bf16.msra.mxu0 0
        %3069 = vmatpush.bf16.msra.mxu0 %v3063
        %3070 = vmatpush.bf16.msra.mxu0 %v3054
        %3071 = vmatpush.bf16.msra.mxu0 %v3053
        %3072 = vmatpush.bf16.msra.mxu0 %v3052
        %3073 = vmatmul.bf16.gmra.mxu0 %v3060
        %v3074 = vpop.f32.mrf.mxu0
        %v3075 = vadd.f32 %v2957, %v3074
        %v3076 = vpop.f32.mrf.mxu0
        %v3077 = vadd.f32 %v2959, %v3076
        %3078 = vmatmul.bf16.gmra.mxu0 %v2896
        %v3079 = vpop.f32.mrf.mxu0
        %v3080 = vadd.f32 %v2962, %v3079
        %v3081 = vpop.f32.mrf.mxu0
        %v3082 = vadd.f32 %v2964, %v3081
        %3083 = vmatmul.bf16.gmra.mxu0 %v2899
        %v3084 = vpop.f32.mrf.mxu0
        %v3085 = vadd.f32 %v2967, %v3084
        %v3086 = vpop.f32.mrf.mxu0
        %v3087 = vadd.f32 %v2969, %v3086
        %3088 = vmatmul.bf16.gmra.mxu0 %v2902
        %v3089 = vpop.f32.mrf.mxu0
        %v3090 = vadd.f32 %v2972, %v3089
        %v3091 = vpop.f32.mrf.mxu0
        %v3092 = vadd.f32 %v2974, %v3091
        %3093 = vmatmul.bf16.gmra.mxu0 %v2905
        %v3094 = vpop.f32.mrf.mxu0
        %v3095 = vadd.f32 %v2977, %v3094
        %v3096 = vpop.f32.mrf.mxu0
        %v3097 = vadd.f32 %v2979, %v3096
        %3098 = vmatmul.bf16.gmra.mxu0 %v2908
        %v3099 = vpop.f32.mrf.mxu0
        %v3100 = vadd.f32 %v2982, %v3099
        %v3101 = vpop.f32.mrf.mxu0
        %v3102 = vadd.f32 %v2984, %v3101
        %3103 = vmatmul.bf16.gmra.mxu0 %v2911
        %v3104 = vpop.f32.mrf.mxu0
        %v3105 = vadd.f32 %v2987, %v3104
        %v3106 = vpop.f32.mrf.mxu0
        %v3107 = vadd.f32 %v2989, %v3106
        %3108 = vmatmul.bf16.gmra.mxu0 %v2914
        %v3109 = vpop.f32.mrf.mxu0
        %v3110 = vadd.f32 %v2992, %v3109
        %v3111 = vpop.f32.mrf.mxu0
        %v3112 = vadd.f32 %v2994, %v3111
        %3113 = vmatmul.bf16.gmra.mxu0 %v2917
        %v3114 = vpop.f32.mrf.mxu0
        %v3115 = vadd.f32 %v2997, %v3114
        %v3116 = vpop.f32.mrf.mxu0
        %v3117 = vadd.f32 %v2999, %v3116
        %3118 = vmatmul.bf16.gmra.mxu0 %v2920
        %v3119 = vpop.f32.mrf.mxu0
        %v3120 = vadd.f32 %v3002, %v3119
        %v3121 = vpop.f32.mrf.mxu0
        %v3122 = vadd.f32 %v3004, %v3121
        %3123 = vmatmul.bf16.gmra.mxu0 %v2923
        %v3124 = vpop.f32.mrf.mxu0
        %v3125 = vadd.f32 %v3007, %v3124
        %v3126 = vpop.f32.mrf.mxu0
        %v3127 = vadd.f32 %v3009, %v3126
        %3128 = vmatmul.bf16.gmra.mxu0 %v2926
        %v3129 = vpop.f32.mrf.mxu0
        %v3130 = vadd.f32 %v3012, %v3129
        %v3131 = vpop.f32.mrf.mxu0
        %v3132 = vadd.f32 %v3014, %v3131
        %3133 = vmatmul.bf16.gmra.mxu0 %v2929
        %v3134 = vpop.f32.mrf.mxu0
        %v3135 = vadd.f32 %v3017, %v3134
        %v3136 = vpop.f32.mrf.mxu0
        %v3137 = vadd.f32 %v3019, %v3136
        %3138 = vmatmul.bf16.gmra.mxu0 %v2932
        %v3139 = vpop.f32.mrf.mxu0
        %v3140 = vadd.f32 %v3022, %v3139
        %v3141 = vpop.f32.mrf.mxu0
        %v3142 = vadd.f32 %v3024, %v3141
        %3143 = vmatmul.bf16.gmra.mxu0 %v2935
        %v3144 = vpop.f32.mrf.mxu0
        %v3145 = vadd.f32 %v3027, %v3144
        %v3146 = vpop.f32.mrf.mxu0
        %v3147 = vadd.f32 %v3029, %v3146
        %3148 = vmatmul.bf16.gmra.mxu0 %v2938
        %v3149 = vpop.f32.mrf.mxu0
        %v3150 = vadd.f32 %v3032, %v3149
        %v3151 = vpop.f32.mrf.mxu0
        %v3152 = vadd.f32 %v3034, %v3151
        %3153 = vdwg.mxu0
        %s3154 = scalar_lea.vmem %s3, 64
        %v3155 = vld [vmem:[%s3154] sm:$0xf]
        %v3156 = vld [vmem:[%s3154 + $0x4] sm:$0xf]
        %v3157 = vld [vmem:[%s3154 + $0x8] sm:$0xf]
        %v3158 = vld [vmem:[%s3154 + $0xc] sm:$0xf]
        %v3159 = vld [vmem:[%s3154 + $0x10] sm:$0xf]
        %v3160 = vld [vmem:[%s3154 + $0x14] sm:$0xf]
        %v3161 = vld [vmem:[%s3154 + $0x18] sm:$0xf]
        %v3162 = vld [vmem:[%s3154 + $0x1c] sm:$0x3]
        %v3171 = vunpack.c.l.b16 %v3155
        %v3172 = vunpack.c.l.b16 %v3156
        %v3173 = vunpack.c.l.b16 %v3157
        %v3174 = vunpack.c.l.b16 %v3158
        %v3175 = vunpack.c.l.b16 %v3159
        %v3176 = vunpack.c.l.b16 %v3160
        %v3177 = vunpack.c.l.b16 %v3161
        %v3178 = vunpack.c.l.b16 %v3162
        %v3179 = vpack.c.b16 %v3172, %v3171
        %v3180 = vpack.c.b16 %v3174, %v3173
        %v3181 = vpack.c.b16 %v3176, %v3175
        %v3182 = vpack.c.b16 %v3178, %v3177
        %v3187 = vsel %vm2943, %v3182, 0
        %3189 = vmatpush.bf16.msra.mxu0 0
        %3190 = vmatpush.bf16.msra.mxu0 0
        %3191 = vmatpush.bf16.msra.mxu0 0
        %3192 = vmatpush.bf16.msra.mxu0 0
        %3193 = vmatpush.bf16.msra.mxu0 %v3187
        %3194 = vmatpush.bf16.msra.mxu0 %v3181
        %3195 = vmatpush.bf16.msra.mxu0 %v3180
        %3196 = vmatpush.bf16.msra.mxu0 %v3179
        %3197 = vmatmul.bf16.gmra.mxu0 %v2899
        %v3198 = vpop.f32.mrf.mxu0
        %v3199 = vadd.f32 0.0, %v3198
        %v3200 = vpop.f32.mrf.mxu0
        %v3201 = vadd.f32 0.0, %v3200
        %3202 = vmatmul.bf16.gmra.mxu0 %v2902
        %v3203 = vpop.f32.mrf.mxu0
        %v3204 = vadd.f32 0.0, %v3203
        %v3205 = vpop.f32.mrf.mxu0
        %v3206 = vadd.f32 0.0, %v3205
        %3207 = vmatmul.bf16.gmra.mxu0 %v2905
        %v3208 = vpop.f32.mrf.mxu0
        %v3209 = vadd.f32 0.0, %v3208
        %v3210 = vpop.f32.mrf.mxu0
        %v3211 = vadd.f32 0.0, %v3210
        %3212 = vmatmul.bf16.gmra.mxu0 %v2908
        %v3213 = vpop.f32.mrf.mxu0
        %v3214 = vadd.f32 0.0, %v3213
        %v3215 = vpop.f32.mrf.mxu0
        %v3216 = vadd.f32 0.0, %v3215
        %3217 = vmatmul.bf16.gmra.mxu0 %v2911
        %v3218 = vpop.f32.mrf.mxu0
        %v3219 = vadd.f32 0.0, %v3218
        %v3220 = vpop.f32.mrf.mxu0
        %v3221 = vadd.f32 0.0, %v3220
        %3222 = vmatmul.bf16.gmra.mxu0 %v2914
        %v3223 = vpop.f32.mrf.mxu0
        %v3224 = vadd.f32 0.0, %v3223
        %v3225 = vpop.f32.mrf.mxu0
        %v3226 = vadd.f32 0.0, %v3225
        %3227 = vmatmul.bf16.gmra.mxu0 %v2917
        %v3228 = vpop.f32.mrf.mxu0
        %v3229 = vadd.f32 0.0, %v3228
        %v3230 = vpop.f32.mrf.mxu0
        %v3231 = vadd.f32 0.0, %v3230
        %3232 = vmatmul.bf16.gmra.mxu0 %v2920
        %v3233 = vpop.f32.mrf.mxu0
        %v3234 = vadd.f32 0.0, %v3233
        %v3235 = vpop.f32.mrf.mxu0
        %v3236 = vadd.f32 0.0, %v3235
        %3237 = vmatmul.bf16.gmra.mxu0 %v2923
        %v3238 = vpop.f32.mrf.mxu0
        %v3239 = vadd.f32 0.0, %v3238
        %v3240 = vpop.f32.mrf.mxu0
        %v3241 = vadd.f32 0.0, %v3240
        %3242 = vmatmul.bf16.gmra.mxu0 %v2926
        %v3243 = vpop.f32.mrf.mxu0
        %v3244 = vadd.f32 0.0, %v3243
        %v3245 = vpop.f32.mrf.mxu0
        %v3246 = vadd.f32 0.0, %v3245
        %3247 = vmatmul.bf16.gmra.mxu0 %v2929
        %v3248 = vpop.f32.mrf.mxu0
        %v3249 = vadd.f32 0.0, %v3248
        %v3250 = vpop.f32.mrf.mxu0
        %v3251 = vadd.f32 0.0, %v3250
        %3252 = vmatmul.bf16.gmra.mxu0 %v2932
        %v3253 = vpop.f32.mrf.mxu0
        %v3254 = vadd.f32 0.0, %v3253
        %v3255 = vpop.f32.mrf.mxu0
        %v3256 = vadd.f32 0.0, %v3255
        %3257 = vmatmul.bf16.gmra.mxu0 %v2935
        %v3258 = vpop.f32.mrf.mxu0
        %v3259 = vadd.f32 0.0, %v3258
        %v3260 = vpop.f32.mrf.mxu0
        %v3261 = vadd.f32 0.0, %v3260
        %3262 = vmatmul.bf16.gmra.mxu0 %v2938
        %v3263 = vpop.f32.mrf.mxu0
        %v3264 = vadd.f32 0.0, %v3263
        %v3265 = vpop.f32.mrf.mxu0
        %v3266 = vadd.f32 0.0, %v3265
        %3267 = vmatmul.bf16.gmra.mxu0 %v2941
        %v3268 = vpop.f32.mrf.mxu0
        %v3269 = vadd.f32 0.0, %v3268
        %v3270 = vpop.f32.mrf.mxu0
        %v3271 = vadd.f32 0.0, %v3270
        %3272 = vmatmul.bf16.gmra.mxu0 %v3060
        %v3273 = vpop.f32.mrf.mxu0
        %v3274 = vadd.f32 0.0, %v3273
        %v3275 = vpop.f32.mrf.mxu0
        %v3276 = vadd.f32 0.0, %v3275
        %3277 = vdwg.mxu0
        %v3278 = vadd.f32 %v3075, %v3199
        %v3279 = vadd.f32 %v3077, %v3201
        %v3280 = vadd.f32 %v3080, %v3204
        %v3281 = vadd.f32 %v3082, %v3206
        %v3282 = vadd.f32 %v3085, %v3209
        %v3283 = vadd.f32 %v3087, %v3211
        %v3284 = vadd.f32 %v3090, %v3214
        %v3285 = vadd.f32 %v3092, %v3216
        %v3286 = vadd.f32 %v3095, %v3219
        %v3287 = vadd.f32 %v3097, %v3221
        %v3288 = vadd.f32 %v3100, %v3224
        %v3289 = vadd.f32 %v3102, %v3226
        %v3290 = vadd.f32 %v3105, %v3229
        %v3291 = vadd.f32 %v3107, %v3231
        %v3292 = vadd.f32 %v3110, %v3234
        %v3293 = vadd.f32 %v3112, %v3236
        %v3294 = vadd.f32 %v3115, %v3239
        %v3295 = vadd.f32 %v3117, %v3241
        %v3296 = vadd.f32 %v3120, %v3244
        %v3297 = vadd.f32 %v3122, %v3246
        %v3298 = vadd.f32 %v3125, %v3249
        %v3299 = vadd.f32 %v3127, %v3251
        %v3300 = vadd.f32 %v3130, %v3254
        %v3301 = vadd.f32 %v3132, %v3256
        %v3302 = vadd.f32 %v3135, %v3259
        %v3303 = vadd.f32 %v3137, %v3261
        %v3304 = vadd.f32 %v3140, %v3264
        %v3305 = vadd.f32 %v3142, %v3266
        %v3306 = vadd.f32 %v3145, %v3269
        %v3307 = vadd.f32 %v3147, %v3271
        %v3308 = vadd.f32 %v3150, %v3274
        %v3309 = vadd.f32 %v3152, %v3276
        %v3310 = vld [vmem:[%s4] sm:$0x1]
        %v3312 = vperm.slane %v3310, 0
        %v3314 = vadd.f32 %v3278, %v3312
        %v3315 = vadd.f32 %v3279, %v3312
        %v3316 = vadd.f32 %v3280, %v3312
        %v3317 = vadd.f32 %v3281, %v3312
        %v3318 = vadd.f32 %v3282, %v3312
        %v3319 = vadd.f32 %v3283, %v3312
        %v3320 = vadd.f32 %v3284, %v3312
        %v3321 = vadd.f32 %v3285, %v3312
        %v3322 = vadd.f32 %v3286, %v3312
        %v3323 = vadd.f32 %v3287, %v3312
        %v3324 = vadd.f32 %v3288, %v3312
        %v3325 = vadd.f32 %v3289, %v3312
        %v3326 = vadd.f32 %v3290, %v3312
        %v3327 = vadd.f32 %v3291, %v3312
        %v3328 = vadd.f32 %v3292, %v3312
        %v3329 = vadd.f32 %v3293, %v3312
        %v3330 = vadd.f32 %v3294, %v3312
        %v3331 = vadd.f32 %v3295, %v3312
        %v3332 = vadd.f32 %v3296, %v3312
        %v3333 = vadd.f32 %v3297, %v3312
        %v3334 = vadd.f32 %v3298, %v3312
        %v3335 = vadd.f32 %v3299, %v3312
        %v3336 = vadd.f32 %v3300, %v3312
        %v3337 = vadd.f32 %v3301, %v3312
        %v3338 = vadd.f32 %v3302, %v3312
        %v3339 = vadd.f32 %v3303, %v3312
        %v3340 = vadd.f32 %v3304, %v3312
        %v3341 = vadd.f32 %v3305, %v3312
        %v3342 = vadd.f32 %v3306, %v3312
        %v3343 = vadd.f32 %v3307, %v3312
        %v3344 = vadd.f32 %v3308, %v3312
        %v3345 = vadd.f32 %v3309, %v3312
        %v3346 = vsel %vm782, %v3314, 0.0
        %v3347 = vsel %vm782, %v3315, 0.0
        %v3348 = vadd.f32 %v3346, %v3347
        %v3349 = vsel %vm782, %v3316, 0.0
        %v3350 = vadd.f32 %v3348, %v3349
        %v3351 = vsel %vm782, %v3317, 0.0
        %v3352 = vadd.f32 %v3350, %v3351
        %v3353 = vsel %vm782, %v3318, 0.0
        %v3354 = vadd.f32 %v3352, %v3353
        %v3355 = vsel %vm782, %v3319, 0.0
        %v3356 = vadd.f32 %v3354, %v3355
        %v3357 = vsel %vm782, %v3320, 0.0
        %v3358 = vadd.f32 %v3356, %v3357
        %v3359 = vsel %vm782, %v3321, 0.0
        %v3360 = vadd.f32 %v3358, %v3359
        %v3361 = vsel %vm782, %v3322, 0.0
        %v3362 = vadd.f32 %v3360, %v3361
        %v3363 = vsel %vm782, %v3323, 0.0
        %v3364 = vadd.f32 %v3362, %v3363
        %v3365 = vsel %vm782, %v3324, 0.0
        %v3366 = vadd.f32 %v3364, %v3365
        %v3367 = vsel %vm782, %v3325, 0.0
        %v3368 = vadd.f32 %v3366, %v3367
        %v3369 = vsel %vm782, %v3326, 0.0
        %v3370 = vadd.f32 %v3368, %v3369
        %v3371 = vsel %vm782, %v3327, 0.0
        %v3372 = vadd.f32 %v3370, %v3371
        %v3373 = vsel %vm782, %v3328, 0.0
        %v3374 = vadd.f32 %v3372, %v3373
        %v3375 = vsel %vm782, %v3329, 0.0
        %v3376 = vadd.f32 %v3374, %v3375
        %v3377 = vsel %vm782, %v3330, 0.0
        %v3378 = vadd.f32 %v3376, %v3377
        %v3379 = vsel %vm782, %v3331, 0.0
        %v3380 = vadd.f32 %v3378, %v3379
        %v3381 = vsel %vm782, %v3332, 0.0
        %v3382 = vadd.f32 %v3380, %v3381
        %v3383 = vsel %vm782, %v3333, 0.0
        %v3384 = vadd.f32 %v3382, %v3383
        %v3385 = vsel %vm782, %v3334, 0.0
        %v3386 = vadd.f32 %v3384, %v3385
        %v3387 = vsel %vm782, %v3335, 0.0
        %v3388 = vadd.f32 %v3386, %v3387
        %v3389 = vsel %vm782, %v3336, 0.0
        %v3390 = vadd.f32 %v3388, %v3389
        %v3391 = vsel %vm782, %v3337, 0.0
        %v3392 = vadd.f32 %v3390, %v3391
        %v3393 = vsel %vm782, %v3338, 0.0
        %v3394 = vadd.f32 %v3392, %v3393
        %v3395 = vsel %vm782, %v3339, 0.0
        %v3396 = vadd.f32 %v3394, %v3395
        %v3397 = vsel %vm782, %v3340, 0.0
        %v3398 = vadd.f32 %v3396, %v3397
        %v3399 = vsel %vm782, %v3341, 0.0
        %v3400 = vadd.f32 %v3398, %v3399
        %v3401 = vsel %vm782, %v3342, 0.0
        %v3402 = vadd.f32 %v3400, %v3401
        %v3403 = vsel %vm782, %v3343, 0.0
        %v3404 = vadd.f32 %v3402, %v3403
        %v3405 = vsel %vm782, %v3344, 0.0
        %v3406 = vadd.f32 %v3404, %v3405
        %v3407 = vsel %vm782, %v3345, 0.0
        %v3408 = vadd.f32 %v3406, %v3407
        %v3409 = vrot.slane %v3408, 4
        %v3410 = vadd.f32 %v3408, %v3409
        %v3411 = vrot.slane %v3410, 2
        %v3412 = vadd.f32 %v3410, %v3411
        %v3413 = vrot.slane %v3412, 1
        %v3414 = vadd.f32 %v3412, %v3413
        %v3415 = vrcp.pop 256.0
        %v3416 = vmul.f32 256.0, %v3415
        %v3417 = vsub.f32 1.0, %v3416
        %v3418 = vmul.f32 %v3415, %v3417
        %v3419 = vadd.f32 %v3415, %v3418
        %vm3420 = vweird.f32 %v3415
        %v3421 = vsel %vm3420, %v3415, %v3419
        %v3422 = vmul.f32 %v3414, %v3421
        %v3423 = vld [vmem:[%s5] sm:$0x3]
        %v3424 = vmul.f32 %v3422, %v3423
        %vm3425 = vcmask 484352
        %v3426 = vsel %vm3425, %v3424, 0.0
        %3427 = vadd.xlane.f32.xlu0 %v3426
        %v3428 = vpop.xlane.xlu0 %3427
        %v3429 = vld [vmem:[%s6] sm:$0x3]
        %v3430 = vadd.f32 %v3428, %v3429
        %v3431 = vmax.f32 %v3430, 0.0
        %v3432 = vld [vmem:[%s7] sm:$0x3]
        %3434 = vset.pattern.permute.xlu0 0
        %3435 = vperm.xlu0 %3434, %v3431
        %v3436 = vpop.permute.xlu0 %3435
        %v3438 = vmul.f32 %v3436, %v3432
        %v3439 = vsel %vm3425, %v3438, 0.0
        %v3440 = vrot.slane %v3439, 4
        %v3441 = vadd.f32 %v3439, %v3440
        %v3442 = vrot.slane %v3441, 2
        %v3443 = vadd.f32 %v3441, %v3442
        %v3444 = vrot.slane %v3443, 1
        %v3445 = vadd.f32 %v3443, %v3444
        %v3446 = vld [vmem:[%s8] sm:$0x1]
        %v3447 = vadd.f32 %v3445, %v3446
        %v3448 = vxor.u32 %v3447, 2147483648
        %v3449 = vmul.f32 %v3448, 1.442695
        %v3450 = vpow.pop %v3449
        %v3451 = vadd.f32 %v3450, 1.0
        %v3452 = vrcp.pop %v3451
        %v3453 = vmul.f32 %v3451, %v3452
        %v3454 = vsub.f32 1.0, %v3453
        %v3455 = vmul.f32 %v3452, %v3454
        %v3456 = vadd.f32 %v3452, %v3455
        %vm3457 = vweird.f32 %v3451
        %vm3458 = vweird.f32 %v3452
        %vm3459 = vmor %vm3457, %vm3458
        %v3460 = vsel %vm3459, %v3452, %v3456
        %v3461 = vand.u32 2147483647, %v3451
        %vm3462 = vcmp.eq.f32.partialorder %v3461, 8.507059e+37
        %v3463 = vand.u32 %v3451, 2147483648
        %v3464 = vor.u32 1.1754944e-38, %v3463
        %v3465 = vsel %vm3462, %v3464, %v3460
        %v3466 = vmul.f32 1.0, %v3465
        %v3467 = vperm.slane %v3466, 0
        %v3468 = vmul.f32 %v3314, %v3467
        %v3469 = vmul.f32 %v3315, %v3467
        %v3470 = vmul.f32 %v3316, %v3467
        %v3471 = vmul.f32 %v3317, %v3467
        %v3472 = vmul.f32 %v3318, %v3467
        %v3473 = vmul.f32 %v3319, %v3467
        %v3474 = vmul.f32 %v3320, %v3467
        %v3475 = vmul.f32 %v3321, %v3467
        %v3476 = vmul.f32 %v3322, %v3467
        %v3477 = vmul.f32 %v3323, %v3467
        %v3478 = vmul.f32 %v3324, %v3467
        %v3479 = vmul.f32 %v3325, %v3467
        %v3480 = vmul.f32 %v3326, %v3467
        %v3481 = vmul.f32 %v3327, %v3467
        %v3482 = vmul.f32 %v3328, %v3467
        %v3483 = vmul.f32 %v3329, %v3467
        %v3484 = vmul.f32 %v3330, %v3467
        %v3485 = vmul.f32 %v3331, %v3467
        %v3486 = vmul.f32 %v3332, %v3467
        %v3487 = vmul.f32 %v3333, %v3467
        %v3488 = vmul.f32 %v3334, %v3467
        %v3489 = vmul.f32 %v3335, %v3467
        %v3490 = vmul.f32 %v3336, %v3467
        %v3491 = vmul.f32 %v3337, %v3467
        %v3492 = vmul.f32 %v3338, %v3467
        %v3493 = vmul.f32 %v3339, %v3467
        %v3494 = vmul.f32 %v3340, %v3467
        %v3495 = vmul.f32 %v3341, %v3467
        %v3496 = vmul.f32 %v3342, %v3467
        %v3497 = vmul.f32 %v3343, %v3467
        %v3498 = vmul.f32 %v3344, %v3467
        %v3499 = vmul.f32 %v3345, %v3467
        %3500 = vst.msk [vmem:[%s325] sm:$0xff] %vm782, %v3468
        %3501 = vst.msk [vmem:[%s325 + $0x8] sm:$0xff] %vm782, %v3469
        %3502 = vst.msk [vmem:[%s325 + $0x10] sm:$0xff] %vm782, %v3470
        %3503 = vst.msk [vmem:[%s325 + $0x18] sm:$0xff] %vm782, %v3471
        %3504 = vst.msk [vmem:[%s325 + $0x20] sm:$0xff] %vm782, %v3472
        %3505 = vst.msk [vmem:[%s325 + $0x28] sm:$0xff] %vm782, %v3473
        %3506 = vst.msk [vmem:[%s325 + $0x30] sm:$0xff] %vm782, %v3474
        %3507 = vst.msk [vmem:[%s325 + $0x38] sm:$0xff] %vm782, %v3475
        %3508 = vst.msk [vmem:[%s325 + $0x40] sm:$0xff] %vm782, %v3476
        %3509 = vst.msk [vmem:[%s325 + $0x48] sm:$0xff] %vm782, %v3477
        %3510 = vst.msk [vmem:[%s325 + $0x50] sm:$0xff] %vm782, %v3478
        %3511 = vst.msk [vmem:[%s325 + $0x58] sm:$0xff] %vm782, %v3479
        %3512 = vst.msk [vmem:[%s325 + $0x60] sm:$0xff] %vm782, %v3480
        %3513 = vst.msk [vmem:[%s325 + $0x68] sm:$0xff] %vm782, %v3481
        %3514 = vst.msk [vmem:[%s325 + $0x70] sm:$0xff] %vm782, %v3482
        %3515 = vst.msk [vmem:[%s325 + $0x78] sm:$0xff] %vm782, %v3483
        %3516 = vst.msk [vmem:[%s325 + $0x80] sm:$0xff] %vm782, %v3484
        %3517 = vst.msk [vmem:[%s325 + $0x88] sm:$0xff] %vm782, %v3485
        %3518 = vst.msk [vmem:[%s325 + $0x90] sm:$0xff] %vm782, %v3486
        %3519 = vst.msk [vmem:[%s325 + $0x98] sm:$0xff] %vm782, %v3487
        %3520 = vst.msk [vmem:[%s325 + $0xa0] sm:$0xff] %vm782, %v3488
        %3521 = vst.msk [vmem:[%s325 + $0xa8] sm:$0xff] %vm782, %v3489
        %3522 = vst.msk [vmem:[%s325 + $0xb0] sm:$0xff] %vm782, %v3490
        %3523 = vst.msk [vmem:[%s325 + $0xb8] sm:$0xff] %vm782, %v3491
        %3524 = vst.msk [vmem:[%s325 + $0xc0] sm:$0xff] %vm782, %v3492
        %3525 = vst.msk [vmem:[%s325 + $0xc8] sm:$0xff] %vm782, %v3493
        %3526 = vst.msk [vmem:[%s325 + $0xd0] sm:$0xff] %vm782, %v3494
        %3527 = vst.msk [vmem:[%s325 + $0xd8] sm:$0xff] %vm782, %v3495
        %3528 = vst.msk [vmem:[%s325 + $0xe0] sm:$0xff] %vm782, %v3496
        %3529 = vst.msk [vmem:[%s325 + $0xe8] sm:$0xff] %vm782, %v3497
        %3530 = vst.msk [vmem:[%s325 + $0xf0] sm:$0xff] %vm782, %v3498
        %3531 = vst.msk [vmem:[%s325 + $0xf8] sm:$0xff] %vm782, %v3499
        %s3532 = sand.u32 %s225, 1
        %s3533 = scalar_lea.sflag [#allocation3], %s3532
        %s3534 = sand.u32 %s225, 1
        %s3535 = smul.addr %s3534, 256
        %s3536 = scalar_lea.vmem [#allocation2], %s3535
        // Predicated region
        $region57: #{cab_forward.1} parent=55 // pred_check
          %p3537 = pneg %p235
        $region58: #{cab_forward.1} parent=55 // pred_check_branch
          %3539 = sbr.rel (%p3537) target = $region60
        $region59: #{cab_forward.1} parent=55 // pred_region
          %3541 = vsyncadd %s3533, 0
          %s3542 = smul.addr %s23, 32
          %s3543 = smul.addr %s3542, 8
          %s3544 = scalar_lea.hbm %s9, %s3543
          %s3545 = sshll.u32 %s3536, 4
          %s3546 = int_to_ptr.vmem [resolvable:$true] %s3545
          %s3547 = sshll.u32 %s3544, 4
          %s3548 = int_to_ptr.hbm [resolvable:$true] %s3547
          %3553 = dma.vmem_to_hbm [thread:$0]  %s3546, 4096, %s3548, %s3533, 128, 128, 8
        $region60: #{cab_forward.1} parent=55 // pred_fallthru
          _
      $region56: #{cab_forward.1} parent=5 // pred_fallthru
        _
      %p3554 = scmp.le.s32.totalorder 2, %s18
      // Predicated region
      $region61: #{cab_forward.1} parent=5 // pred_check
        %p3555 = pneg %p3554
      $region62: #{cab_forward.1} parent=5 // pred_check_branch
        %3557 = sbr.rel (%p3555) target = $region64
      $region63: #{cab_forward.1} parent=5 // pred_region
        %s3558 = ssub.s32 %s18, 2
        // Predicated region
        $region65: #{cab_forward.1} parent=63 // pred_check
          %p3559 = pneg %p241
        $region66: #{cab_forward.1} parent=63 // pred_check_branch
          %3561 = sbr.rel (%p3559) target = $region68
        $region67: #{cab_forward.1} parent=63 // pred_region
          %s3562 = sand.u32 %s226, 1
          %s3563 = scalar_lea.sflag [#allocation3], %s3562
          %s3564 = sand.u32 %s226, 1
          %s3565 = smul.addr %s3564, 256
          %s3566 = scalar_lea.vmem [#allocation2], %s3565
          %3568 = dma.done %s3563, 4096
        $region68: #{cab_forward.1} parent=63 // pred_fallthru
          _
      $region64: #{cab_forward.1} parent=5 // pred_fallthru
        _
    $region6: #{cab_forward.1} parent=1 // loop_footer
      %s22 = sadd.s32 1, %s18
    $region7: #{cab_forward.1} parent=1 // loop_footer_branch
      %17 = sbr.rel target = $region3
    $region8: #{cab_forward.1} parent=1 // loop_exit
      _
    %3569 = vsyncpa [#allocation3], 1
    %s3570 = scalar_lea.sflag [#allocation3], 1
    %3571 = vsyncpa %s3570, 1

</llo_original>
